<compile_context>
chip_gen: v5e
topology: v5e:2x2
jax: 0.10.0
libtpu: 0.0.40
codegen_flags: <defaults>
</compile_context>

<pallas_src>
import functools

import numpy as np

import jax
import jax.numpy as jnp
from jax import lax
from jax.experimental import pallas as pl
from jax.experimental.pallas import tpu as pltpu

# ----------------------------- configuration --------------------------------
CFG = dict(
    latent_sz=32,
    num_shape_type=4,
    num_dim=2,
    use_planes=False,
    out_shape_layer=4,
    num_csg_layer=2,
    threshold=0.5,
)
NUM_EVALUATORS = 2  # circle + box evaluators
OUT_SHAPE_EVAL = CFG["num_shape_type"] * NUM_EVALUATORS


def _csg_layer_dims():
    dims = []
    in_shape = OUT_SHAPE_EVAL
    out_shape = CFG["out_shape_layer"]
    for i in range(CFG["num_csg_layer"]):
        if i == CFG["num_csg_layer"] - 1:
            out_shape = 1
        dims.append((in_shape, out_shape))
        in_shape = out_shape * 4 + OUT_SHAPE_EVAL
    return tuple(dims)


# ----------------------------- fused forward kernel --------------------------
def _ucsgnet_kernel(
    img_ref, pt_ref,
    m1_ref, b1_ref, m2_ref, b2_ref, m3_ref, b3_ref, wfc_ref, bfc_ref,
    d1w_ref, d1b_ref, d2w_ref, d2b_ref,
    gw_ref, gb_ref, gwn_ref, gbn_ref, h0_ref,
    l1w_ref, l1b_ref, l2w_ref, l2b_ref,
    scal_ref,
    out_ref,
    *, B, P, L, layer_dims,
):
    bf16 = jnp.bfloat16

    def mm(a, b):  # a @ b
        return lax.dot_general(a, b, (((1,), (0,)), ((), ())),
                               preferred_element_type=jnp.float32)

    def mm_t(a, b):  # a @ b.T  (contract last dims, flash-attn style)
        return lax.dot_general(a, b, (((1,), (1,)), ((), ())),
                               preferred_element_type=jnp.float32)

    def lrelu(v):
        return jnp.where(v > 0, v, 0.2 * v)

    # -------- encoder: conv stack folded to dense matmuls, then fc -----------
    h = lrelu(mm(img_ref[...].astype(bf16), m1_ref[...]) + b1_ref[...])   # (B, 512)
    h = lrelu(mm(h.astype(bf16), m2_ref[...]) + b2_ref[...])              # (B, 256)
    h = lrelu(mm(h.astype(bf16), m3_ref[...]) + b3_ref[...])              # (B, 128)
    latent = mm(h, wfc_ref[...]) + bfc_ref[...]                           # (B, L)

    # -------- decoder -> primitive parameters --------------------------------
    dh = lrelu(mm(latent, d1w_ref[...]) + d1b_ref[...])                   # (B, 64)
    raw = mm(dh, d2w_ref[...]) + d2b_ref[...]                             # (B, 32)
    # columns: [circ tx(4), circ ty(4), box tx(4), box ty(4) |
    #           circ r(4), circ unused(4), box hx(4), box hy(4)]
    trans = jnp.tanh(raw[:, 0:16])
    size = jax.nn.sigmoid(raw[:, 16:32]) * 0.5 + 0.01
    prm = jnp.concatenate([trans, size], axis=1)                          # (B, 32)

    # -------- evaluator (circle + box SDF) + converter (clamp) ---------------
    m = scal_ref[0, 0]                      # learnable converter scaler (SMEM)
    pts = pt_ref[...]                       # (B*P, 2), batch folded on sublanes
    init_list = []
    for b in range(B):
        px = pts[b * P:(b + 1) * P, 0:1]                                  # (P, 1)
        py = pts[b * P:(b + 1) * P, 1:2]
        pb = prm[b:b + 1, :]                                              # (1, 32)
        # circles
        dx = px - pb[:, 0:4]
        dy = py - pb[:, 4:8]
        d_circ = jnp.sqrt(dx * dx + dy * dy) - pb[:, 16:20]               # (P, 4)
        # boxes
        qx = jnp.abs(px - pb[:, 8:12]) - pb[:, 24:28]
        qy = jnp.abs(py - pb[:, 12:16]) - pb[:, 28:32]
        d_box = (jnp.sqrt(jnp.maximum(qx, 0.0) ** 2 + jnp.maximum(qy, 0.0) ** 2)
                 + jnp.minimum(jnp.maximum(qx, qy), 0.0))                 # (P, 4)
        sdf_shape = jnp.concatenate([d_circ, d_box], axis=1)              # (P, 8)
        init_list.append(1.0 - jnp.clip(sdf_shape * m, 0.0, 1.0))         # init_sdf

    # -------- GRU cell (fused [x, h] gate matmul, PyTorch r,z,n order) -------
    def gru(xv, hv):
        g = mm(jnp.concatenate([xv, hv], axis=1), gw_ref[...]) + gb_ref[...]
        r = jax.nn.sigmoid(g[:, 0:L])
        z = jax.nn.sigmoid(g[:, L:2 * L])
        ghn = mm(hv, gwn_ref[...]) + gbn_ref[...]            # h@Whh_n + bhh_n
        n = jnp.tanh(g[:, 2 * L:3 * L] - ghn + r * ghn)      # gi_n + r*gh_n
        return (1.0 - z) * n + z * hv

    latent = gru(latent, jnp.broadcast_to(h0_ref[...], (B, L)))

    # -------- CSG layers: softmax operand selection + boolean algebra --------
    layer_refs = ((l1w_ref, l1b_ref), (l2w_ref, l2b_ref))
    cur_list = list(init_list)
    for li, ((w_ref, b_ref), (in_sh, out_sh)) in enumerate(zip(layer_refs, layer_dims)):
        if li:
            cur_list = [jnp.concatenate([cur_list[b], init_list[b]], axis=1)
                        for b in range(B)]
        sel_cols = 2 * in_sh * out_sh
        lw = mm(latent, w_ref[...]) + b_ref[...]    # [selection logits | V_encode]
        v_enc = jnp.tanh(lw[:, sel_cols:])
        new_list = []
        for b in range(B):
            def select(g):
                base = g * in_sh * out_sh
                rows = [lw[b:b + 1, base + o * in_sh: base + (o + 1) * in_sh]
                        for o in range(out_sh)]
                kt = jnp.concatenate(rows, axis=0)                       # (out, in)
                kt = kt - jnp.max(kt, axis=1, keepdims=True)
                e = jnp.exp(kt)
                kt = e * pl.reciprocal(jnp.sum(e, axis=1, keepdims=True),
                                       approx=True)
                return mm_t(cur_list[b], kt)                             # (P, out)

            left = select(0)
            right = select(1)
            union = jnp.clip(left + right, 0.0, 1.0)
            inter = jnp.clip(left + right - 1.0, 0.0, 1.0)
            a_min_b = jnp.clip(left - right, 0.0, 1.0)
            b_min_a = jnp.clip(right - left, 0.0, 1.0)
            new_list.append(
                jnp.concatenate([union, inter, a_min_b, b_min_a], axis=1))
        cur_list = new_list
        latent = gru(v_enc, latent)

    final = jnp.concatenate(
        [jnp.clip(cur_list[b][:, 0:1], 0.0, 1.0) for b in range(B)], axis=0)
    out_ref[...] = final                                                  # (B*P, 1)


# ----------------------------- forward wrapper --------------------------------
def ucsgnet_forward(p, img, pt):
    B = img.shape[0]
    P = pt.shape[1]
    L = CFG["latent_sz"]
    layer_dims = _csg_layer_dims()
    assert len(p["csg"]) == 2 and len(layer_dims) == 2

    img_flat = img.reshape(B, -1)
    pt_flat = pt.reshape(B * P, CFG["num_dim"])

    operands = [
        img_flat, pt_flat,
        p["m1"], p["b1"], p["m2"], p["b2"], p["m3"], p["b3"],
        p["wfc"], p["bfc"],
        p["d1w"], p["d1b"], p["d2w"], p["d2b"],
        p["gw"], p["gb"], p["gwn"], p["gbn"], p["h0"],
        p["csg"][0]["w"], p["csg"][0]["b"], p["csg"][1]["w"], p["csg"][1]["b"],
        p["scaler"],
    ]
    in_specs = [pl.BlockSpec(x.shape, lambda i: (0, 0)) for x in operands[:-1]]
    in_specs.append(pl.BlockSpec(memory_space=pltpu.MemorySpace.SMEM))  # scaler

    out = pl.pallas_call(
        functools.partial(_ucsgnet_kernel, B=B, P=P, L=L, layer_dims=layer_dims),
        grid=(1,),
        out_shape=jax.ShapeDtypeStruct((B * P, 1), jnp.float32),
        in_specs=in_specs,
        out_specs=pl.BlockSpec((B * P, 1), lambda i: (0, 0)),
    )(*operands)
    return out.reshape(B, P)


# ----------------------------- parameter init ---------------------------------
def _conv_as_dense(w, H, W, stride=2, pad=1):
    """Exact dense-matrix form of a kxk conv (NCHW-flattened in and out)."""
    cout, cin, kh, kw = w.shape
    OH = (H + 2 * pad - kh) // stride + 1
    OW = (W + 2 * pad - kw) // stride + 1
    M = np.zeros((cin * H * W, cout * OH * OW), np.float32)
    for co in range(cout):
        for ci in range(cin):
            for di in range(kh):
                for dj in range(kw):
                    for oh in range(OH):
                        ih = stride * oh + di - pad
                        if ih < 0 or ih >= H:
                            continue
                        for ow in range(OW):
                            iw = stride * ow + dj - pad
                            if iw < 0 or iw >= W:
                                continue
                            M[ci * H * W + ih * W + iw,
                              co * OH * OW + oh * OW + ow] += w[co, ci, di, dj]
    return M


def init_params(key):
    L = CFG["latent_sz"]
    S = CFG["num_shape_type"]
    keys = iter(jax.random.split(key, 64))

    def uniform(shape, fan_in):
        lim = 1.0 / np.sqrt(fan_in)
        return jax.random.uniform(next(keys), shape, jnp.float32, -lim, lim)

    p = {}
    # Encoder convs, materialized once as dense spatial matrices (bf16 storage).
    conv_defs = [(1, 8, 16), (8, 16, 8), (16, 32, 4)]       # (Cin, Cout, Hin)
    for idx, (cin, cout, hin) in enumerate(conv_defs, start=1):
        w = np.asarray(uniform((cout, cin, 3, 3), cin * 9))
        b = np.asarray(uniform((cout,), cin * 9))
        oh = hin // 2
        p[f"m{idx}"] = jnp.asarray(_conv_as_dense(w, hin, hin), jnp.bfloat16)
        p[f"b{idx}"] = jnp.asarray(np.repeat(b, oh * oh)[None, :], jnp.float32)
    p["wfc"] = uniform((32 * 2 * 2, L), 32 * 2 * 2)
    p["bfc"] = uniform((1, L), 32 * 2 * 2)
    # Decoder MLP -> per-shape params (translations + sizes per evaluator).
    p["d1w"] = uniform((L, 64), L)
    p["d1b"] = uniform((1, 64), L)
    p["d2w"] = uniform((64, NUM_EVALUATORS * S * 2 * CFG["num_dim"]), 64)
    p["d2b"] = uniform((1, NUM_EVALUATORS * S * 2 * CFG["num_dim"]), 64)
    # Converter learnable scaler.
    p["scaler"] = jnp.ones((1, 1), jnp.float32)
    # GRU cell (PyTorch gate order r,z,n), stored pre-fused for [x,h] matmul.
    wih = uniform((L, 3 * L), L)
    whh = uniform((L, 3 * L), L)
    bih = uniform((1, 3 * L), L)
    bhh = uniform((1, 3 * L), L)
    p["gw"] = jnp.concatenate([wih, whh], axis=0)           # (2L, 3L)
    p["gb"] = bih + bhh                                     # (1, 3L)
    p["gwn"] = whh[:, 2 * L:]                               # (L, L)
    p["gbn"] = bhh[:, 2 * L:]                               # (1, L)
    p["h0"] = jnp.full((1, L), 0.01, jnp.float32)           # nn.init.constant_(., 0.01)
    # CSG layers: [selection logits (2*in*out) | V_encode (L)] fused along N.
    layers = []
    for (in_shape, out_shape) in _csg_layer_dims():
        sel_cols = 2 * in_shape * out_shape
        w = jnp.concatenate([uniform((L, sel_cols), L), uniform((L, L), L)], axis=1)
        b = jnp.concatenate([uniform((1, sel_cols), L), uniform((1, L), L)], axis=1)
        layers.append(dict(w=w, b=b))
    p["csg"] = layers
    return p


# ----------------------------- main --------------------------------------------
if __name__ == "__main__":
    key = jax.random.PRNGKey(0)
    k_img, k_pt, k_param = jax.random.split(key, 3)

    B, P = 2, 64
    img = (jax.random.uniform(k_img, (B, 1, 16, 16)) > 0.5).astype(jnp.float32)
    pt = jax.random.uniform(k_pt, (B, P, CFG["num_dim"]),
                            minval=-1.0, maxval=1.0).astype(jnp.float32)

    params = init_params(k_param)
    fwd = jax.jit(ucsgnet_forward)
    sdf = jax.block_until_ready(fwd(params, img, pt))

    assert sdf.shape == (B, P), sdf.shape
    assert bool(jnp.all(jnp.isfinite(sdf)))
    assert bool(jnp.all((sdf >= 0.0) & (sdf <= 1.0)))
    print("KERNEL_OK")
</pallas_src>

<mosaic_0001>
module attributes {stable_mosaic.version = 11 : i64} {
  func.func @_ucsgnet_kernel(%arg0: i32, %arg1: memref<2x256xf32, #tpu.memory_space<vmem>>, %arg2: memref<128x2xf32, #tpu.memory_space<vmem>>, %arg3: memref<256x512xbf16, #tpu.memory_space<vmem>>, %arg4: memref<1x512xf32, #tpu.memory_space<vmem>>, %arg5: memref<512x256xbf16, #tpu.memory_space<vmem>>, %arg6: memref<1x256xf32, #tpu.memory_space<vmem>>, %arg7: memref<256x128xbf16, #tpu.memory_space<vmem>>, %arg8: memref<1x128xf32, #tpu.memory_space<vmem>>, %arg9: memref<128x32xf32, #tpu.memory_space<vmem>>, %arg10: memref<1x32xf32, #tpu.memory_space<vmem>>, %arg11: memref<32x64xf32, #tpu.memory_space<vmem>>, %arg12: memref<1x64xf32, #tpu.memory_space<vmem>>, %arg13: memref<64x32xf32, #tpu.memory_space<vmem>>, %arg14: memref<1x32xf32, #tpu.memory_space<vmem>>, %arg15: memref<64x96xf32, #tpu.memory_space<vmem>>, %arg16: memref<1x96xf32, #tpu.memory_space<vmem>>, %arg17: memref<32x32xf32, #tpu.memory_space<vmem>>, %arg18: memref<1x32xf32, #tpu.memory_space<vmem>>, %arg19: memref<1x32xf32, #tpu.memory_space<vmem>>, %arg20: memref<32x96xf32, #tpu.memory_space<vmem>>, %arg21: memref<1x96xf32, #tpu.memory_space<vmem>>, %arg22: memref<32x80xf32, #tpu.memory_space<vmem>>, %arg23: memref<1x80xf32, #tpu.memory_space<vmem>>, %arg24: memref<1x1xf32, #tpu.memory_space<smem>>, %arg25: memref<128x1xf32, #tpu.memory_space<vmem>>) attributes {dimension_semantics = [#tpu.dimension_semantics<arbitrary>], iteration_bounds = array<i64: 1>, scalar_prefetch = 0 : i64, scratch_operands = 0 : i64, tpu.core_type = #tpu.core_type<tc>, window_params = [{pipeline_mode = #tpu.pipeline_mode<synchronous>, transform_indices = @transform_0, window_bounds = array<i64: 2, 256>}, {pipeline_mode = #tpu.pipeline_mode<synchronous>, transform_indices = @transform_1, window_bounds = array<i64: 128, 2>}, {pipeline_mode = #tpu.pipeline_mode<synchronous>, transform_indices = @transform_2, window_bounds = array<i64: 256, 512>}, {pipeline_mode = #tpu.pipeline_mode<synchronous>, transform_indices = @transform_3, window_bounds = array<i64: 1, 512>}, {pipeline_mode = #tpu.pipeline_mode<synchronous>, transform_indices = @transform_4, window_bounds = array<i64: 512, 256>}, {pipeline_mode = #tpu.pipeline_mode<synchronous>, transform_indices = @transform_5, window_bounds = array<i64: 1, 256>}, {pipeline_mode = #tpu.pipeline_mode<synchronous>, transform_indices = @transform_6, window_bounds = array<i64: 256, 128>}, {pipeline_mode = #tpu.pipeline_mode<synchronous>, transform_indices = @transform_7, window_bounds = array<i64: 1, 128>}, {pipeline_mode = #tpu.pipeline_mode<synchronous>, transform_indices = @transform_8, window_bounds = array<i64: 128, 32>}, {pipeline_mode = #tpu.pipeline_mode<synchronous>, transform_indices = @transform_9, window_bounds = array<i64: 1, 32>}, {pipeline_mode = #tpu.pipeline_mode<synchronous>, transform_indices = @transform_10, window_bounds = array<i64: 32, 64>}, {pipeline_mode = #tpu.pipeline_mode<synchronous>, transform_indices = @transform_11, window_bounds = array<i64: 1, 64>}, {pipeline_mode = #tpu.pipeline_mode<synchronous>, transform_indices = @transform_12, window_bounds = array<i64: 64, 32>}, {pipeline_mode = #tpu.pipeline_mode<synchronous>, transform_indices = @transform_13, window_bounds = array<i64: 1, 32>}, {pipeline_mode = #tpu.pipeline_mode<synchronous>, transform_indices = @transform_14, window_bounds = array<i64: 64, 96>}, {pipeline_mode = #tpu.pipeline_mode<synchronous>, transform_indices = @transform_15, window_bounds = array<i64: 1, 96>}, {pipeline_mode = #tpu.pipeline_mode<synchronous>, transform_indices = @transform_16, window_bounds = array<i64: 32, 32>}, {pipeline_mode = #tpu.pipeline_mode<synchronous>, transform_indices = @transform_17, window_bounds = array<i64: 1, 32>}, {pipeline_mode = #tpu.pipeline_mode<synchronous>, transform_indices = @transform_18, window_bounds = array<i64: 1, 32>}, {pipeline_mode = #tpu.pipeline_mode<synchronous>, transform_indices = @transform_19, window_bounds = array<i64: 32, 96>}, {pipeline_mode = #tpu.pipeline_mode<synchronous>, transform_indices = @transform_20, window_bounds = array<i64: 1, 96>}, {pipeline_mode = #tpu.pipeline_mode<synchronous>, transform_indices = @transform_21, window_bounds = array<i64: 32, 80>}, {pipeline_mode = #tpu.pipeline_mode<synchronous>, transform_indices = @transform_22, window_bounds = array<i64: 1, 80>}, {transform_indices = @transform_23, window_bounds = array<i64: 1, 1>}, {pipeline_mode = #tpu.pipeline_mode<synchronous>, transform_indices = @transform_24, window_bounds = array<i64: 128, 1>}]} {
    %c0 = arith.constant 0 : index
    %c0_0 = arith.constant 0 : index
    %0 = vector.load %arg1[%c0, %c0_0] : memref<2x256xf32, #tpu.memory_space<vmem>>, vector<2x256xf32>
    %1 = arith.truncf %0 : vector<2x256xf32> to vector<2x256xbf16>
    %c0_1 = arith.constant 0 : index
    %c0_2 = arith.constant 0 : index
    %2 = vector.load %arg3[%c0_1, %c0_2] : memref<256x512xbf16, #tpu.memory_space<vmem>>, vector<256x512xbf16>
    %cst = arith.constant dense<0.000000e+00> : vector<2x512xf32>
    %3 = tpu.matmul %1, %2, %cst {dimension_numbers = #tpu.dot_dimension_numbers<[1], [0], [0], [1], [0, 0, 1, 1], [], []>} : vector<2x256xbf16>, vector<256x512xbf16>, vector<2x512xf32> -> vector<2x512xf32>
    %c0_3 = arith.constant 0 : index
    %c0_4 = arith.constant 0 : index
    %4 = vector.load %arg4[%c0_3, %c0_4] : memref<1x512xf32, #tpu.memory_space<vmem>>, vector<1x512xf32>
    %5 = vector.broadcast %4 : vector<1x512xf32> to vector<2x512xf32>
    %6 = arith.addf %3, %5 : vector<2x512xf32>
    %cst_5 = arith.constant 0.000000e+00 : f32
    %7 = vector.broadcast %cst_5 : f32 to vector<2x512xf32>
    %8 = arith.cmpf ogt, %6, %7 : vector<2x512xf32>
    %cst_6 = arith.constant 2.000000e-01 : f32
    %9 = vector.broadcast %cst_6 : f32 to vector<2x512xf32>
    %10 = arith.mulf %9, %6 : vector<2x512xf32>
    %11 = arith.select %8, %6, %10 : vector<2x512xi1>, vector<2x512xf32>
    %12 = arith.truncf %11 : vector<2x512xf32> to vector<2x512xbf16>
    %c0_7 = arith.constant 0 : index
    %c0_8 = arith.constant 0 : index
    %13 = vector.load %arg5[%c0_7, %c0_8] : memref<512x256xbf16, #tpu.memory_space<vmem>>, vector<512x256xbf16>
    %cst_9 = arith.constant dense<0.000000e+00> : vector<2x256xf32>
    %14 = tpu.matmul %12, %13, %cst_9 {dimension_numbers = #tpu.dot_dimension_numbers<[1], [0], [0], [1], [0, 0, 1, 1], [], []>} : vector<2x512xbf16>, vector<512x256xbf16>, vector<2x256xf32> -> vector<2x256xf32>
    %c0_10 = arith.constant 0 : index
    %c0_11 = arith.constant 0 : index
    %15 = vector.load %arg6[%c0_10, %c0_11] : memref<1x256xf32, #tpu.memory_space<vmem>>, vector<1x256xf32>
    %16 = vector.broadcast %15 : vector<1x256xf32> to vector<2x256xf32>
    %17 = arith.addf %14, %16 : vector<2x256xf32>
    %cst_12 = arith.constant 0.000000e+00 : f32
    %18 = vector.broadcast %cst_12 : f32 to vector<2x256xf32>
    %19 = arith.cmpf ogt, %17, %18 : vector<2x256xf32>
    %cst_13 = arith.constant 2.000000e-01 : f32
    %20 = vector.broadcast %cst_13 : f32 to vector<2x256xf32>
    %21 = arith.mulf %20, %17 : vector<2x256xf32>
    %22 = arith.select %19, %17, %21 : vector<2x256xi1>, vector<2x256xf32>
    %23 = arith.truncf %22 : vector<2x256xf32> to vector<2x256xbf16>
    %c0_14 = arith.constant 0 : index
    %c0_15 = arith.constant 0 : index
    %24 = vector.load %arg7[%c0_14, %c0_15] : memref<256x128xbf16, #tpu.memory_space<vmem>>, vector<256x128xbf16>
    %cst_16 = arith.constant dense<0.000000e+00> : vector<2x128xf32>
    %25 = tpu.matmul %23, %24, %cst_16 {dimension_numbers = #tpu.dot_dimension_numbers<[1], [0], [0], [1], [0, 0, 1, 1], [], []>} : vector<2x256xbf16>, vector<256x128xbf16>, vector<2x128xf32> -> vector<2x128xf32>
    %c0_17 = arith.constant 0 : index
    %c0_18 = arith.constant 0 : index
    %26 = vector.load %arg8[%c0_17, %c0_18] : memref<1x128xf32, #tpu.memory_space<vmem>>, vector<1x128xf32>
    %27 = vector.broadcast %26 : vector<1x128xf32> to vector<2x128xf32>
    %28 = arith.addf %25, %27 : vector<2x128xf32>
    %cst_19 = arith.constant 0.000000e+00 : f32
    %29 = vector.broadcast %cst_19 : f32 to vector<2x128xf32>
    %30 = arith.cmpf ogt, %28, %29 : vector<2x128xf32>
    %cst_20 = arith.constant 2.000000e-01 : f32
    %31 = vector.broadcast %cst_20 : f32 to vector<2x128xf32>
    %32 = arith.mulf %31, %28 : vector<2x128xf32>
    %33 = arith.select %30, %28, %32 : vector<2x128xi1>, vector<2x128xf32>
    %c0_21 = arith.constant 0 : index
    %c0_22 = arith.constant 0 : index
    %34 = vector.load %arg9[%c0_21, %c0_22] : memref<128x32xf32, #tpu.memory_space<vmem>>, vector<128x32xf32>
    %cst_23 = arith.constant dense<0.000000e+00> : vector<2x32xf32>
    %35 = tpu.matmul %33, %34, %cst_23 {dimension_numbers = #tpu.dot_dimension_numbers<[1], [0], [0], [1], [0, 0, 1, 1], [], []>} : vector<2x128xf32>, vector<128x32xf32>, vector<2x32xf32> -> vector<2x32xf32>
    %c0_24 = arith.constant 0 : index
    %c0_25 = arith.constant 0 : index
    %36 = vector.load %arg10[%c0_24, %c0_25] : memref<1x32xf32, #tpu.memory_space<vmem>>, vector<1x32xf32>
    %37 = vector.broadcast %36 : vector<1x32xf32> to vector<2x32xf32>
    %38 = arith.addf %35, %37 : vector<2x32xf32>
    %c0_26 = arith.constant 0 : index
    %c0_27 = arith.constant 0 : index
    %39 = vector.load %arg11[%c0_26, %c0_27] : memref<32x64xf32, #tpu.memory_space<vmem>>, vector<32x64xf32>
    %cst_28 = arith.constant dense<0.000000e+00> : vector<2x64xf32>
    %40 = tpu.matmul %38, %39, %cst_28 {dimension_numbers = #tpu.dot_dimension_numbers<[1], [0], [0], [1], [0, 0, 1, 1], [], []>} : vector<2x32xf32>, vector<32x64xf32>, vector<2x64xf32> -> vector<2x64xf32>
    %c0_29 = arith.constant 0 : index
    %c0_30 = arith.constant 0 : index
    %41 = vector.load %arg12[%c0_29, %c0_30] : memref<1x64xf32, #tpu.memory_space<vmem>>, vector<1x64xf32>
    %42 = vector.broadcast %41 : vector<1x64xf32> to vector<2x64xf32>
    %43 = arith.addf %40, %42 : vector<2x64xf32>
    %cst_31 = arith.constant 0.000000e+00 : f32
    %44 = vector.broadcast %cst_31 : f32 to vector<2x64xf32>
    %45 = arith.cmpf ogt, %43, %44 : vector<2x64xf32>
    %cst_32 = arith.constant 2.000000e-01 : f32
    %46 = vector.broadcast %cst_32 : f32 to vector<2x64xf32>
    %47 = arith.mulf %46, %43 : vector<2x64xf32>
    %48 = arith.select %45, %43, %47 : vector<2x64xi1>, vector<2x64xf32>
    %c0_33 = arith.constant 0 : index
    %c0_34 = arith.constant 0 : index
    %49 = vector.load %arg13[%c0_33, %c0_34] : memref<64x32xf32, #tpu.memory_space<vmem>>, vector<64x32xf32>
    %cst_35 = arith.constant dense<0.000000e+00> : vector<2x32xf32>
    %50 = tpu.matmul %48, %49, %cst_35 {dimension_numbers = #tpu.dot_dimension_numbers<[1], [0], [0], [1], [0, 0, 1, 1], [], []>} : vector<2x64xf32>, vector<64x32xf32>, vector<2x32xf32> -> vector<2x32xf32>
    %c0_36 = arith.constant 0 : index
    %c0_37 = arith.constant 0 : index
    %51 = vector.load %arg14[%c0_36, %c0_37] : memref<1x32xf32, #tpu.memory_space<vmem>>, vector<1x32xf32>
    %52 = vector.broadcast %51 : vector<1x32xf32> to vector<2x32xf32>
    %53 = arith.addf %50, %52 : vector<2x32xf32>
    %54 = vector.extract_strided_slice %53 {offsets = [0, 0], sizes = [2, 16], strides = [1, 1]} : vector<2x32xf32> to vector<2x16xf32>
    %55 = math.tanh %54 : vector<2x16xf32>
    %56 = vector.extract_strided_slice %53 {offsets = [0, 16], sizes = [2, 16], strides = [1, 1]} : vector<2x32xf32> to vector<2x16xf32>
    %57 = arith.negf %56 : vector<2x16xf32>
    %58 = math.exp %57 : vector<2x16xf32>
    %cst_38 = arith.constant 1.000000e+00 : f32
    %59 = vector.broadcast %cst_38 : f32 to vector<2x16xf32>
    %60 = arith.addf %59, %58 : vector<2x16xf32>
    %61 = arith.divf %59, %60 : vector<2x16xf32>
    %cst_39 = arith.constant 5.000000e-01 : f32
    %62 = vector.broadcast %cst_39 : f32 to vector<2x16xf32>
    %63 = arith.mulf %61, %62 : vector<2x16xf32>
    %cst_40 = arith.constant 0.00999999977 : f32
    %64 = vector.broadcast %cst_40 : f32 to vector<2x16xf32>
    %65 = arith.addf %63, %64 : vector<2x16xf32>
    %66 = tpu.concatenate %55, %65 in 1 : vector<2x16xf32>, vector<2x16xf32> -> vector<2x32xf32>
    %c0_41 = arith.constant 0 : index
    %c0_42 = arith.constant 0 : index
    %67 = memref.load %arg24[%c0_41, %c0_42] : memref<1x1xf32, #tpu.memory_space<smem>>
    %c0_43 = arith.constant 0 : index
    %c0_44 = arith.constant 0 : index
    %68 = vector.load %arg2[%c0_43, %c0_44] : memref<128x2xf32, #tpu.memory_space<vmem>>, vector<128x2xf32>
    %69 = vector.extract_strided_slice %68 {offsets = [0, 0], sizes = [64, 1], strides = [1, 1]} : vector<128x2xf32> to vector<64x1xf32>
    %70 = vector.extract_strided_slice %68 {offsets = [0, 1], sizes = [64, 1], strides = [1, 1]} : vector<128x2xf32> to vector<64x1xf32>
    %71 = vector.extract_strided_slice %66 {offsets = [0, 0], sizes = [1, 32], strides = [1, 1]} : vector<2x32xf32> to vector<1x32xf32>
    %72 = vector.extract_strided_slice %71 {offsets = [0, 0], sizes = [1, 4], strides = [1, 1]} : vector<1x32xf32> to vector<1x4xf32>
    %73 = vector.broadcast %69 : vector<64x1xf32> to vector<64x4xf32>
    %74 = vector.broadcast %72 : vector<1x4xf32> to vector<64x4xf32>
    %75 = arith.subf %73, %74 : vector<64x4xf32>
    %76 = vector.extract_strided_slice %71 {offsets = [0, 4], sizes = [1, 4], strides = [1, 1]} : vector<1x32xf32> to vector<1x4xf32>
    %77 = vector.broadcast %70 : vector<64x1xf32> to vector<64x4xf32>
    %78 = vector.broadcast %76 : vector<1x4xf32> to vector<64x4xf32>
    %79 = arith.subf %77, %78 : vector<64x4xf32>
    %80 = arith.mulf %75, %75 : vector<64x4xf32>
    %81 = arith.mulf %79, %79 : vector<64x4xf32>
    %82 = arith.addf %80, %81 : vector<64x4xf32>
    %83 = math.sqrt %82 : vector<64x4xf32>
    %84 = vector.extract_strided_slice %71 {offsets = [0, 16], sizes = [1, 4], strides = [1, 1]} : vector<1x32xf32> to vector<1x4xf32>
    %85 = vector.broadcast %84 : vector<1x4xf32> to vector<64x4xf32>
    %86 = arith.subf %83, %85 : vector<64x4xf32>
    %87 = vector.extract_strided_slice %71 {offsets = [0, 8], sizes = [1, 4], strides = [1, 1]} : vector<1x32xf32> to vector<1x4xf32>
    %88 = vector.broadcast %69 : vector<64x1xf32> to vector<64x4xf32>
    %89 = vector.broadcast %87 : vector<1x4xf32> to vector<64x4xf32>
    %90 = arith.subf %88, %89 : vector<64x4xf32>
    %91 = math.absf %90 : vector<64x4xf32>
    %92 = vector.extract_strided_slice %71 {offsets = [0, 24], sizes = [1, 4], strides = [1, 1]} : vector<1x32xf32> to vector<1x4xf32>
    %93 = vector.broadcast %92 : vector<1x4xf32> to vector<64x4xf32>
    %94 = arith.subf %91, %93 : vector<64x4xf32>
    %95 = vector.extract_strided_slice %71 {offsets = [0, 12], sizes = [1, 4], strides = [1, 1]} : vector<1x32xf32> to vector<1x4xf32>
    %96 = vector.broadcast %70 : vector<64x1xf32> to vector<64x4xf32>
    %97 = vector.broadcast %95 : vector<1x4xf32> to vector<64x4xf32>
    %98 = arith.subf %96, %97 : vector<64x4xf32>
    %99 = math.absf %98 : vector<64x4xf32>
    %100 = vector.extract_strided_slice %71 {offsets = [0, 28], sizes = [1, 4], strides = [1, 1]} : vector<1x32xf32> to vector<1x4xf32>
    %101 = vector.broadcast %100 : vector<1x4xf32> to vector<64x4xf32>
    %102 = arith.subf %99, %101 : vector<64x4xf32>
    %cst_45 = arith.constant 0.000000e+00 : f32
    %103 = vector.broadcast %cst_45 : f32 to vector<64x4xf32>
    %104 = arith.maximumf %94, %103 : vector<64x4xf32>
    %105 = arith.mulf %104, %104 : vector<64x4xf32>
    %cst_46 = arith.constant 0.000000e+00 : f32
    %106 = vector.broadcast %cst_46 : f32 to vector<64x4xf32>
    %107 = arith.maximumf %102, %106 : vector<64x4xf32>
    %108 = arith.mulf %107, %107 : vector<64x4xf32>
    %109 = arith.addf %105, %108 : vector<64x4xf32>
    %110 = math.sqrt %109 : vector<64x4xf32>
    %111 = arith.maximumf %94, %102 : vector<64x4xf32>
    %cst_47 = arith.constant 0.000000e+00 : f32
    %112 = vector.broadcast %cst_47 : f32 to vector<64x4xf32>
    %113 = arith.minimumf %111, %112 : vector<64x4xf32>
    %114 = arith.addf %110, %113 : vector<64x4xf32>
    %115 = tpu.concatenate %86, %114 in 1 : vector<64x4xf32>, vector<64x4xf32> -> vector<64x8xf32>
    %116 = vector.broadcast %67 : f32 to vector<64x8xf32>
    %117 = arith.mulf %115, %116 : vector<64x8xf32>
    %cst_48 = arith.constant 0.000000e+00 : f32
    %cst_49 = arith.constant 1.000000e+00 : f32
    %118 = vector.broadcast %cst_48 : f32 to vector<64x8xf32>
    %119 = arith.maximumf %118, %117 : vector<64x8xf32>
    %120 = vector.broadcast %cst_49 : f32 to vector<64x8xf32>
    %121 = arith.minimumf %120, %119 : vector<64x8xf32>
    %cst_50 = arith.constant 1.000000e+00 : f32
    %122 = vector.broadcast %cst_50 : f32 to vector<64x8xf32>
    %123 = arith.subf %122, %121 : vector<64x8xf32>
    %124 = vector.extract_strided_slice %68 {offsets = [64, 0], sizes = [64, 1], strides = [1, 1]} : vector<128x2xf32> to vector<64x1xf32>
    %125 = vector.extract_strided_slice %68 {offsets = [64, 1], sizes = [64, 1], strides = [1, 1]} : vector<128x2xf32> to vector<64x1xf32>
    %126 = vector.extract_strided_slice %66 {offsets = [1, 0], sizes = [1, 32], strides = [1, 1]} : vector<2x32xf32> to vector<1x32xf32>
    %127 = vector.extract_strided_slice %126 {offsets = [0, 0], sizes = [1, 4], strides = [1, 1]} : vector<1x32xf32> to vector<1x4xf32>
    %128 = vector.broadcast %124 : vector<64x1xf32> to vector<64x4xf32>
    %129 = vector.broadcast %127 : vector<1x4xf32> to vector<64x4xf32>
    %130 = arith.subf %128, %129 : vector<64x4xf32>
    %131 = vector.extract_strided_slice %126 {offsets = [0, 4], sizes = [1, 4], strides = [1, 1]} : vector<1x32xf32> to vector<1x4xf32>
    %132 = vector.broadcast %125 : vector<64x1xf32> to vector<64x4xf32>
    %133 = vector.broadcast %131 : vector<1x4xf32> to vector<64x4xf32>
    %134 = arith.subf %132, %133 : vector<64x4xf32>
    %135 = arith.mulf %130, %130 : vector<64x4xf32>
    %136 = arith.mulf %134, %134 : vector<64x4xf32>
    %137 = arith.addf %135, %136 : vector<64x4xf32>
    %138 = math.sqrt %137 : vector<64x4xf32>
    %139 = vector.extract_strided_slice %126 {offsets = [0, 16], sizes = [1, 4], strides = [1, 1]} : vector<1x32xf32> to vector<1x4xf32>
    %140 = vector.broadcast %139 : vector<1x4xf32> to vector<64x4xf32>
    %141 = arith.subf %138, %140 : vector<64x4xf32>
    %142 = vector.extract_strided_slice %126 {offsets = [0, 8], sizes = [1, 4], strides = [1, 1]} : vector<1x32xf32> to vector<1x4xf32>
    %143 = vector.broadcast %124 : vector<64x1xf32> to vector<64x4xf32>
    %144 = vector.broadcast %142 : vector<1x4xf32> to vector<64x4xf32>
    %145 = arith.subf %143, %144 : vector<64x4xf32>
    %146 = math.absf %145 : vector<64x4xf32>
    %147 = vector.extract_strided_slice %126 {offsets = [0, 24], sizes = [1, 4], strides = [1, 1]} : vector<1x32xf32> to vector<1x4xf32>
    %148 = vector.broadcast %147 : vector<1x4xf32> to vector<64x4xf32>
    %149 = arith.subf %146, %148 : vector<64x4xf32>
    %150 = vector.extract_strided_slice %126 {offsets = [0, 12], sizes = [1, 4], strides = [1, 1]} : vector<1x32xf32> to vector<1x4xf32>
    %151 = vector.broadcast %125 : vector<64x1xf32> to vector<64x4xf32>
    %152 = vector.broadcast %150 : vector<1x4xf32> to vector<64x4xf32>
    %153 = arith.subf %151, %152 : vector<64x4xf32>
    %154 = math.absf %153 : vector<64x4xf32>
    %155 = vector.extract_strided_slice %126 {offsets = [0, 28], sizes = [1, 4], strides = [1, 1]} : vector<1x32xf32> to vector<1x4xf32>
    %156 = vector.broadcast %155 : vector<1x4xf32> to vector<64x4xf32>
    %157 = arith.subf %154, %156 : vector<64x4xf32>
    %cst_51 = arith.constant 0.000000e+00 : f32
    %158 = vector.broadcast %cst_51 : f32 to vector<64x4xf32>
    %159 = arith.maximumf %149, %158 : vector<64x4xf32>
    %160 = arith.mulf %159, %159 : vector<64x4xf32>
    %cst_52 = arith.constant 0.000000e+00 : f32
    %161 = vector.broadcast %cst_52 : f32 to vector<64x4xf32>
    %162 = arith.maximumf %157, %161 : vector<64x4xf32>
    %163 = arith.mulf %162, %162 : vector<64x4xf32>
    %164 = arith.addf %160, %163 : vector<64x4xf32>
    %165 = math.sqrt %164 : vector<64x4xf32>
    %166 = arith.maximumf %149, %157 : vector<64x4xf32>
    %cst_53 = arith.constant 0.000000e+00 : f32
    %167 = vector.broadcast %cst_53 : f32 to vector<64x4xf32>
    %168 = arith.minimumf %166, %167 : vector<64x4xf32>
    %169 = arith.addf %165, %168 : vector<64x4xf32>
    %170 = tpu.concatenate %141, %169 in 1 : vector<64x4xf32>, vector<64x4xf32> -> vector<64x8xf32>
    %171 = vector.broadcast %67 : f32 to vector<64x8xf32>
    %172 = arith.mulf %170, %171 : vector<64x8xf32>
    %cst_54 = arith.constant 0.000000e+00 : f32
    %cst_55 = arith.constant 1.000000e+00 : f32
    %173 = vector.broadcast %cst_54 : f32 to vector<64x8xf32>
    %174 = arith.maximumf %173, %172 : vector<64x8xf32>
    %175 = vector.broadcast %cst_55 : f32 to vector<64x8xf32>
    %176 = arith.minimumf %175, %174 : vector<64x8xf32>
    %cst_56 = arith.constant 1.000000e+00 : f32
    %177 = vector.broadcast %cst_56 : f32 to vector<64x8xf32>
    %178 = arith.subf %177, %176 : vector<64x8xf32>
    %c0_57 = arith.constant 0 : index
    %c0_58 = arith.constant 0 : index
    %179 = vector.load %arg19[%c0_57, %c0_58] : memref<1x32xf32, #tpu.memory_space<vmem>>, vector<1x32xf32>
    %180 = vector.shape_cast %179 : vector<1x32xf32> to vector<1x32xf32>
    %181 = vector.broadcast %180 : vector<1x32xf32> to vector<2x32xf32>
    %182 = tpu.concatenate %38, %181 in 1 : vector<2x32xf32>, vector<2x32xf32> -> vector<2x64xf32>
    %c0_59 = arith.constant 0 : index
    %c0_60 = arith.constant 0 : index
    %183 = vector.load %arg15[%c0_59, %c0_60] : memref<64x96xf32, #tpu.memory_space<vmem>>, vector<64x96xf32>
    %cst_61 = arith.constant dense<0.000000e+00> : vector<2x96xf32>
    %184 = tpu.matmul %182, %183, %cst_61 {dimension_numbers = #tpu.dot_dimension_numbers<[1], [0], [0], [1], [0, 0, 1, 1], [], []>} : vector<2x64xf32>, vector<64x96xf32>, vector<2x96xf32> -> vector<2x96xf32>
    %c0_62 = arith.constant 0 : index
    %c0_63 = arith.constant 0 : index
    %185 = vector.load %arg16[%c0_62, %c0_63] : memref<1x96xf32, #tpu.memory_space<vmem>>, vector<1x96xf32>
    %186 = vector.broadcast %185 : vector<1x96xf32> to vector<2x96xf32>
    %187 = arith.addf %184, %186 : vector<2x96xf32>
    %188 = vector.extract_strided_slice %187 {offsets = [0, 0], sizes = [2, 32], strides = [1, 1]} : vector<2x96xf32> to vector<2x32xf32>
    %189 = arith.negf %188 : vector<2x32xf32>
    %190 = math.exp %189 : vector<2x32xf32>
    %cst_64 = arith.constant 1.000000e+00 : f32
    %191 = vector.broadcast %cst_64 : f32 to vector<2x32xf32>
    %192 = arith.addf %191, %190 : vector<2x32xf32>
    %193 = arith.divf %191, %192 : vector<2x32xf32>
    %194 = vector.extract_strided_slice %187 {offsets = [0, 32], sizes = [2, 32], strides = [1, 1]} : vector<2x96xf32> to vector<2x32xf32>
    %195 = arith.negf %194 : vector<2x32xf32>
    %196 = math.exp %195 : vector<2x32xf32>
    %cst_65 = arith.constant 1.000000e+00 : f32
    %197 = vector.broadcast %cst_65 : f32 to vector<2x32xf32>
    %198 = arith.addf %197, %196 : vector<2x32xf32>
    %199 = arith.divf %197, %198 : vector<2x32xf32>
    %c0_66 = arith.constant 0 : index
    %c0_67 = arith.constant 0 : index
    %200 = vector.load %arg17[%c0_66, %c0_67] : memref<32x32xf32, #tpu.memory_space<vmem>>, vector<32x32xf32>
    %cst_68 = arith.constant dense<0.000000e+00> : vector<2x32xf32>
    %201 = tpu.matmul %181, %200, %cst_68 {dimension_numbers = #tpu.dot_dimension_numbers<[1], [0], [0], [1], [0, 0, 1, 1], [], []>} : vector<2x32xf32>, vector<32x32xf32>, vector<2x32xf32> -> vector<2x32xf32>
    %c0_69 = arith.constant 0 : index
    %c0_70 = arith.constant 0 : index
    %202 = vector.load %arg18[%c0_69, %c0_70] : memref<1x32xf32, #tpu.memory_space<vmem>>, vector<1x32xf32>
    %203 = vector.broadcast %202 : vector<1x32xf32> to vector<2x32xf32>
    %204 = arith.addf %201, %203 : vector<2x32xf32>
    %205 = vector.extract_strided_slice %187 {offsets = [0, 64], sizes = [2, 32], strides = [1, 1]} : vector<2x96xf32> to vector<2x32xf32>
    %206 = arith.subf %205, %204 : vector<2x32xf32>
    %207 = arith.mulf %193, %204 : vector<2x32xf32>
    %208 = arith.addf %206, %207 : vector<2x32xf32>
    %209 = math.tanh %208 : vector<2x32xf32>
    %cst_71 = arith.constant 1.000000e+00 : f32
    %210 = vector.broadcast %cst_71 : f32 to vector<2x32xf32>
    %211 = arith.subf %210, %199 : vector<2x32xf32>
    %212 = arith.mulf %211, %209 : vector<2x32xf32>
    %213 = arith.mulf %199, %181 : vector<2x32xf32>
    %214 = arith.addf %212, %213 : vector<2x32xf32>
    %c0_72 = arith.constant 0 : index
    %c0_73 = arith.constant 0 : index
    %215 = vector.load %arg20[%c0_72, %c0_73] : memref<32x96xf32, #tpu.memory_space<vmem>>, vector<32x96xf32>
    %cst_74 = arith.constant dense<0.000000e+00> : vector<2x96xf32>
    %216 = tpu.matmul %214, %215, %cst_74 {dimension_numbers = #tpu.dot_dimension_numbers<[1], [0], [0], [1], [0, 0, 1, 1], [], []>} : vector<2x32xf32>, vector<32x96xf32>, vector<2x96xf32> -> vector<2x96xf32>
    %c0_75 = arith.constant 0 : index
    %c0_76 = arith.constant 0 : index
    %217 = vector.load %arg21[%c0_75, %c0_76] : memref<1x96xf32, #tpu.memory_space<vmem>>, vector<1x96xf32>
    %218 = vector.broadcast %217 : vector<1x96xf32> to vector<2x96xf32>
    %219 = arith.addf %216, %218 : vector<2x96xf32>
    %220 = vector.extract_strided_slice %219 {offsets = [0, 64], sizes = [2, 32], strides = [1, 1]} : vector<2x96xf32> to vector<2x32xf32>
    %221 = math.tanh %220 : vector<2x32xf32>
    %222 = vector.extract_strided_slice %219 {offsets = [0, 0], sizes = [1, 8], strides = [1, 1]} : vector<2x96xf32> to vector<1x8xf32>
    %223 = vector.extract_strided_slice %219 {offsets = [0, 8], sizes = [1, 8], strides = [1, 1]} : vector<2x96xf32> to vector<1x8xf32>
    %224 = vector.extract_strided_slice %219 {offsets = [0, 16], sizes = [1, 8], strides = [1, 1]} : vector<2x96xf32> to vector<1x8xf32>
    %225 = vector.extract_strided_slice %219 {offsets = [0, 24], sizes = [1, 8], strides = [1, 1]} : vector<2x96xf32> to vector<1x8xf32>
    %226 = tpu.concatenate %222, %223, %224, %225 in 0 : vector<1x8xf32>, vector<1x8xf32>, vector<1x8xf32>, vector<1x8xf32> -> vector<4x8xf32>
    %cst_77 = arith.constant dense<0xFF800000> : vector<4xf32>
    %227 = vector.multi_reduction <maximumf>, %226, %cst_77 [1] : vector<4x8xf32> to vector<4xf32>
    %228 = vector.shape_cast %227 : vector<4xf32> to vector<4x1xf32>
    %229 = vector.broadcast %228 : vector<4x1xf32> to vector<4x8xf32>
    %230 = arith.subf %226, %229 : vector<4x8xf32>
    %231 = math.exp %230 : vector<4x8xf32>
    %cst_78 = arith.constant dense<0.000000e+00> : vector<4xf32>
    %232 = vector.multi_reduction <add>, %231, %cst_78 [1] : vector<4x8xf32> to vector<4xf32>
    %233 = vector.shape_cast %232 : vector<4xf32> to vector<4x1xf32>
    %234 = tpu.reciprocal %233 {approx = true} : vector<4x1xf32> -> vector<4x1xf32>
    %235 = vector.broadcast %234 : vector<4x1xf32> to vector<4x8xf32>
    %236 = arith.mulf %231, %235 : vector<4x8xf32>
    %cst_79 = arith.constant dense<0.000000e+00> : vector<64x4xf32>
    %237 = tpu.matmul %123, %236, %cst_79 {dimension_numbers = #tpu.dot_dimension_numbers<[1], [1], [0], [0], [0, 0, 1, 0], [], []>} : vector<64x8xf32>, vector<4x8xf32>, vector<64x4xf32> -> vector<64x4xf32>
    %238 = vector.extract_strided_slice %219 {offsets = [0, 32], sizes = [1, 8], strides = [1, 1]} : vector<2x96xf32> to vector<1x8xf32>
    %239 = vector.extract_strided_slice %219 {offsets = [0, 40], sizes = [1, 8], strides = [1, 1]} : vector<2x96xf32> to vector<1x8xf32>
    %240 = vector.extract_strided_slice %219 {offsets = [0, 48], sizes = [1, 8], strides = [1, 1]} : vector<2x96xf32> to vector<1x8xf32>
    %241 = vector.extract_strided_slice %219 {offsets = [0, 56], sizes = [1, 8], strides = [1, 1]} : vector<2x96xf32> to vector<1x8xf32>
    %242 = tpu.concatenate %238, %239, %240, %241 in 0 : vector<1x8xf32>, vector<1x8xf32>, vector<1x8xf32>, vector<1x8xf32> -> vector<4x8xf32>
    %cst_80 = arith.constant dense<0xFF800000> : vector<4xf32>
    %243 = vector.multi_reduction <maximumf>, %242, %cst_80 [1] : vector<4x8xf32> to vector<4xf32>
    %244 = vector.shape_cast %243 : vector<4xf32> to vector<4x1xf32>
    %245 = vector.broadcast %244 : vector<4x1xf32> to vector<4x8xf32>
    %246 = arith.subf %242, %245 : vector<4x8xf32>
    %247 = math.exp %246 : vector<4x8xf32>
    %cst_81 = arith.constant dense<0.000000e+00> : vector<4xf32>
    %248 = vector.multi_reduction <add>, %247, %cst_81 [1] : vector<4x8xf32> to vector<4xf32>
    %249 = vector.shape_cast %248 : vector<4xf32> to vector<4x1xf32>
    %250 = tpu.reciprocal %249 {approx = true} : vector<4x1xf32> -> vector<4x1xf32>
    %251 = vector.broadcast %250 : vector<4x1xf32> to vector<4x8xf32>
    %252 = arith.mulf %247, %251 : vector<4x8xf32>
    %cst_82 = arith.constant dense<0.000000e+00> : vector<64x4xf32>
    %253 = tpu.matmul %123, %252, %cst_82 {dimension_numbers = #tpu.dot_dimension_numbers<[1], [1], [0], [0], [0, 0, 1, 0], [], []>} : vector<64x8xf32>, vector<4x8xf32>, vector<64x4xf32> -> vector<64x4xf32>
    %254 = arith.addf %237, %253 : vector<64x4xf32>
    %cst_83 = arith.constant 0.000000e+00 : f32
    %cst_84 = arith.constant 1.000000e+00 : f32
    %255 = vector.broadcast %cst_83 : f32 to vector<64x4xf32>
    %256 = arith.maximumf %255, %254 : vector<64x4xf32>
    %257 = vector.broadcast %cst_84 : f32 to vector<64x4xf32>
    %258 = arith.minimumf %257, %256 : vector<64x4xf32>
    %259 = arith.addf %237, %253 : vector<64x4xf32>
    %cst_85 = arith.constant 1.000000e+00 : f32
    %260 = vector.broadcast %cst_85 : f32 to vector<64x4xf32>
    %261 = arith.subf %259, %260 : vector<64x4xf32>
    %cst_86 = arith.constant 0.000000e+00 : f32
    %cst_87 = arith.constant 1.000000e+00 : f32
    %262 = vector.broadcast %cst_86 : f32 to vector<64x4xf32>
    %263 = arith.maximumf %262, %261 : vector<64x4xf32>
    %264 = vector.broadcast %cst_87 : f32 to vector<64x4xf32>
    %265 = arith.minimumf %264, %263 : vector<64x4xf32>
    %266 = arith.subf %237, %253 : vector<64x4xf32>
    %cst_88 = arith.constant 0.000000e+00 : f32
    %cst_89 = arith.constant 1.000000e+00 : f32
    %267 = vector.broadcast %cst_88 : f32 to vector<64x4xf32>
    %268 = arith.maximumf %267, %266 : vector<64x4xf32>
    %269 = vector.broadcast %cst_89 : f32 to vector<64x4xf32>
    %270 = arith.minimumf %269, %268 : vector<64x4xf32>
    %271 = arith.subf %253, %237 : vector<64x4xf32>
    %cst_90 = arith.constant 0.000000e+00 : f32
    %cst_91 = arith.constant 1.000000e+00 : f32
    %272 = vector.broadcast %cst_90 : f32 to vector<64x4xf32>
    %273 = arith.maximumf %272, %271 : vector<64x4xf32>
    %274 = vector.broadcast %cst_91 : f32 to vector<64x4xf32>
    %275 = arith.minimumf %274, %273 : vector<64x4xf32>
    %276 = tpu.concatenate %258, %265, %270, %275 in 1 : vector<64x4xf32>, vector<64x4xf32>, vector<64x4xf32>, vector<64x4xf32> -> vector<64x16xf32>
    %277 = vector.extract_strided_slice %219 {offsets = [1, 0], sizes = [1, 8], strides = [1, 1]} : vector<2x96xf32> to vector<1x8xf32>
    %278 = vector.extract_strided_slice %219 {offsets = [1, 8], sizes = [1, 8], strides = [1, 1]} : vector<2x96xf32> to vector<1x8xf32>
    %279 = vector.extract_strided_slice %219 {offsets = [1, 16], sizes = [1, 8], strides = [1, 1]} : vector<2x96xf32> to vector<1x8xf32>
    %280 = vector.extract_strided_slice %219 {offsets = [1, 24], sizes = [1, 8], strides = [1, 1]} : vector<2x96xf32> to vector<1x8xf32>
    %281 = tpu.concatenate %277, %278, %279, %280 in 0 : vector<1x8xf32>, vector<1x8xf32>, vector<1x8xf32>, vector<1x8xf32> -> vector<4x8xf32>
    %cst_92 = arith.constant dense<0xFF800000> : vector<4xf32>
    %282 = vector.multi_reduction <maximumf>, %281, %cst_92 [1] : vector<4x8xf32> to vector<4xf32>
    %283 = vector.shape_cast %282 : vector<4xf32> to vector<4x1xf32>
    %284 = vector.broadcast %283 : vector<4x1xf32> to vector<4x8xf32>
    %285 = arith.subf %281, %284 : vector<4x8xf32>
    %286 = math.exp %285 : vector<4x8xf32>
    %cst_93 = arith.constant dense<0.000000e+00> : vector<4xf32>
    %287 = vector.multi_reduction <add>, %286, %cst_93 [1] : vector<4x8xf32> to vector<4xf32>
    %288 = vector.shape_cast %287 : vector<4xf32> to vector<4x1xf32>
    %289 = tpu.reciprocal %288 {approx = true} : vector<4x1xf32> -> vector<4x1xf32>
    %290 = vector.broadcast %289 : vector<4x1xf32> to vector<4x8xf32>
    %291 = arith.mulf %286, %290 : vector<4x8xf32>
    %cst_94 = arith.constant dense<0.000000e+00> : vector<64x4xf32>
    %292 = tpu.matmul %178, %291, %cst_94 {dimension_numbers = #tpu.dot_dimension_numbers<[1], [1], [0], [0], [0, 0, 1, 0], [], []>} : vector<64x8xf32>, vector<4x8xf32>, vector<64x4xf32> -> vector<64x4xf32>
    %293 = vector.extract_strided_slice %219 {offsets = [1, 32], sizes = [1, 8], strides = [1, 1]} : vector<2x96xf32> to vector<1x8xf32>
    %294 = vector.extract_strided_slice %219 {offsets = [1, 40], sizes = [1, 8], strides = [1, 1]} : vector<2x96xf32> to vector<1x8xf32>
    %295 = vector.extract_strided_slice %219 {offsets = [1, 48], sizes = [1, 8], strides = [1, 1]} : vector<2x96xf32> to vector<1x8xf32>
    %296 = vector.extract_strided_slice %219 {offsets = [1, 56], sizes = [1, 8], strides = [1, 1]} : vector<2x96xf32> to vector<1x8xf32>
    %297 = tpu.concatenate %293, %294, %295, %296 in 0 : vector<1x8xf32>, vector<1x8xf32>, vector<1x8xf32>, vector<1x8xf32> -> vector<4x8xf32>
    %cst_95 = arith.constant dense<0xFF800000> : vector<4xf32>
    %298 = vector.multi_reduction <maximumf>, %297, %cst_95 [1] : vector<4x8xf32> to vector<4xf32>
    %299 = vector.shape_cast %298 : vector<4xf32> to vector<4x1xf32>
    %300 = vector.broadcast %299 : vector<4x1xf32> to vector<4x8xf32>
    %301 = arith.subf %297, %300 : vector<4x8xf32>
    %302 = math.exp %301 : vector<4x8xf32>
    %cst_96 = arith.constant dense<0.000000e+00> : vector<4xf32>
    %303 = vector.multi_reduction <add>, %302, %cst_96 [1] : vector<4x8xf32> to vector<4xf32>
    %304 = vector.shape_cast %303 : vector<4xf32> to vector<4x1xf32>
    %305 = tpu.reciprocal %304 {approx = true} : vector<4x1xf32> -> vector<4x1xf32>
    %306 = vector.broadcast %305 : vector<4x1xf32> to vector<4x8xf32>
    %307 = arith.mulf %302, %306 : vector<4x8xf32>
    %cst_97 = arith.constant dense<0.000000e+00> : vector<64x4xf32>
    %308 = tpu.matmul %178, %307, %cst_97 {dimension_numbers = #tpu.dot_dimension_numbers<[1], [1], [0], [0], [0, 0, 1, 0], [], []>} : vector<64x8xf32>, vector<4x8xf32>, vector<64x4xf32> -> vector<64x4xf32>
    %309 = arith.addf %292, %308 : vector<64x4xf32>
    %cst_98 = arith.constant 0.000000e+00 : f32
    %cst_99 = arith.constant 1.000000e+00 : f32
    %310 = vector.broadcast %cst_98 : f32 to vector<64x4xf32>
    %311 = arith.maximumf %310, %309 : vector<64x4xf32>
    %312 = vector.broadcast %cst_99 : f32 to vector<64x4xf32>
    %313 = arith.minimumf %312, %311 : vector<64x4xf32>
    %314 = arith.addf %292, %308 : vector<64x4xf32>
    %cst_100 = arith.constant 1.000000e+00 : f32
    %315 = vector.broadcast %cst_100 : f32 to vector<64x4xf32>
    %316 = arith.subf %314, %315 : vector<64x4xf32>
    %cst_101 = arith.constant 0.000000e+00 : f32
    %cst_102 = arith.constant 1.000000e+00 : f32
    %317 = vector.broadcast %cst_101 : f32 to vector<64x4xf32>
    %318 = arith.maximumf %317, %316 : vector<64x4xf32>
    %319 = vector.broadcast %cst_102 : f32 to vector<64x4xf32>
    %320 = arith.minimumf %319, %318 : vector<64x4xf32>
    %321 = arith.subf %292, %308 : vector<64x4xf32>
    %cst_103 = arith.constant 0.000000e+00 : f32
    %cst_104 = arith.constant 1.000000e+00 : f32
    %322 = vector.broadcast %cst_103 : f32 to vector<64x4xf32>
    %323 = arith.maximumf %322, %321 : vector<64x4xf32>
    %324 = vector.broadcast %cst_104 : f32 to vector<64x4xf32>
    %325 = arith.minimumf %324, %323 : vector<64x4xf32>
    %326 = arith.subf %308, %292 : vector<64x4xf32>
    %cst_105 = arith.constant 0.000000e+00 : f32
    %cst_106 = arith.constant 1.000000e+00 : f32
    %327 = vector.broadcast %cst_105 : f32 to vector<64x4xf32>
    %328 = arith.maximumf %327, %326 : vector<64x4xf32>
    %329 = vector.broadcast %cst_106 : f32 to vector<64x4xf32>
    %330 = arith.minimumf %329, %328 : vector<64x4xf32>
    %331 = tpu.concatenate %313, %320, %325, %330 in 1 : vector<64x4xf32>, vector<64x4xf32>, vector<64x4xf32>, vector<64x4xf32> -> vector<64x16xf32>
    %332 = tpu.concatenate %221, %214 in 1 : vector<2x32xf32>, vector<2x32xf32> -> vector<2x64xf32>
    %c0_107 = arith.constant 0 : index
    %c0_108 = arith.constant 0 : index
    %333 = vector.load %arg15[%c0_107, %c0_108] : memref<64x96xf32, #tpu.memory_space<vmem>>, vector<64x96xf32>
    %cst_109 = arith.constant dense<0.000000e+00> : vector<2x96xf32>
    %334 = tpu.matmul %332, %333, %cst_109 {dimension_numbers = #tpu.dot_dimension_numbers<[1], [0], [0], [1], [0, 0, 1, 1], [], []>} : vector<2x64xf32>, vector<64x96xf32>, vector<2x96xf32> -> vector<2x96xf32>
    %c0_110 = arith.constant 0 : index
    %c0_111 = arith.constant 0 : index
    %335 = vector.load %arg16[%c0_110, %c0_111] : memref<1x96xf32, #tpu.memory_space<vmem>>, vector<1x96xf32>
    %336 = vector.broadcast %335 : vector<1x96xf32> to vector<2x96xf32>
    %337 = arith.addf %334, %336 : vector<2x96xf32>
    %338 = vector.extract_strided_slice %337 {offsets = [0, 0], sizes = [2, 32], strides = [1, 1]} : vector<2x96xf32> to vector<2x32xf32>
    %339 = arith.negf %338 : vector<2x32xf32>
    %340 = math.exp %339 : vector<2x32xf32>
    %cst_112 = arith.constant 1.000000e+00 : f32
    %341 = vector.broadcast %cst_112 : f32 to vector<2x32xf32>
    %342 = arith.addf %341, %340 : vector<2x32xf32>
    %343 = arith.divf %341, %342 : vector<2x32xf32>
    %344 = vector.extract_strided_slice %337 {offsets = [0, 32], sizes = [2, 32], strides = [1, 1]} : vector<2x96xf32> to vector<2x32xf32>
    %345 = arith.negf %344 : vector<2x32xf32>
    %346 = math.exp %345 : vector<2x32xf32>
    %cst_113 = arith.constant 1.000000e+00 : f32
    %347 = vector.broadcast %cst_113 : f32 to vector<2x32xf32>
    %348 = arith.addf %347, %346 : vector<2x32xf32>
    %349 = arith.divf %347, %348 : vector<2x32xf32>
    %c0_114 = arith.constant 0 : index
    %c0_115 = arith.constant 0 : index
    %350 = vector.load %arg17[%c0_114, %c0_115] : memref<32x32xf32, #tpu.memory_space<vmem>>, vector<32x32xf32>
    %cst_116 = arith.constant dense<0.000000e+00> : vector<2x32xf32>
    %351 = tpu.matmul %214, %350, %cst_116 {dimension_numbers = #tpu.dot_dimension_numbers<[1], [0], [0], [1], [0, 0, 1, 1], [], []>} : vector<2x32xf32>, vector<32x32xf32>, vector<2x32xf32> -> vector<2x32xf32>
    %c0_117 = arith.constant 0 : index
    %c0_118 = arith.constant 0 : index
    %352 = vector.load %arg18[%c0_117, %c0_118] : memref<1x32xf32, #tpu.memory_space<vmem>>, vector<1x32xf32>
    %353 = vector.broadcast %352 : vector<1x32xf32> to vector<2x32xf32>
    %354 = arith.addf %351, %353 : vector<2x32xf32>
    %355 = vector.extract_strided_slice %337 {offsets = [0, 64], sizes = [2, 32], strides = [1, 1]} : vector<2x96xf32> to vector<2x32xf32>
    %356 = arith.subf %355, %354 : vector<2x32xf32>
    %357 = arith.mulf %343, %354 : vector<2x32xf32>
    %358 = arith.addf %356, %357 : vector<2x32xf32>
    %359 = math.tanh %358 : vector<2x32xf32>
    %cst_119 = arith.constant 1.000000e+00 : f32
    %360 = vector.broadcast %cst_119 : f32 to vector<2x32xf32>
    %361 = arith.subf %360, %349 : vector<2x32xf32>
    %362 = arith.mulf %361, %359 : vector<2x32xf32>
    %363 = arith.mulf %349, %214 : vector<2x32xf32>
    %364 = arith.addf %362, %363 : vector<2x32xf32>
    %365 = tpu.concatenate %276, %123 in 1 : vector<64x16xf32>, vector<64x8xf32> -> vector<64x24xf32>
    %366 = tpu.concatenate %331, %178 in 1 : vector<64x16xf32>, vector<64x8xf32> -> vector<64x24xf32>
    %c0_120 = arith.constant 0 : index
    %c0_121 = arith.constant 0 : index
    %367 = vector.load %arg22[%c0_120, %c0_121] : memref<32x80xf32, #tpu.memory_space<vmem>>, vector<32x80xf32>
    %cst_122 = arith.constant dense<0.000000e+00> : vector<2x80xf32>
    %368 = tpu.matmul %364, %367, %cst_122 {dimension_numbers = #tpu.dot_dimension_numbers<[1], [0], [0], [1], [0, 0, 1, 1], [], []>} : vector<2x32xf32>, vector<32x80xf32>, vector<2x80xf32> -> vector<2x80xf32>
    %c0_123 = arith.constant 0 : index
    %c0_124 = arith.constant 0 : index
    %369 = vector.load %arg23[%c0_123, %c0_124] : memref<1x80xf32, #tpu.memory_space<vmem>>, vector<1x80xf32>
    %370 = vector.broadcast %369 : vector<1x80xf32> to vector<2x80xf32>
    %371 = arith.addf %368, %370 : vector<2x80xf32>
    %372 = vector.extract_strided_slice %371 {offsets = [0, 0], sizes = [1, 24], strides = [1, 1]} : vector<2x80xf32> to vector<1x24xf32>
    %cst_125 = arith.constant dense<0xFF800000> : vector<1xf32>
    %373 = vector.multi_reduction <maximumf>, %372, %cst_125 [1] : vector<1x24xf32> to vector<1xf32>
    %374 = vector.shape_cast %373 : vector<1xf32> to vector<1x1xf32>
    %375 = vector.broadcast %374 : vector<1x1xf32> to vector<1x24xf32>
    %376 = arith.subf %372, %375 : vector<1x24xf32>
    %377 = math.exp %376 : vector<1x24xf32>
    %cst_126 = arith.constant dense<0.000000e+00> : vector<1xf32>
    %378 = vector.multi_reduction <add>, %377, %cst_126 [1] : vector<1x24xf32> to vector<1xf32>
    %379 = vector.shape_cast %378 : vector<1xf32> to vector<1x1xf32>
    %380 = tpu.reciprocal %379 {approx = true} : vector<1x1xf32> -> vector<1x1xf32>
    %381 = vector.broadcast %380 : vector<1x1xf32> to vector<1x24xf32>
    %382 = arith.mulf %377, %381 : vector<1x24xf32>
    %cst_127 = arith.constant dense<0.000000e+00> : vector<64x1xf32>
    %383 = tpu.matmul %365, %382, %cst_127 {dimension_numbers = #tpu.dot_dimension_numbers<[1], [1], [0], [0], [0, 0, 1, 0], [], []>} : vector<64x24xf32>, vector<1x24xf32>, vector<64x1xf32> -> vector<64x1xf32>
    %384 = vector.extract_strided_slice %371 {offsets = [0, 24], sizes = [1, 24], strides = [1, 1]} : vector<2x80xf32> to vector<1x24xf32>
    %cst_128 = arith.constant dense<0xFF800000> : vector<1xf32>
    %385 = vector.multi_reduction <maximumf>, %384, %cst_128 [1] : vector<1x24xf32> to vector<1xf32>
    %386 = vector.shape_cast %385 : vector<1xf32> to vector<1x1xf32>
    %387 = vector.broadcast %386 : vector<1x1xf32> to vector<1x24xf32>
    %388 = arith.subf %384, %387 : vector<1x24xf32>
    %389 = math.exp %388 : vector<1x24xf32>
    %cst_129 = arith.constant dense<0.000000e+00> : vector<1xf32>
    %390 = vector.multi_reduction <add>, %389, %cst_129 [1] : vector<1x24xf32> to vector<1xf32>
    %391 = vector.shape_cast %390 : vector<1xf32> to vector<1x1xf32>
    %392 = tpu.reciprocal %391 {approx = true} : vector<1x1xf32> -> vector<1x1xf32>
    %393 = vector.broadcast %392 : vector<1x1xf32> to vector<1x24xf32>
    %394 = arith.mulf %389, %393 : vector<1x24xf32>
    %cst_130 = arith.constant dense<0.000000e+00> : vector<64x1xf32>
    %395 = tpu.matmul %365, %394, %cst_130 {dimension_numbers = #tpu.dot_dimension_numbers<[1], [1], [0], [0], [0, 0, 1, 0], [], []>} : vector<64x24xf32>, vector<1x24xf32>, vector<64x1xf32> -> vector<64x1xf32>
    %396 = arith.addf %383, %395 : vector<64x1xf32>
    %cst_131 = arith.constant 0.000000e+00 : f32
    %cst_132 = arith.constant 1.000000e+00 : f32
    %397 = vector.broadcast %cst_131 : f32 to vector<64x1xf32>
    %398 = arith.maximumf %397, %396 : vector<64x1xf32>
    %399 = vector.broadcast %cst_132 : f32 to vector<64x1xf32>
    %400 = arith.minimumf %399, %398 : vector<64x1xf32>
    %401 = arith.addf %383, %395 : vector<64x1xf32>
    %cst_133 = arith.constant 1.000000e+00 : f32
    %402 = vector.broadcast %cst_133 : f32 to vector<64x1xf32>
    %403 = arith.subf %401, %402 : vector<64x1xf32>
    %cst_134 = arith.constant 0.000000e+00 : f32
    %cst_135 = arith.constant 1.000000e+00 : f32
    %404 = vector.broadcast %cst_134 : f32 to vector<64x1xf32>
    %405 = arith.maximumf %404, %403 : vector<64x1xf32>
    %406 = vector.broadcast %cst_135 : f32 to vector<64x1xf32>
    %407 = arith.minimumf %406, %405 : vector<64x1xf32>
    %408 = arith.subf %383, %395 : vector<64x1xf32>
    %cst_136 = arith.constant 0.000000e+00 : f32
    %cst_137 = arith.constant 1.000000e+00 : f32
    %409 = vector.broadcast %cst_136 : f32 to vector<64x1xf32>
    %410 = arith.maximumf %409, %408 : vector<64x1xf32>
    %411 = vector.broadcast %cst_137 : f32 to vector<64x1xf32>
    %412 = arith.minimumf %411, %410 : vector<64x1xf32>
    %413 = arith.subf %395, %383 : vector<64x1xf32>
    %cst_138 = arith.constant 0.000000e+00 : f32
    %cst_139 = arith.constant 1.000000e+00 : f32
    %414 = vector.broadcast %cst_138 : f32 to vector<64x1xf32>
    %415 = arith.maximumf %414, %413 : vector<64x1xf32>
    %416 = vector.broadcast %cst_139 : f32 to vector<64x1xf32>
    %417 = arith.minimumf %416, %415 : vector<64x1xf32>
    %418 = tpu.concatenate %400, %407, %412, %417 in 1 : vector<64x1xf32>, vector<64x1xf32>, vector<64x1xf32>, vector<64x1xf32> -> vector<64x4xf32>
    %419 = vector.extract_strided_slice %371 {offsets = [1, 0], sizes = [1, 24], strides = [1, 1]} : vector<2x80xf32> to vector<1x24xf32>
    %cst_140 = arith.constant dense<0xFF800000> : vector<1xf32>
    %420 = vector.multi_reduction <maximumf>, %419, %cst_140 [1] : vector<1x24xf32> to vector<1xf32>
    %421 = vector.shape_cast %420 : vector<1xf32> to vector<1x1xf32>
    %422 = vector.broadcast %421 : vector<1x1xf32> to vector<1x24xf32>
    %423 = arith.subf %419, %422 : vector<1x24xf32>
    %424 = math.exp %423 : vector<1x24xf32>
    %cst_141 = arith.constant dense<0.000000e+00> : vector<1xf32>
    %425 = vector.multi_reduction <add>, %424, %cst_141 [1] : vector<1x24xf32> to vector<1xf32>
    %426 = vector.shape_cast %425 : vector<1xf32> to vector<1x1xf32>
    %427 = tpu.reciprocal %426 {approx = true} : vector<1x1xf32> -> vector<1x1xf32>
    %428 = vector.broadcast %427 : vector<1x1xf32> to vector<1x24xf32>
    %429 = arith.mulf %424, %428 : vector<1x24xf32>
    %cst_142 = arith.constant dense<0.000000e+00> : vector<64x1xf32>
    %430 = tpu.matmul %366, %429, %cst_142 {dimension_numbers = #tpu.dot_dimension_numbers<[1], [1], [0], [0], [0, 0, 1, 0], [], []>} : vector<64x24xf32>, vector<1x24xf32>, vector<64x1xf32> -> vector<64x1xf32>
    %431 = vector.extract_strided_slice %371 {offsets = [1, 24], sizes = [1, 24], strides = [1, 1]} : vector<2x80xf32> to vector<1x24xf32>
    %cst_143 = arith.constant dense<0xFF800000> : vector<1xf32>
    %432 = vector.multi_reduction <maximumf>, %431, %cst_143 [1] : vector<1x24xf32> to vector<1xf32>
    %433 = vector.shape_cast %432 : vector<1xf32> to vector<1x1xf32>
    %434 = vector.broadcast %433 : vector<1x1xf32> to vector<1x24xf32>
    %435 = arith.subf %431, %434 : vector<1x24xf32>
    %436 = math.exp %435 : vector<1x24xf32>
    %cst_144 = arith.constant dense<0.000000e+00> : vector<1xf32>
    %437 = vector.multi_reduction <add>, %436, %cst_144 [1] : vector<1x24xf32> to vector<1xf32>
    %438 = vector.shape_cast %437 : vector<1xf32> to vector<1x1xf32>
    %439 = tpu.reciprocal %438 {approx = true} : vector<1x1xf32> -> vector<1x1xf32>
    %440 = vector.broadcast %439 : vector<1x1xf32> to vector<1x24xf32>
    %441 = arith.mulf %436, %440 : vector<1x24xf32>
    %cst_145 = arith.constant dense<0.000000e+00> : vector<64x1xf32>
    %442 = tpu.matmul %366, %441, %cst_145 {dimension_numbers = #tpu.dot_dimension_numbers<[1], [1], [0], [0], [0, 0, 1, 0], [], []>} : vector<64x24xf32>, vector<1x24xf32>, vector<64x1xf32> -> vector<64x1xf32>
    %443 = arith.addf %430, %442 : vector<64x1xf32>
    %cst_146 = arith.constant 0.000000e+00 : f32
    %cst_147 = arith.constant 1.000000e+00 : f32
    %444 = vector.broadcast %cst_146 : f32 to vector<64x1xf32>
    %445 = arith.maximumf %444, %443 : vector<64x1xf32>
    %446 = vector.broadcast %cst_147 : f32 to vector<64x1xf32>
    %447 = arith.minimumf %446, %445 : vector<64x1xf32>
    %448 = arith.addf %430, %442 : vector<64x1xf32>
    %cst_148 = arith.constant 1.000000e+00 : f32
    %449 = vector.broadcast %cst_148 : f32 to vector<64x1xf32>
    %450 = arith.subf %448, %449 : vector<64x1xf32>
    %cst_149 = arith.constant 0.000000e+00 : f32
    %cst_150 = arith.constant 1.000000e+00 : f32
    %451 = vector.broadcast %cst_149 : f32 to vector<64x1xf32>
    %452 = arith.maximumf %451, %450 : vector<64x1xf32>
    %453 = vector.broadcast %cst_150 : f32 to vector<64x1xf32>
    %454 = arith.minimumf %453, %452 : vector<64x1xf32>
    %455 = arith.subf %430, %442 : vector<64x1xf32>
    %cst_151 = arith.constant 0.000000e+00 : f32
    %cst_152 = arith.constant 1.000000e+00 : f32
    %456 = vector.broadcast %cst_151 : f32 to vector<64x1xf32>
    %457 = arith.maximumf %456, %455 : vector<64x1xf32>
    %458 = vector.broadcast %cst_152 : f32 to vector<64x1xf32>
    %459 = arith.minimumf %458, %457 : vector<64x1xf32>
    %460 = arith.subf %442, %430 : vector<64x1xf32>
    %cst_153 = arith.constant 0.000000e+00 : f32
    %cst_154 = arith.constant 1.000000e+00 : f32
    %461 = vector.broadcast %cst_153 : f32 to vector<64x1xf32>
    %462 = arith.maximumf %461, %460 : vector<64x1xf32>
    %463 = vector.broadcast %cst_154 : f32 to vector<64x1xf32>
    %464 = arith.minimumf %463, %462 : vector<64x1xf32>
    %465 = tpu.concatenate %447, %454, %459, %464 in 1 : vector<64x1xf32>, vector<64x1xf32>, vector<64x1xf32>, vector<64x1xf32> -> vector<64x4xf32>
    %466 = vector.extract_strided_slice %418 {offsets = [0, 0], sizes = [64, 1], strides = [1, 1]} : vector<64x4xf32> to vector<64x1xf32>
    %cst_155 = arith.constant 0.000000e+00 : f32
    %cst_156 = arith.constant 1.000000e+00 : f32
    %467 = vector.broadcast %cst_155 : f32 to vector<64x1xf32>
    %468 = arith.maximumf %467, %466 : vector<64x1xf32>
    %469 = vector.broadcast %cst_156 : f32 to vector<64x1xf32>
    %470 = arith.minimumf %469, %468 : vector<64x1xf32>
    %471 = vector.extract_strided_slice %465 {offsets = [0, 0], sizes = [64, 1], strides = [1, 1]} : vector<64x4xf32> to vector<64x1xf32>
    %cst_157 = arith.constant 0.000000e+00 : f32
    %cst_158 = arith.constant 1.000000e+00 : f32
    %472 = vector.broadcast %cst_157 : f32 to vector<64x1xf32>
    %473 = arith.maximumf %472, %471 : vector<64x1xf32>
    %474 = vector.broadcast %cst_158 : f32 to vector<64x1xf32>
    %475 = arith.minimumf %474, %473 : vector<64x1xf32>
    %476 = tpu.concatenate %470, %475 in 0 : vector<64x1xf32>, vector<64x1xf32> -> vector<128x1xf32>
    %c0_159 = arith.constant 0 : index
    %c0_160 = arith.constant 0 : index
    %477 = vector.load %arg25[%c0_159, %c0_160] : memref<128x1xf32, #tpu.memory_space<vmem>>, vector<128x1xf32>
    tpu.vector_store %arg25[%c0_159, %c0_160], %476 {strides = array<i32>} : memref<128x1xf32, #tpu.memory_space<vmem>>, vector<128x1xf32>,
    return
  }
  func.func @transform_0(%arg0: i32) -> (i32, i32) {
    %c0_i32 = arith.constant 0 : i32
    %c0_i32_0 = arith.constant 0 : i32
    %c0_i32_1 = arith.constant 0 : i32
    return %c0_i32, %c0_i32_0 : i32, i32
  }
  func.func @transform_1(%arg0: i32) -> (i32, i32) {
    %c0_i32 = arith.constant 0 : i32
    %c0_i32_0 = arith.constant 0 : i32
    %c0_i32_1 = arith.constant 0 : i32
    return %c0_i32, %c0_i32_0 : i32, i32
  }
  func.func @transform_2(%arg0: i32) -> (i32, i32) {
    %c0_i32 = arith.constant 0 : i32
    %c0_i32_0 = arith.constant 0 : i32
    %c0_i32_1 = arith.constant 0 : i32
    return %c0_i32, %c0_i32_0 : i32, i32
  }
  func.func @transform_3(%arg0: i32) -> (i32, i32) {
    %c0_i32 = arith.constant 0 : i32
    %c0_i32_0 = arith.constant 0 : i32
    %c0_i32_1 = arith.constant 0 : i32
    return %c0_i32, %c0_i32_0 : i32, i32
  }
  func.func @transform_4(%arg0: i32) -> (i32, i32) {
    %c0_i32 = arith.constant 0 : i32
    %c0_i32_0 = arith.constant 0 : i32
    %c0_i32_1 = arith.constant 0 : i32
    return %c0_i32, %c0_i32_0 : i32, i32
  }
  func.func @transform_5(%arg0: i32) -> (i32, i32) {
    %c0_i32 = arith.constant 0 : i32
    %c0_i32_0 = arith.constant 0 : i32
    %c0_i32_1 = arith.constant 0 : i32
    return %c0_i32, %c0_i32_0 : i32, i32
  }
  func.func @transform_6(%arg0: i32) -> (i32, i32) {
    %c0_i32 = arith.constant 0 : i32
    %c0_i32_0 = arith.constant 0 : i32
    %c0_i32_1 = arith.constant 0 : i32
    return %c0_i32, %c0_i32_0 : i32, i32
  }
  func.func @transform_7(%arg0: i32) -> (i32, i32) {
    %c0_i32 = arith.constant 0 : i32
    %c0_i32_0 = arith.constant 0 : i32
    %c0_i32_1 = arith.constant 0 : i32
    return %c0_i32, %c0_i32_0 : i32, i32
  }
  func.func @transform_8(%arg0: i32) -> (i32, i32) {
    %c0_i32 = arith.constant 0 : i32
    %c0_i32_0 = arith.constant 0 : i32
    %c0_i32_1 = arith.constant 0 : i32
    return %c0_i32, %c0_i32_0 : i32, i32
  }
  func.func @transform_9(%arg0: i32) -> (i32, i32) {
    %c0_i32 = arith.constant 0 : i32
    %c0_i32_0 = arith.constant 0 : i32
    %c0_i32_1 = arith.constant 0 : i32
    return %c0_i32, %c0_i32_0 : i32, i32
  }
  func.func @transform_10(%arg0: i32) -> (i32, i32) {
    %c0_i32 = arith.constant 0 : i32
    %c0_i32_0 = arith.constant 0 : i32
    %c0_i32_1 = arith.constant 0 : i32
    return %c0_i32, %c0_i32_0 : i32, i32
  }
  func.func @transform_11(%arg0: i32) -> (i32, i32) {
    %c0_i32 = arith.constant 0 : i32
    %c0_i32_0 = arith.constant 0 : i32
    %c0_i32_1 = arith.constant 0 : i32
    return %c0_i32, %c0_i32_0 : i32, i32
  }
  func.func @transform_12(%arg0: i32) -> (i32, i32) {
    %c0_i32 = arith.constant 0 : i32
    %c0_i32_0 = arith.constant 0 : i32
    %c0_i32_1 = arith.constant 0 : i32
    return %c0_i32, %c0_i32_0 : i32, i32
  }
  func.func @transform_13(%arg0: i32) -> (i32, i32) {
    %c0_i32 = arith.constant 0 : i32
    %c0_i32_0 = arith.constant 0 : i32
    %c0_i32_1 = arith.constant 0 : i32
    return %c0_i32, %c0_i32_0 : i32, i32
  }
  func.func @transform_14(%arg0: i32) -> (i32, i32) {
    %c0_i32 = arith.constant 0 : i32
    %c0_i32_0 = arith.constant 0 : i32
    %c0_i32_1 = arith.constant 0 : i32
    return %c0_i32, %c0_i32_0 : i32, i32
  }
  func.func @transform_15(%arg0: i32) -> (i32, i32) {
    %c0_i32 = arith.constant 0 : i32
    %c0_i32_0 = arith.constant 0 : i32
    %c0_i32_1 = arith.constant 0 : i32
    return %c0_i32, %c0_i32_0 : i32, i32
  }
  func.func @transform_16(%arg0: i32) -> (i32, i32) {
    %c0_i32 = arith.constant 0 : i32
    %c0_i32_0 = arith.constant 0 : i32
    %c0_i32_1 = arith.constant 0 : i32
    return %c0_i32, %c0_i32_0 : i32, i32
  }
  func.func @transform_17(%arg0: i32) -> (i32, i32) {
    %c0_i32 = arith.constant 0 : i32
    %c0_i32_0 = arith.constant 0 : i32
    %c0_i32_1 = arith.constant 0 : i32
    return %c0_i32, %c0_i32_0 : i32, i32
  }
  func.func @transform_18(%arg0: i32) -> (i32, i32) {
    %c0_i32 = arith.constant 0 : i32
    %c0_i32_0 = arith.constant 0 : i32
    %c0_i32_1 = arith.constant 0 : i32
    return %c0_i32, %c0_i32_0 : i32, i32
  }
  func.func @transform_19(%arg0: i32) -> (i32, i32) {
    %c0_i32 = arith.constant 0 : i32
    %c0_i32_0 = arith.constant 0 : i32
    %c0_i32_1 = arith.constant 0 : i32
    return %c0_i32, %c0_i32_0 : i32, i32
  }
  func.func @transform_20(%arg0: i32) -> (i32, i32) {
    %c0_i32 = arith.constant 0 : i32
    %c0_i32_0 = arith.constant 0 : i32
    %c0_i32_1 = arith.constant 0 : i32
    return %c0_i32, %c0_i32_0 : i32, i32
  }
  func.func @transform_21(%arg0: i32) -> (i32, i32) {
    %c0_i32 = arith.constant 0 : i32
    %c0_i32_0 = arith.constant 0 : i32
    %c0_i32_1 = arith.constant 0 : i32
    return %c0_i32, %c0_i32_0 : i32, i32
  }
  func.func @transform_22(%arg0: i32) -> (i32, i32) {
    %c0_i32 = arith.constant 0 : i32
    %c0_i32_0 = arith.constant 0 : i32
    %c0_i32_1 = arith.constant 0 : i32
    return %c0_i32, %c0_i32_0 : i32, i32
  }
  func.func @transform_23(%arg0: i32) -> (i32, i32) {
    %c0_i32 = arith.constant 0 : i32
    %c0_i32_0 = arith.constant 0 : i32
    %c0_i32_1 = arith.constant 0 : i32
    return %c0_i32, %c0_i32_0 : i32, i32
  }
  func.func @transform_24(%arg0: i32) -> (i32, i32) {
    %c0_i32 = arith.constant 0 : i32
    %c0_i32_0 = arith.constant 0 : i32
    %c0_i32_1 = arith.constant 0 : i32
    return %c0_i32, %c0_i32_0 : i32, i32
  }
}

</mosaic_0001>

<llo_original>
// kernel: ucsgnet_forward.1
$region0: #{ucsgnet_forward.1}
  #allocation0 [shape = 'u32[]', space=smem, size = 0x4, offset = 0x4, fixed_abs, tag = 'smem constant byte address 0x4 - core index']
  #allocation1 [shape = 'u32[72,128]{1,0:T(1,128)}', space=vmem, size = 0x9000, scoped, tag = 'internal scratch']
  #allocation2 [shape = 'f32[1,1]{1,0:T(1,128)S(6)}', space=smem, size = 0x200, scoped, tag = 'scoped memory for ucsgnet_forward.1']
  %s0 = inlined_call_operand.vmem [shape: f32[2,256], index: 0, kind: input, shape index: {}]
  %s1 = inlined_call_operand.vmem [shape: f32[128,2], index: 1, kind: input, shape index: {}]
  %s2 = inlined_call_operand.hbm [shape: bf16[256,512], index: 2, kind: input, shape index: {}]
  %s3 = inlined_call_operand.vmem [shape: f32[1,512], index: 3, kind: input, shape index: {}]
  %s4 = inlined_call_operand.hbm [shape: bf16[512,256], index: 4, kind: input, shape index: {}]
  %s5 = inlined_call_operand.vmem [shape: f32[1,256], index: 5, kind: input, shape index: {}]
  %s6 = inlined_call_operand.vmem [shape: bf16[256,128], index: 6, kind: input, shape index: {}]
  %s7 = inlined_call_operand.vmem [shape: f32[1,128], index: 7, kind: input, shape index: {}]
  %s8 = inlined_call_operand.vmem [shape: f32[128,32], index: 8, kind: input, shape index: {}]
  %s9 = inlined_call_operand.vmem [shape: f32[1,32], index: 9, kind: input, shape index: {}]
  %s10 = inlined_call_operand.vmem [shape: f32[32,64], index: 10, kind: input, shape index: {}]
  %s11 = inlined_call_operand.vmem [shape: f32[1,64], index: 11, kind: input, shape index: {}]
  %s12 = inlined_call_operand.vmem [shape: f32[64,32], index: 12, kind: input, shape index: {}]
  %s13 = inlined_call_operand.vmem [shape: f32[1,32], index: 13, kind: input, shape index: {}]
  %s14 = inlined_call_operand.vmem [shape: f32[64,96], index: 14, kind: input, shape index: {}]
  %s15 = inlined_call_operand.vmem [shape: f32[1,96], index: 15, kind: input, shape index: {}]
  %s16 = inlined_call_operand.vmem [shape: f32[32,32], index: 16, kind: input, shape index: {}]
  %s17 = inlined_call_operand.vmem [shape: f32[1,32], index: 17, kind: input, shape index: {}]
  %s18 = inlined_call_operand.vmem [shape: f32[1,32], index: 18, kind: input, shape index: {}]
  %s19 = inlined_call_operand.vmem [shape: f32[32,96], index: 19, kind: input, shape index: {}]
  %s20 = inlined_call_operand.vmem [shape: f32[1,96], index: 20, kind: input, shape index: {}]
  %s21 = inlined_call_operand.vmem [shape: f32[32,80], index: 21, kind: input, shape index: {}]
  %s22 = inlined_call_operand.vmem [shape: f32[1,80], index: 22, kind: input, shape index: {}]
  %s23 = inlined_call_operand.<no memory space> [shape: f32[1,1], index: 23, kind: input, shape index: {}]
  %s24 = inlined_call_operand.vmem [shape: f32[128,1], index: 24, kind: output, shape index: {}]
  %s25 = sld [smem:[#allocation0]]
  $region114: #{ucsgnet_forward.1} parent=0
    _
  %s27 = ssub.s32 1, %s25
  %s28 = scalar_select 0, %s27, %s25
  %29 = sst [smem:[#allocation2]] %s23
  $region1: #{ucsgnet_forward.1} parent=0
    #allocation3 [shape = 'u8[262144]{0}', space=vmem, size = 0x40000, scoped, tag = 'input window, operand 2, single buffered']
    #allocation4 [shape = 's32[1]{0}', space=sflag, size = 0x4, scoped, tag = 'scoped memory for ucsgnet_forward.1']
    #allocation5 [shape = 'u8[262144]{0}', space=vmem, size = 0x40000, scoped, tag = 'input window, operand 4, single buffered']
    #allocation6 [shape = 's32[1]{0}', space=sflag, size = 0x4, scoped, tag = 'scoped memory for ucsgnet_forward.1']
    %30 = vsyncpa [#allocation4], 0
    %31 = vsyncpa [#allocation6], 0
    // Predicated region
    $region2: #{ucsgnet_forward.1} parent=1 // pred_check
      _
    $region3: #{ucsgnet_forward.1} parent=1 // pred_check_branch
      %33 = sbr.rel (0) target = $region5
    $region4: #{ucsgnet_forward.1} parent=1 // pred_region
      _
    $region5: #{ucsgnet_forward.1} parent=1 // pred_fallthru
      _
    // Predicated region
    $region6: #{ucsgnet_forward.1} parent=1 // pred_check
      _
    $region7: #{ucsgnet_forward.1} parent=1 // pred_check_branch
      %35 = sbr.rel (0) target = $region9
    $region8: #{ucsgnet_forward.1} parent=1 // pred_region
      _
    $region9: #{ucsgnet_forward.1} parent=1 // pred_fallthru
      _
    // Predicated region
    $region10: #{ucsgnet_forward.1} parent=1 // pred_check
      _
    $region11: #{ucsgnet_forward.1} parent=1 // pred_check_branch
      %37 = sbr.rel (0) target = $region13
    $region12: #{ucsgnet_forward.1} parent=1 // pred_region
      %39 = vsyncadd [#allocation4], 0
      %s40 = sshll.u32 %s2, 4
      %s41 = int_to_ptr.hbm [resolvable:$true] %s40
      %s42 = sshll.u32 [#allocation3], 4
      %s43 = int_to_ptr.vmem [resolvable:$true] %s42
      %48 = dma.hbm_to_vmem [thread:$0]  %s41, 8192, %s43, [#allocation4], 256, 256, 16
    $region13: #{ucsgnet_forward.1} parent=1 // pred_fallthru
      _
    // Predicated region
    $region14: #{ucsgnet_forward.1} parent=1 // pred_check
      _
    $region15: #{ucsgnet_forward.1} parent=1 // pred_check_branch
      %50 = sbr.rel (0) target = $region17
    $region16: #{ucsgnet_forward.1} parent=1 // pred_region
      _
    $region17: #{ucsgnet_forward.1} parent=1 // pred_fallthru
      _
    // Predicated region
    $region18: #{ucsgnet_forward.1} parent=1 // pred_check
      _
    $region19: #{ucsgnet_forward.1} parent=1 // pred_check_branch
      %52 = sbr.rel (0) target = $region21
    $region20: #{ucsgnet_forward.1} parent=1 // pred_region
      %54 = vsyncadd [#allocation6], 0
      %s55 = sshll.u32 %s4, 4
      %s56 = int_to_ptr.hbm [resolvable:$true] %s55
      %s57 = sshll.u32 [#allocation5], 4
      %s58 = int_to_ptr.vmem [resolvable:$true] %s57
      %63 = dma.hbm_to_vmem [thread:$0]  %s56, 8192, %s58, [#allocation6], 128, 128, 8
    $region21: #{ucsgnet_forward.1} parent=1 // pred_fallthru
      _
    // Predicated region
    $region22: #{ucsgnet_forward.1} parent=1 // pred_check
      _
    $region23: #{ucsgnet_forward.1} parent=1 // pred_check_branch
      %65 = sbr.rel (0) target = $region25
    $region24: #{ucsgnet_forward.1} parent=1 // pred_region
      _
    $region25: #{ucsgnet_forward.1} parent=1 // pred_fallthru
      _
    // Predicated region
    $region26: #{ucsgnet_forward.1} parent=1 // pred_check
      _
    $region27: #{ucsgnet_forward.1} parent=1 // pred_check_branch
      %67 = sbr.rel (0) target = $region29
    $region28: #{ucsgnet_forward.1} parent=1 // pred_region
      _
    $region29: #{ucsgnet_forward.1} parent=1 // pred_fallthru
      _
    // Predicated region
    $region30: #{ucsgnet_forward.1} parent=1 // pred_check
      _
    $region31: #{ucsgnet_forward.1} parent=1 // pred_check_branch
      %69 = sbr.rel (0) target = $region33
    $region32: #{ucsgnet_forward.1} parent=1 // pred_region
      _
    $region33: #{ucsgnet_forward.1} parent=1 // pred_fallthru
      _
    // Predicated region
    $region34: #{ucsgnet_forward.1} parent=1 // pred_check
      _
    $region35: #{ucsgnet_forward.1} parent=1 // pred_check_branch
      %71 = sbr.rel (0) target = $region37
    $region36: #{ucsgnet_forward.1} parent=1 // pred_region
      _
    $region37: #{ucsgnet_forward.1} parent=1 // pred_fallthru
      _
    // Predicated region
    $region38: #{ucsgnet_forward.1} parent=1 // pred_check
      _
    $region39: #{ucsgnet_forward.1} parent=1 // pred_check_branch
      %73 = sbr.rel (0) target = $region41
    $region40: #{ucsgnet_forward.1} parent=1 // pred_region
      _
    $region41: #{ucsgnet_forward.1} parent=1 // pred_fallthru
      _
    // Predicated region
    $region42: #{ucsgnet_forward.1} parent=1 // pred_check
      _
    $region43: #{ucsgnet_forward.1} parent=1 // pred_check_branch
      %75 = sbr.rel (0) target = $region45
    $region44: #{ucsgnet_forward.1} parent=1 // pred_region
      _
    $region45: #{ucsgnet_forward.1} parent=1 // pred_fallthru
      _
    // Predicated region
    $region46: #{ucsgnet_forward.1} parent=1 // pred_check
      _
    $region47: #{ucsgnet_forward.1} parent=1 // pred_check_branch
      %77 = sbr.rel (0) target = $region49
    $region48: #{ucsgnet_forward.1} parent=1 // pred_region
      _
    $region49: #{ucsgnet_forward.1} parent=1 // pred_fallthru
      _
    // Predicated region
    $region50: #{ucsgnet_forward.1} parent=1 // pred_check
      _
    $region51: #{ucsgnet_forward.1} parent=1 // pred_check_branch
      %79 = sbr.rel (0) target = $region53
    $region52: #{ucsgnet_forward.1} parent=1 // pred_region
      _
    $region53: #{ucsgnet_forward.1} parent=1 // pred_fallthru
      _
    // Predicated region
    $region54: #{ucsgnet_forward.1} parent=1 // pred_check
      _
    $region55: #{ucsgnet_forward.1} parent=1 // pred_check_branch
      %81 = sbr.rel (0) target = $region57
    $region56: #{ucsgnet_forward.1} parent=1 // pred_region
      _
    $region57: #{ucsgnet_forward.1} parent=1 // pred_fallthru
      _
    // Predicated region
    $region58: #{ucsgnet_forward.1} parent=1 // pred_check
      _
    $region59: #{ucsgnet_forward.1} parent=1 // pred_check_branch
      %83 = sbr.rel (0) target = $region61
    $region60: #{ucsgnet_forward.1} parent=1 // pred_region
      _
    $region61: #{ucsgnet_forward.1} parent=1 // pred_fallthru
      _
    // Predicated region
    $region62: #{ucsgnet_forward.1} parent=1 // pred_check
      _
    $region63: #{ucsgnet_forward.1} parent=1 // pred_check_branch
      %85 = sbr.rel (0) target = $region65
    $region64: #{ucsgnet_forward.1} parent=1 // pred_region
      _
    $region65: #{ucsgnet_forward.1} parent=1 // pred_fallthru
      _
    // Predicated region
    $region66: #{ucsgnet_forward.1} parent=1 // pred_check
      _
    $region67: #{ucsgnet_forward.1} parent=1 // pred_check_branch
      %87 = sbr.rel (0) target = $region69
    $region68: #{ucsgnet_forward.1} parent=1 // pred_region
      _
    $region69: #{ucsgnet_forward.1} parent=1 // pred_fallthru
      _
    // Predicated region
    $region70: #{ucsgnet_forward.1} parent=1 // pred_check
      _
    $region71: #{ucsgnet_forward.1} parent=1 // pred_check_branch
      %89 = sbr.rel (0) target = $region73
    $region72: #{ucsgnet_forward.1} parent=1 // pred_region
      _
    $region73: #{ucsgnet_forward.1} parent=1 // pred_fallthru
      _
    // Predicated region
    $region74: #{ucsgnet_forward.1} parent=1 // pred_check
      _
    $region75: #{ucsgnet_forward.1} parent=1 // pred_check_branch
      %91 = sbr.rel (0) target = $region77
    $region76: #{ucsgnet_forward.1} parent=1 // pred_region
      _
    $region77: #{ucsgnet_forward.1} parent=1 // pred_fallthru
      _
    // Predicated region
    $region78: #{ucsgnet_forward.1} parent=1 // pred_check
      _
    $region79: #{ucsgnet_forward.1} parent=1 // pred_check_branch
      %93 = sbr.rel (0) target = $region81
    $region80: #{ucsgnet_forward.1} parent=1 // pred_region
      _
    $region81: #{ucsgnet_forward.1} parent=1 // pred_fallthru
      _
    // Predicated region
    $region82: #{ucsgnet_forward.1} parent=1 // pred_check
      _
    $region83: #{ucsgnet_forward.1} parent=1 // pred_check_branch
      %95 = sbr.rel (0) target = $region85
    $region84: #{ucsgnet_forward.1} parent=1 // pred_region
      _
    $region85: #{ucsgnet_forward.1} parent=1 // pred_fallthru
      _
    // Predicated region
    $region86: #{ucsgnet_forward.1} parent=1 // pred_check
      _
    $region87: #{ucsgnet_forward.1} parent=1 // pred_check_branch
      %97 = sbr.rel (0) target = $region89
    $region88: #{ucsgnet_forward.1} parent=1 // pred_region
      _
    $region89: #{ucsgnet_forward.1} parent=1 // pred_fallthru
      _
    // Predicated region
    $region90: #{ucsgnet_forward.1} parent=1 // pred_check
      _
    $region91: #{ucsgnet_forward.1} parent=1 // pred_check_branch
      %99 = sbr.rel (0) target = $region93
    $region92: #{ucsgnet_forward.1} parent=1 // pred_region
      _
    $region93: #{ucsgnet_forward.1} parent=1 // pred_fallthru
      _
    // Predicated region
    $region94: #{ucsgnet_forward.1} parent=1 // pred_check
      _
    $region95: #{ucsgnet_forward.1} parent=1 // pred_check_branch
      %101 = sbr.rel (0) target = $region97
    $region96: #{ucsgnet_forward.1} parent=1 // pred_region
      _
    $region97: #{ucsgnet_forward.1} parent=1 // pred_fallthru
      _
    // Predicated region
    $region98: #{ucsgnet_forward.1} parent=1 // pred_check
      _
    $region99: #{ucsgnet_forward.1} parent=1 // pred_check_branch
      %103 = sbr.rel (0) target = $region101
    $region100: #{ucsgnet_forward.1} parent=1 // pred_region
      %105 = dma.done [#allocation4], 8192
    $region101: #{ucsgnet_forward.1} parent=1 // pred_fallthru
      _
    // Predicated region
    $region102: #{ucsgnet_forward.1} parent=1 // pred_check
      _
    $region103: #{ucsgnet_forward.1} parent=1 // pred_check_branch
      %107 = sbr.rel (0) target = $region105
    $region104: #{ucsgnet_forward.1} parent=1 // pred_region
      %109 = dma.done [#allocation6], 8192
    $region105: #{ucsgnet_forward.1} parent=1 // pred_fallthru
      _
    %v110 = vld [vmem:[%s0] sm:$0xf]
    %112 = vst [vmem:[#allocation1] ss:$4 sm:$0xff] %v110
    %v113 = vld.sshfl [vmem:[#allocation1] sm:$0xff pattern:$0x73625140]
    %v114 = vld.sshfl [vmem:[#allocation1 + $0x8] sm:$0xff pattern:$0x73625140]
    %v117 = vpack.c.bf16 %v113, %v113
    %v118 = vpack.c.bf16 %v114, %v114
    %v119 = vld [vmem:[#allocation3] sm:$0xff]
    %v120 = vld [vmem:[#allocation3 + $0x8] sm:$0xff]
    %v121 = vld [vmem:[#allocation3 + $0x10] sm:$0xff]
    %v122 = vld [vmem:[#allocation3 + $0x18] sm:$0xff]
    %v123 = vld [vmem:[#allocation3 + $0x20] sm:$0xff]
    %v124 = vld [vmem:[#allocation3 + $0x28] sm:$0xff]
    %v125 = vld [vmem:[#allocation3 + $0x30] sm:$0xff]
    %v126 = vld [vmem:[#allocation3 + $0x38] sm:$0xff]
    %v127 = vld [vmem:[#allocation3 + $0x40] sm:$0xff]
    %v128 = vld [vmem:[#allocation3 + $0x48] sm:$0xff]
    %v129 = vld [vmem:[#allocation3 + $0x50] sm:$0xff]
    %v130 = vld [vmem:[#allocation3 + $0x58] sm:$0xff]
    %v131 = vld [vmem:[#allocation3 + $0x60] sm:$0xff]
    %v132 = vld [vmem:[#allocation3 + $0x68] sm:$0xff]
    %v133 = vld [vmem:[#allocation3 + $0x70] sm:$0xff]
    %v134 = vld [vmem:[#allocation3 + $0x78] sm:$0xff]
    %v135 = vld [vmem:[#allocation3 + $0x80] sm:$0xff]
    %v136 = vld [vmem:[#allocation3 + $0x88] sm:$0xff]
    %v137 = vld [vmem:[#allocation3 + $0x90] sm:$0xff]
    %v138 = vld [vmem:[#allocation3 + $0x98] sm:$0xff]
    %v139 = vld [vmem:[#allocation3 + $0xa0] sm:$0xff]
    %v140 = vld [vmem:[#allocation3 + $0xa8] sm:$0xff]
    %v141 = vld [vmem:[#allocation3 + $0xb0] sm:$0xff]
    %v142 = vld [vmem:[#allocation3 + $0xb8] sm:$0xff]
    %v143 = vld [vmem:[#allocation3 + $0xc0] sm:$0xff]
    %v144 = vld [vmem:[#allocation3 + $0xc8] sm:$0xff]
    %v145 = vld [vmem:[#allocation3 + $0xd0] sm:$0xff]
    %v146 = vld [vmem:[#allocation3 + $0xd8] sm:$0xff]
    %v147 = vld [vmem:[#allocation3 + $0xe0] sm:$0xff]
    %v148 = vld [vmem:[#allocation3 + $0xe8] sm:$0xff]
    %v149 = vld [vmem:[#allocation3 + $0xf0] sm:$0xff]
    %v150 = vld [vmem:[#allocation3 + $0xf8] sm:$0xff]
    %v151 = vld [vmem:[#allocation3 + $0x100] sm:$0xff]
    %v152 = vld [vmem:[#allocation3 + $0x108] sm:$0xff]
    %v153 = vld [vmem:[#allocation3 + $0x110] sm:$0xff]
    %v154 = vld [vmem:[#allocation3 + $0x118] sm:$0xff]
    %v155 = vld [vmem:[#allocation3 + $0x120] sm:$0xff]
    %v156 = vld [vmem:[#allocation3 + $0x128] sm:$0xff]
    %v157 = vld [vmem:[#allocation3 + $0x130] sm:$0xff]
    %v158 = vld [vmem:[#allocation3 + $0x138] sm:$0xff]
    %v159 = vld [vmem:[#allocation3 + $0x140] sm:$0xff]
    %v160 = vld [vmem:[#allocation3 + $0x148] sm:$0xff]
    %v161 = vld [vmem:[#allocation3 + $0x150] sm:$0xff]
    %v162 = vld [vmem:[#allocation3 + $0x158] sm:$0xff]
    %v163 = vld [vmem:[#allocation3 + $0x160] sm:$0xff]
    %v164 = vld [vmem:[#allocation3 + $0x168] sm:$0xff]
    %v165 = vld [vmem:[#allocation3 + $0x170] sm:$0xff]
    %v166 = vld [vmem:[#allocation3 + $0x178] sm:$0xff]
    %v167 = vld [vmem:[#allocation3 + $0x180] sm:$0xff]
    %v168 = vld [vmem:[#allocation3 + $0x188] sm:$0xff]
    %v169 = vld [vmem:[#allocation3 + $0x190] sm:$0xff]
    %v170 = vld [vmem:[#allocation3 + $0x198] sm:$0xff]
    %v171 = vld [vmem:[#allocation3 + $0x1a0] sm:$0xff]
    %v172 = vld [vmem:[#allocation3 + $0x1a8] sm:$0xff]
    %v173 = vld [vmem:[#allocation3 + $0x1b0] sm:$0xff]
    %v174 = vld [vmem:[#allocation3 + $0x1b8] sm:$0xff]
    %v175 = vld [vmem:[#allocation3 + $0x1c0] sm:$0xff]
    %v176 = vld [vmem:[#allocation3 + $0x1c8] sm:$0xff]
    %v177 = vld [vmem:[#allocation3 + $0x1d0] sm:$0xff]
    %v178 = vld [vmem:[#allocation3 + $0x1d8] sm:$0xff]
    %v179 = vld [vmem:[#allocation3 + $0x1e0] sm:$0xff]
    %v180 = vld [vmem:[#allocation3 + $0x1e8] sm:$0xff]
    %v181 = vld [vmem:[#allocation3 + $0x1f0] sm:$0xff]
    %v182 = vld [vmem:[#allocation3 + $0x1f8] sm:$0xff]
    %v183 = vld [vmem:[%s3] sm:$0xf]
    %v185 = vperm.slane %v183, 0
    %v186 = vperm.slane %v183, 1
    %v187 = vperm.slane %v183, 2
    %v188 = vperm.slane %v183, 3
    %v257 = vunpack.c.l.b16 %v119
    %v258 = vunpack.c.h.b16 %v119
    %v259 = vunpack.c.l.b16 %v120
    %v260 = vunpack.c.h.b16 %v120
    %v261 = vunpack.c.l.b16 %v121
    %v262 = vunpack.c.h.b16 %v121
    %v263 = vunpack.c.l.b16 %v122
    %v264 = vunpack.c.h.b16 %v122
    %v265 = vunpack.c.l.b16 %v123
    %v266 = vunpack.c.h.b16 %v123
    %v267 = vunpack.c.l.b16 %v124
    %v268 = vunpack.c.h.b16 %v124
    %v269 = vunpack.c.l.b16 %v125
    %v270 = vunpack.c.h.b16 %v125
    %v271 = vunpack.c.l.b16 %v126
    %v272 = vunpack.c.h.b16 %v126
    %v273 = vunpack.c.l.b16 %v127
    %v274 = vunpack.c.h.b16 %v127
    %v275 = vunpack.c.l.b16 %v128
    %v276 = vunpack.c.h.b16 %v128
    %v277 = vunpack.c.l.b16 %v129
    %v278 = vunpack.c.h.b16 %v129
    %v279 = vunpack.c.l.b16 %v130
    %v280 = vunpack.c.h.b16 %v130
    %v281 = vunpack.c.l.b16 %v131
    %v282 = vunpack.c.h.b16 %v131
    %v283 = vunpack.c.l.b16 %v132
    %v284 = vunpack.c.h.b16 %v132
    %v285 = vunpack.c.l.b16 %v133
    %v286 = vunpack.c.h.b16 %v133
    %v287 = vunpack.c.l.b16 %v134
    %v288 = vunpack.c.h.b16 %v134
    %v289 = vunpack.c.l.b16 %v135
    %v290 = vunpack.c.h.b16 %v135
    %v291 = vunpack.c.l.b16 %v136
    %v292 = vunpack.c.h.b16 %v136
    %v293 = vunpack.c.l.b16 %v137
    %v294 = vunpack.c.h.b16 %v137
    %v295 = vunpack.c.l.b16 %v138
    %v296 = vunpack.c.h.b16 %v138
    %v297 = vunpack.c.l.b16 %v139
    %v298 = vunpack.c.h.b16 %v139
    %v299 = vunpack.c.l.b16 %v140
    %v300 = vunpack.c.h.b16 %v140
    %v301 = vunpack.c.l.b16 %v141
    %v302 = vunpack.c.h.b16 %v141
    %v303 = vunpack.c.l.b16 %v142
    %v304 = vunpack.c.h.b16 %v142
    %v305 = vunpack.c.l.b16 %v143
    %v306 = vunpack.c.h.b16 %v143
    %v307 = vunpack.c.l.b16 %v144
    %v308 = vunpack.c.h.b16 %v144
    %v309 = vunpack.c.l.b16 %v145
    %v310 = vunpack.c.h.b16 %v145
    %v311 = vunpack.c.l.b16 %v146
    %v312 = vunpack.c.h.b16 %v146
    %v313 = vunpack.c.l.b16 %v147
    %v314 = vunpack.c.h.b16 %v147
    %v315 = vunpack.c.l.b16 %v148
    %v316 = vunpack.c.h.b16 %v148
    %v317 = vunpack.c.l.b16 %v149
    %v318 = vunpack.c.h.b16 %v149
    %v319 = vunpack.c.l.b16 %v150
    %v320 = vunpack.c.h.b16 %v150
    %v321 = vunpack.c.l.b16 %v151
    %v322 = vunpack.c.h.b16 %v151
    %v323 = vunpack.c.l.b16 %v152
    %v324 = vunpack.c.h.b16 %v152
    %v325 = vunpack.c.l.b16 %v153
    %v326 = vunpack.c.h.b16 %v153
    %v327 = vunpack.c.l.b16 %v154
    %v328 = vunpack.c.h.b16 %v154
    %v329 = vunpack.c.l.b16 %v155
    %v330 = vunpack.c.h.b16 %v155
    %v331 = vunpack.c.l.b16 %v156
    %v332 = vunpack.c.h.b16 %v156
    %v333 = vunpack.c.l.b16 %v157
    %v334 = vunpack.c.h.b16 %v157
    %v335 = vunpack.c.l.b16 %v158
    %v336 = vunpack.c.h.b16 %v158
    %v337 = vunpack.c.l.b16 %v159
    %v338 = vunpack.c.h.b16 %v159
    %v339 = vunpack.c.l.b16 %v160
    %v340 = vunpack.c.h.b16 %v160
    %v341 = vunpack.c.l.b16 %v161
    %v342 = vunpack.c.h.b16 %v161
    %v343 = vunpack.c.l.b16 %v162
    %v344 = vunpack.c.h.b16 %v162
    %v345 = vunpack.c.l.b16 %v163
    %v346 = vunpack.c.h.b16 %v163
    %v347 = vunpack.c.l.b16 %v164
    %v348 = vunpack.c.h.b16 %v164
    %v349 = vunpack.c.l.b16 %v165
    %v350 = vunpack.c.h.b16 %v165
    %v351 = vunpack.c.l.b16 %v166
    %v352 = vunpack.c.h.b16 %v166
    %v353 = vunpack.c.l.b16 %v167
    %v354 = vunpack.c.h.b16 %v167
    %v355 = vunpack.c.l.b16 %v168
    %v356 = vunpack.c.h.b16 %v168
    %v357 = vunpack.c.l.b16 %v169
    %v358 = vunpack.c.h.b16 %v169
    %v359 = vunpack.c.l.b16 %v170
    %v360 = vunpack.c.h.b16 %v170
    %v361 = vunpack.c.l.b16 %v171
    %v362 = vunpack.c.h.b16 %v171
    %v363 = vunpack.c.l.b16 %v172
    %v364 = vunpack.c.h.b16 %v172
    %v365 = vunpack.c.l.b16 %v173
    %v366 = vunpack.c.h.b16 %v173
    %v367 = vunpack.c.l.b16 %v174
    %v368 = vunpack.c.h.b16 %v174
    %v369 = vunpack.c.l.b16 %v175
    %v370 = vunpack.c.h.b16 %v175
    %v371 = vunpack.c.l.b16 %v176
    %v372 = vunpack.c.h.b16 %v176
    %v373 = vunpack.c.l.b16 %v177
    %v374 = vunpack.c.h.b16 %v177
    %v375 = vunpack.c.l.b16 %v178
    %v376 = vunpack.c.h.b16 %v178
    %v377 = vunpack.c.l.b16 %v179
    %v378 = vunpack.c.h.b16 %v179
    %v379 = vunpack.c.l.b16 %v180
    %v380 = vunpack.c.h.b16 %v180
    %v381 = vunpack.c.l.b16 %v181
    %v382 = vunpack.c.h.b16 %v181
    %v383 = vunpack.c.l.b16 %v182
    %v384 = vunpack.c.h.b16 %v182
    %v385 = vpack.c.b16 %v261, %v257
    %v386 = vpack.c.b16 %v262, %v258
    %v387 = vpack.c.b16 %v263, %v259
    %v388 = vpack.c.b16 %v264, %v260
    %v389 = vpack.c.b16 %v269, %v265
    %v390 = vpack.c.b16 %v270, %v266
    %v391 = vpack.c.b16 %v271, %v267
    %v392 = vpack.c.b16 %v272, %v268
    %v393 = vpack.c.b16 %v277, %v273
    %v394 = vpack.c.b16 %v278, %v274
    %v395 = vpack.c.b16 %v279, %v275
    %v396 = vpack.c.b16 %v280, %v276
    %v397 = vpack.c.b16 %v285, %v281
    %v398 = vpack.c.b16 %v286, %v282
    %v399 = vpack.c.b16 %v287, %v283
    %v400 = vpack.c.b16 %v288, %v284
    %v401 = vpack.c.b16 %v293, %v289
    %v402 = vpack.c.b16 %v294, %v290
    %v403 = vpack.c.b16 %v295, %v291
    %v404 = vpack.c.b16 %v296, %v292
    %v405 = vpack.c.b16 %v301, %v297
    %v406 = vpack.c.b16 %v302, %v298
    %v407 = vpack.c.b16 %v303, %v299
    %v408 = vpack.c.b16 %v304, %v300
    %v409 = vpack.c.b16 %v309, %v305
    %v410 = vpack.c.b16 %v310, %v306
    %v411 = vpack.c.b16 %v311, %v307
    %v412 = vpack.c.b16 %v312, %v308
    %v413 = vpack.c.b16 %v317, %v313
    %v414 = vpack.c.b16 %v318, %v314
    %v415 = vpack.c.b16 %v319, %v315
    %v416 = vpack.c.b16 %v320, %v316
    %v417 = vpack.c.b16 %v325, %v321
    %v418 = vpack.c.b16 %v326, %v322
    %v419 = vpack.c.b16 %v327, %v323
    %v420 = vpack.c.b16 %v328, %v324
    %v421 = vpack.c.b16 %v333, %v329
    %v422 = vpack.c.b16 %v334, %v330
    %v423 = vpack.c.b16 %v335, %v331
    %v424 = vpack.c.b16 %v336, %v332
    %v425 = vpack.c.b16 %v341, %v337
    %v426 = vpack.c.b16 %v342, %v338
    %v427 = vpack.c.b16 %v343, %v339
    %v428 = vpack.c.b16 %v344, %v340
    %v429 = vpack.c.b16 %v349, %v345
    %v430 = vpack.c.b16 %v350, %v346
    %v431 = vpack.c.b16 %v351, %v347
    %v432 = vpack.c.b16 %v352, %v348
    %v433 = vpack.c.b16 %v357, %v353
    %v434 = vpack.c.b16 %v358, %v354
    %v435 = vpack.c.b16 %v359, %v355
    %v436 = vpack.c.b16 %v360, %v356
    %v437 = vpack.c.b16 %v365, %v361
    %v438 = vpack.c.b16 %v366, %v362
    %v439 = vpack.c.b16 %v367, %v363
    %v440 = vpack.c.b16 %v368, %v364
    %v441 = vpack.c.b16 %v373, %v369
    %v442 = vpack.c.b16 %v374, %v370
    %v443 = vpack.c.b16 %v375, %v371
    %v444 = vpack.c.b16 %v376, %v372
    %v445 = vpack.c.b16 %v381, %v377
    %v446 = vpack.c.b16 %v382, %v378
    %v447 = vpack.c.b16 %v383, %v379
    %v448 = vpack.c.b16 %v384, %v380
    %513 = vmatpush.bf16.msra.mxu0 %v413
    %514 = vmatpush.bf16.msra.mxu0 %v409
    %515 = vmatpush.bf16.msra.mxu0 %v405
    %516 = vmatpush.bf16.msra.mxu0 %v401
    %517 = vmatpush.bf16.msra.mxu0 %v397
    %518 = vmatpush.bf16.msra.mxu0 %v393
    %519 = vmatpush.bf16.msra.mxu0 %v389
    %520 = vmatpush.bf16.msra.mxu0 %v385
    %521 = vmatmul.bf16.gmra.mxu0 %v117
    %v522 = vpop.f32.mrf.mxu0
    %v523 = vadd.f32 %v185, %v522
    %v524 = vpop.f32.mrf.mxu0
    %525 = vdwg.mxu0
    %526 = vmatpush.bf16.msra.mxu0 %v445
    %527 = vmatpush.bf16.msra.mxu0 %v441
    %528 = vmatpush.bf16.msra.mxu0 %v437
    %529 = vmatpush.bf16.msra.mxu0 %v433
    %530 = vmatpush.bf16.msra.mxu0 %v429
    %531 = vmatpush.bf16.msra.mxu0 %v425
    %532 = vmatpush.bf16.msra.mxu0 %v421
    %533 = vmatpush.bf16.msra.mxu0 %v417
    %534 = vmatmul.bf16.gmra.mxu0 %v118
    %v535 = vpop.f32.mrf.mxu0
    %v536 = vadd.f32 %v523, %v535
    %v537 = vpop.f32.mrf.mxu0
    %538 = vdwg.mxu0
    %539 = vmatpush.bf16.msra.mxu0 %v414
    %540 = vmatpush.bf16.msra.mxu0 %v410
    %541 = vmatpush.bf16.msra.mxu0 %v406
    %542 = vmatpush.bf16.msra.mxu0 %v402
    %543 = vmatpush.bf16.msra.mxu0 %v398
    %544 = vmatpush.bf16.msra.mxu0 %v394
    %545 = vmatpush.bf16.msra.mxu0 %v390
    %546 = vmatpush.bf16.msra.mxu0 %v386
    %547 = vmatmul.bf16.gmra.mxu0 %v117
    %v548 = vpop.f32.mrf.mxu0
    %v549 = vadd.f32 %v186, %v548
    %v550 = vpop.f32.mrf.mxu0
    %551 = vdwg.mxu0
    %552 = vmatpush.bf16.msra.mxu0 %v446
    %553 = vmatpush.bf16.msra.mxu0 %v442
    %554 = vmatpush.bf16.msra.mxu0 %v438
    %555 = vmatpush.bf16.msra.mxu0 %v434
    %556 = vmatpush.bf16.msra.mxu0 %v430
    %557 = vmatpush.bf16.msra.mxu0 %v426
    %558 = vmatpush.bf16.msra.mxu0 %v422
    %559 = vmatpush.bf16.msra.mxu0 %v418
    %560 = vmatmul.bf16.gmra.mxu0 %v118
    %v561 = vpop.f32.mrf.mxu0
    %v562 = vadd.f32 %v549, %v561
    %v563 = vpop.f32.mrf.mxu0
    %564 = vdwg.mxu0
    %565 = vmatpush.bf16.msra.mxu0 %v415
    %566 = vmatpush.bf16.msra.mxu0 %v411
    %567 = vmatpush.bf16.msra.mxu0 %v407
    %568 = vmatpush.bf16.msra.mxu0 %v403
    %569 = vmatpush.bf16.msra.mxu0 %v399
    %570 = vmatpush.bf16.msra.mxu0 %v395
    %571 = vmatpush.bf16.msra.mxu0 %v391
    %572 = vmatpush.bf16.msra.mxu0 %v387
    %573 = vmatmul.bf16.gmra.mxu0 %v117
    %v574 = vpop.f32.mrf.mxu0
    %v575 = vadd.f32 %v187, %v574
    %v576 = vpop.f32.mrf.mxu0
    %577 = vdwg.mxu0
    %578 = vmatpush.bf16.msra.mxu0 %v447
    %579 = vmatpush.bf16.msra.mxu0 %v443
    %580 = vmatpush.bf16.msra.mxu0 %v439
    %581 = vmatpush.bf16.msra.mxu0 %v435
    %582 = vmatpush.bf16.msra.mxu0 %v431
    %583 = vmatpush.bf16.msra.mxu0 %v427
    %584 = vmatpush.bf16.msra.mxu0 %v423
    %585 = vmatpush.bf16.msra.mxu0 %v419
    %586 = vmatmul.bf16.gmra.mxu0 %v118
    %v587 = vpop.f32.mrf.mxu0
    %v588 = vadd.f32 %v575, %v587
    %v589 = vpop.f32.mrf.mxu0
    %590 = vdwg.mxu0
    %591 = vmatpush.bf16.msra.mxu0 %v416
    %592 = vmatpush.bf16.msra.mxu0 %v412
    %593 = vmatpush.bf16.msra.mxu0 %v408
    %594 = vmatpush.bf16.msra.mxu0 %v404
    %595 = vmatpush.bf16.msra.mxu0 %v400
    %596 = vmatpush.bf16.msra.mxu0 %v396
    %597 = vmatpush.bf16.msra.mxu0 %v392
    %598 = vmatpush.bf16.msra.mxu0 %v388
    %599 = vmatmul.bf16.gmra.mxu0 %v117
    %v600 = vpop.f32.mrf.mxu0
    %v601 = vadd.f32 %v188, %v600
    %v602 = vpop.f32.mrf.mxu0
    %603 = vdwg.mxu0
    %604 = vmatpush.bf16.msra.mxu0 %v448
    %605 = vmatpush.bf16.msra.mxu0 %v444
    %606 = vmatpush.bf16.msra.mxu0 %v440
    %607 = vmatpush.bf16.msra.mxu0 %v436
    %608 = vmatpush.bf16.msra.mxu0 %v432
    %609 = vmatpush.bf16.msra.mxu0 %v428
    %610 = vmatpush.bf16.msra.mxu0 %v424
    %611 = vmatpush.bf16.msra.mxu0 %v420
    %612 = vmatmul.bf16.gmra.mxu0 %v118
    %v613 = vpop.f32.mrf.mxu0
    %v614 = vadd.f32 %v601, %v613
    %v615 = vpop.f32.mrf.mxu0
    %616 = vdwg.mxu0
    %vm617 = vcmp.gt.f32.partialorder %v536, 0.0
    %vm618 = vcmp.gt.f32.partialorder %v562, 0.0
    %vm619 = vcmp.gt.f32.partialorder %v588, 0.0
    %vm620 = vcmp.gt.f32.partialorder %v614, 0.0
    %v621 = vmul.f32 %v536, 0.2
    %v622 = vmul.f32 %v562, 0.2
    %v623 = vmul.f32 %v588, 0.2
    %v624 = vmul.f32 %v614, 0.2
    %v625 = vsel %vm617, %v536, %v621
    %v626 = vsel %vm618, %v562, %v622
    %v627 = vsel %vm619, %v588, %v623
    %v628 = vsel %vm620, %v614, %v624
    %v629 = vpack.c.bf16 %v625, %v625
    %v630 = vpack.c.bf16 %v626, %v626
    %v631 = vpack.c.bf16 %v627, %v627
    %v632 = vpack.c.bf16 %v628, %v628
    %v633 = vld [vmem:[#allocation5] sm:$0xff]
    %v634 = vld [vmem:[#allocation5 + $0x8] sm:$0xff]
    %v635 = vld [vmem:[#allocation5 + $0x10] sm:$0xff]
    %v636 = vld [vmem:[#allocation5 + $0x18] sm:$0xff]
    %v637 = vld [vmem:[#allocation5 + $0x20] sm:$0xff]
    %v638 = vld [vmem:[#allocation5 + $0x28] sm:$0xff]
    %v639 = vld [vmem:[#allocation5 + $0x30] sm:$0xff]
    %v640 = vld [vmem:[#allocation5 + $0x38] sm:$0xff]
    %v641 = vld [vmem:[#allocation5 + $0x40] sm:$0xff]
    %v642 = vld [vmem:[#allocation5 + $0x48] sm:$0xff]
    %v643 = vld [vmem:[#allocation5 + $0x50] sm:$0xff]
    %v644 = vld [vmem:[#allocation5 + $0x58] sm:$0xff]
    %v645 = vld [vmem:[#allocation5 + $0x60] sm:$0xff]
    %v646 = vld [vmem:[#allocation5 + $0x68] sm:$0xff]
    %v647 = vld [vmem:[#allocation5 + $0x70] sm:$0xff]
    %v648 = vld [vmem:[#allocation5 + $0x78] sm:$0xff]
    %v649 = vld [vmem:[#allocation5 + $0x80] sm:$0xff]
    %v650 = vld [vmem:[#allocation5 + $0x88] sm:$0xff]
    %v651 = vld [vmem:[#allocation5 + $0x90] sm:$0xff]
    %v652 = vld [vmem:[#allocation5 + $0x98] sm:$0xff]
    %v653 = vld [vmem:[#allocation5 + $0xa0] sm:$0xff]
    %v654 = vld [vmem:[#allocation5 + $0xa8] sm:$0xff]
    %v655 = vld [vmem:[#allocation5 + $0xb0] sm:$0xff]
    %v656 = vld [vmem:[#allocation5 + $0xb8] sm:$0xff]
    %v657 = vld [vmem:[#allocation5 + $0xc0] sm:$0xff]
    %v658 = vld [vmem:[#allocation5 + $0xc8] sm:$0xff]
    %v659 = vld [vmem:[#allocation5 + $0xd0] sm:$0xff]
    %v660 = vld [vmem:[#allocation5 + $0xd8] sm:$0xff]
    %v661 = vld [vmem:[#allocation5 + $0xe0] sm:$0xff]
    %v662 = vld [vmem:[#allocation5 + $0xe8] sm:$0xff]
    %v663 = vld [vmem:[#allocation5 + $0xf0] sm:$0xff]
    %v664 = vld [vmem:[#allocation5 + $0xf8] sm:$0xff]
    %v665 = vld [vmem:[#allocation5 + $0x100] sm:$0xff]
    %v666 = vld [vmem:[#allocation5 + $0x108] sm:$0xff]
    %v667 = vld [vmem:[#allocation5 + $0x110] sm:$0xff]
    %v668 = vld [vmem:[#allocation5 + $0x118] sm:$0xff]
    %v669 = vld [vmem:[#allocation5 + $0x120] sm:$0xff]
    %v670 = vld [vmem:[#allocation5 + $0x128] sm:$0xff]
    %v671 = vld [vmem:[#allocation5 + $0x130] sm:$0xff]
    %v672 = vld [vmem:[#allocation5 + $0x138] sm:$0xff]
    %v673 = vld [vmem:[#allocation5 + $0x140] sm:$0xff]
    %v674 = vld [vmem:[#allocation5 + $0x148] sm:$0xff]
    %v675 = vld [vmem:[#allocation5 + $0x150] sm:$0xff]
    %v676 = vld [vmem:[#allocation5 + $0x158] sm:$0xff]
    %v677 = vld [vmem:[#allocation5 + $0x160] sm:$0xff]
    %v678 = vld [vmem:[#allocation5 + $0x168] sm:$0xff]
    %v679 = vld [vmem:[#allocation5 + $0x170] sm:$0xff]
    %v680 = vld [vmem:[#allocation5 + $0x178] sm:$0xff]
    %v681 = vld [vmem:[#allocation5 + $0x180] sm:$0xff]
    %v682 = vld [vmem:[#allocation5 + $0x188] sm:$0xff]
    %v683 = vld [vmem:[#allocation5 + $0x190] sm:$0xff]
    %v684 = vld [vmem:[#allocation5 + $0x198] sm:$0xff]
    %v685 = vld [vmem:[#allocation5 + $0x1a0] sm:$0xff]
    %v686 = vld [vmem:[#allocation5 + $0x1a8] sm:$0xff]
    %v687 = vld [vmem:[#allocation5 + $0x1b0] sm:$0xff]
    %v688 = vld [vmem:[#allocation5 + $0x1b8] sm:$0xff]
    %v689 = vld [vmem:[#allocation5 + $0x1c0] sm:$0xff]
    %v690 = vld [vmem:[#allocation5 + $0x1c8] sm:$0xff]
    %v691 = vld [vmem:[#allocation5 + $0x1d0] sm:$0xff]
    %v692 = vld [vmem:[#allocation5 + $0x1d8] sm:$0xff]
    %v693 = vld [vmem:[#allocation5 + $0x1e0] sm:$0xff]
    %v694 = vld [vmem:[#allocation5 + $0x1e8] sm:$0xff]
    %v695 = vld [vmem:[#allocation5 + $0x1f0] sm:$0xff]
    %v696 = vld [vmem:[#allocation5 + $0x1f8] sm:$0xff]
    %v697 = vld [vmem:[%s5] sm:$0x3]
    %v699 = vperm.slane %v697, 0
    %v700 = vperm.slane %v697, 1
    %v767 = vunpack.c.l.b16 %v633
    %v768 = vunpack.c.h.b16 %v633
    %v769 = vunpack.c.l.b16 %v634
    %v770 = vunpack.c.h.b16 %v634
    %v771 = vunpack.c.l.b16 %v635
    %v772 = vunpack.c.h.b16 %v635
    %v773 = vunpack.c.l.b16 %v636
    %v774 = vunpack.c.h.b16 %v636
    %v775 = vunpack.c.l.b16 %v637
    %v776 = vunpack.c.h.b16 %v637
    %v777 = vunpack.c.l.b16 %v638
    %v778 = vunpack.c.h.b16 %v638
    %v779 = vunpack.c.l.b16 %v639
    %v780 = vunpack.c.h.b16 %v639
    %v781 = vunpack.c.l.b16 %v640
    %v782 = vunpack.c.h.b16 %v640
    %v783 = vunpack.c.l.b16 %v641
    %v784 = vunpack.c.h.b16 %v641
    %v785 = vunpack.c.l.b16 %v642
    %v786 = vunpack.c.h.b16 %v642
    %v787 = vunpack.c.l.b16 %v643
    %v788 = vunpack.c.h.b16 %v643
    %v789 = vunpack.c.l.b16 %v644
    %v790 = vunpack.c.h.b16 %v644
    %v791 = vunpack.c.l.b16 %v645
    %v792 = vunpack.c.h.b16 %v645
    %v793 = vunpack.c.l.b16 %v646
    %v794 = vunpack.c.h.b16 %v646
    %v795 = vunpack.c.l.b16 %v647
    %v796 = vunpack.c.h.b16 %v647
    %v797 = vunpack.c.l.b16 %v648
    %v798 = vunpack.c.h.b16 %v648
    %v799 = vunpack.c.l.b16 %v649
    %v800 = vunpack.c.h.b16 %v649
    %v801 = vunpack.c.l.b16 %v650
    %v802 = vunpack.c.h.b16 %v650
    %v803 = vunpack.c.l.b16 %v651
    %v804 = vunpack.c.h.b16 %v651
    %v805 = vunpack.c.l.b16 %v652
    %v806 = vunpack.c.h.b16 %v652
    %v807 = vunpack.c.l.b16 %v653
    %v808 = vunpack.c.h.b16 %v653
    %v809 = vunpack.c.l.b16 %v654
    %v810 = vunpack.c.h.b16 %v654
    %v811 = vunpack.c.l.b16 %v655
    %v812 = vunpack.c.h.b16 %v655
    %v813 = vunpack.c.l.b16 %v656
    %v814 = vunpack.c.h.b16 %v656
    %v815 = vunpack.c.l.b16 %v657
    %v816 = vunpack.c.h.b16 %v657
    %v817 = vunpack.c.l.b16 %v658
    %v818 = vunpack.c.h.b16 %v658
    %v819 = vunpack.c.l.b16 %v659
    %v820 = vunpack.c.h.b16 %v659
    %v821 = vunpack.c.l.b16 %v660
    %v822 = vunpack.c.h.b16 %v660
    %v823 = vunpack.c.l.b16 %v661
    %v824 = vunpack.c.h.b16 %v661
    %v825 = vunpack.c.l.b16 %v662
    %v826 = vunpack.c.h.b16 %v662
    %v827 = vunpack.c.l.b16 %v663
    %v828 = vunpack.c.h.b16 %v663
    %v829 = vunpack.c.l.b16 %v664
    %v830 = vunpack.c.h.b16 %v664
    %v831 = vunpack.c.l.b16 %v665
    %v832 = vunpack.c.h.b16 %v665
    %v833 = vunpack.c.l.b16 %v666
    %v834 = vunpack.c.h.b16 %v666
    %v835 = vunpack.c.l.b16 %v667
    %v836 = vunpack.c.h.b16 %v667
    %v837 = vunpack.c.l.b16 %v668
    %v838 = vunpack.c.h.b16 %v668
    %v839 = vunpack.c.l.b16 %v669
    %v840 = vunpack.c.h.b16 %v669
    %v841 = vunpack.c.l.b16 %v670
    %v842 = vunpack.c.h.b16 %v670
    %v843 = vunpack.c.l.b16 %v671
    %v844 = vunpack.c.h.b16 %v671
    %v845 = vunpack.c.l.b16 %v672
    %v846 = vunpack.c.h.b16 %v672
    %v847 = vunpack.c.l.b16 %v673
    %v848 = vunpack.c.h.b16 %v673
    %v849 = vunpack.c.l.b16 %v674
    %v850 = vunpack.c.h.b16 %v674
    %v851 = vunpack.c.l.b16 %v675
    %v852 = vunpack.c.h.b16 %v675
    %v853 = vunpack.c.l.b16 %v676
    %v854 = vunpack.c.h.b16 %v676
    %v855 = vunpack.c.l.b16 %v677
    %v856 = vunpack.c.h.b16 %v677
    %v857 = vunpack.c.l.b16 %v678
    %v858 = vunpack.c.h.b16 %v678
    %v859 = vunpack.c.l.b16 %v679
    %v860 = vunpack.c.h.b16 %v679
    %v861 = vunpack.c.l.b16 %v680
    %v862 = vunpack.c.h.b16 %v680
    %v863 = vunpack.c.l.b16 %v681
    %v864 = vunpack.c.h.b16 %v681
    %v865 = vunpack.c.l.b16 %v682
    %v866 = vunpack.c.h.b16 %v682
    %v867 = vunpack.c.l.b16 %v683
    %v868 = vunpack.c.h.b16 %v683
    %v869 = vunpack.c.l.b16 %v684
    %v870 = vunpack.c.h.b16 %v684
    %v871 = vunpack.c.l.b16 %v685
    %v872 = vunpack.c.h.b16 %v685
    %v873 = vunpack.c.l.b16 %v686
    %v874 = vunpack.c.h.b16 %v686
    %v875 = vunpack.c.l.b16 %v687
    %v876 = vunpack.c.h.b16 %v687
    %v877 = vunpack.c.l.b16 %v688
    %v878 = vunpack.c.h.b16 %v688
    %v879 = vunpack.c.l.b16 %v689
    %v880 = vunpack.c.h.b16 %v689
    %v881 = vunpack.c.l.b16 %v690
    %v882 = vunpack.c.h.b16 %v690
    %v883 = vunpack.c.l.b16 %v691
    %v884 = vunpack.c.h.b16 %v691
    %v885 = vunpack.c.l.b16 %v692
    %v886 = vunpack.c.h.b16 %v692
    %v887 = vunpack.c.l.b16 %v693
    %v888 = vunpack.c.h.b16 %v693
    %v889 = vunpack.c.l.b16 %v694
    %v890 = vunpack.c.h.b16 %v694
    %v891 = vunpack.c.l.b16 %v695
    %v892 = vunpack.c.h.b16 %v695
    %v893 = vunpack.c.l.b16 %v696
    %v894 = vunpack.c.h.b16 %v696
    %v895 = vpack.c.b16 %v769, %v767
    %v896 = vpack.c.b16 %v770, %v768
    %v897 = vpack.c.b16 %v773, %v771
    %v898 = vpack.c.b16 %v774, %v772
    %v899 = vpack.c.b16 %v777, %v775
    %v900 = vpack.c.b16 %v778, %v776
    %v901 = vpack.c.b16 %v781, %v779
    %v902 = vpack.c.b16 %v782, %v780
    %v903 = vpack.c.b16 %v785, %v783
    %v904 = vpack.c.b16 %v786, %v784
    %v905 = vpack.c.b16 %v789, %v787
    %v906 = vpack.c.b16 %v790, %v788
    %v907 = vpack.c.b16 %v793, %v791
    %v908 = vpack.c.b16 %v794, %v792
    %v909 = vpack.c.b16 %v797, %v795
    %v910 = vpack.c.b16 %v798, %v796
    %v911 = vpack.c.b16 %v801, %v799
    %v912 = vpack.c.b16 %v802, %v800
    %v913 = vpack.c.b16 %v805, %v803
    %v914 = vpack.c.b16 %v806, %v804
    %v915 = vpack.c.b16 %v809, %v807
    %v916 = vpack.c.b16 %v810, %v808
    %v917 = vpack.c.b16 %v813, %v811
    %v918 = vpack.c.b16 %v814, %v812
    %v919 = vpack.c.b16 %v817, %v815
    %v920 = vpack.c.b16 %v818, %v816
    %v921 = vpack.c.b16 %v821, %v819
    %v922 = vpack.c.b16 %v822, %v820
    %v923 = vpack.c.b16 %v825, %v823
    %v924 = vpack.c.b16 %v826, %v824
    %v925 = vpack.c.b16 %v829, %v827
    %v926 = vpack.c.b16 %v830, %v828
    %v927 = vpack.c.b16 %v833, %v831
    %v928 = vpack.c.b16 %v834, %v832
    %v929 = vpack.c.b16 %v837, %v835
    %v930 = vpack.c.b16 %v838, %v836
    %v931 = vpack.c.b16 %v841, %v839
    %v932 = vpack.c.b16 %v842, %v840
    %v933 = vpack.c.b16 %v845, %v843
    %v934 = vpack.c.b16 %v846, %v844
    %v935 = vpack.c.b16 %v849, %v847
    %v936 = vpack.c.b16 %v850, %v848
    %v937 = vpack.c.b16 %v853, %v851
    %v938 = vpack.c.b16 %v854, %v852
    %v939 = vpack.c.b16 %v857, %v855
    %v940 = vpack.c.b16 %v858, %v856
    %v941 = vpack.c.b16 %v861, %v859
    %v942 = vpack.c.b16 %v862, %v860
    %v943 = vpack.c.b16 %v865, %v863
    %v944 = vpack.c.b16 %v866, %v864
    %v945 = vpack.c.b16 %v869, %v867
    %v946 = vpack.c.b16 %v870, %v868
    %v947 = vpack.c.b16 %v873, %v871
    %v948 = vpack.c.b16 %v874, %v872
    %v949 = vpack.c.b16 %v877, %v875
    %v950 = vpack.c.b16 %v878, %v876
    %v951 = vpack.c.b16 %v881, %v879
    %v952 = vpack.c.b16 %v882, %v880
    %v953 = vpack.c.b16 %v885, %v883
    %v954 = vpack.c.b16 %v886, %v884
    %v955 = vpack.c.b16 %v889, %v887
    %v956 = vpack.c.b16 %v890, %v888
    %v957 = vpack.c.b16 %v893, %v891
    %v958 = vpack.c.b16 %v894, %v892
    %1023 = vmatpush.bf16.msra.mxu0 %v909
    %1024 = vmatpush.bf16.msra.mxu0 %v907
    %1025 = vmatpush.bf16.msra.mxu0 %v905
    %1026 = vmatpush.bf16.msra.mxu0 %v903
    %1027 = vmatpush.bf16.msra.mxu0 %v901
    %1028 = vmatpush.bf16.msra.mxu0 %v899
    %1029 = vmatpush.bf16.msra.mxu0 %v897
    %1030 = vmatpush.bf16.msra.mxu0 %v895
    %1031 = vmatmul.bf16.gmra.mxu0 %v629
    %v1032 = vpop.f32.mrf.mxu0
    %v1033 = vadd.f32 %v699, %v1032
    %v1034 = vpop.f32.mrf.mxu0
    %1035 = vdwg.mxu0
    %1036 = vmatpush.bf16.msra.mxu0 %v925
    %1037 = vmatpush.bf16.msra.mxu0 %v923
    %1038 = vmatpush.bf16.msra.mxu0 %v921
    %1039 = vmatpush.bf16.msra.mxu0 %v919
    %1040 = vmatpush.bf16.msra.mxu0 %v917
    %1041 = vmatpush.bf16.msra.mxu0 %v915
    %1042 = vmatpush.bf16.msra.mxu0 %v913
    %1043 = vmatpush.bf16.msra.mxu0 %v911
    %1044 = vmatmul.bf16.gmra.mxu0 %v630
    %v1045 = vpop.f32.mrf.mxu0
    %v1046 = vadd.f32 %v1033, %v1045
    %v1047 = vpop.f32.mrf.mxu0
    %1048 = vdwg.mxu0
    %1049 = vmatpush.bf16.msra.mxu0 %v941
    %1050 = vmatpush.bf16.msra.mxu0 %v939
    %1051 = vmatpush.bf16.msra.mxu0 %v937
    %1052 = vmatpush.bf16.msra.mxu0 %v935
    %1053 = vmatpush.bf16.msra.mxu0 %v933
    %1054 = vmatpush.bf16.msra.mxu0 %v931
    %1055 = vmatpush.bf16.msra.mxu0 %v929
    %1056 = vmatpush.bf16.msra.mxu0 %v927
    %1057 = vmatmul.bf16.gmra.mxu0 %v631
    %v1058 = vpop.f32.mrf.mxu0
    %v1059 = vadd.f32 %v1046, %v1058
    %v1060 = vpop.f32.mrf.mxu0
    %1061 = vdwg.mxu0
    %1062 = vmatpush.bf16.msra.mxu0 %v957
    %1063 = vmatpush.bf16.msra.mxu0 %v955
    %1064 = vmatpush.bf16.msra.mxu0 %v953
    %1065 = vmatpush.bf16.msra.mxu0 %v951
    %1066 = vmatpush.bf16.msra.mxu0 %v949
    %1067 = vmatpush.bf16.msra.mxu0 %v947
    %1068 = vmatpush.bf16.msra.mxu0 %v945
    %1069 = vmatpush.bf16.msra.mxu0 %v943
    %1070 = vmatmul.bf16.gmra.mxu0 %v632
    %v1071 = vpop.f32.mrf.mxu0
    %v1072 = vadd.f32 %v1059, %v1071
    %v1073 = vpop.f32.mrf.mxu0
    %1074 = vdwg.mxu0
    %1075 = vmatpush.bf16.msra.mxu0 %v910
    %1076 = vmatpush.bf16.msra.mxu0 %v908
    %1077 = vmatpush.bf16.msra.mxu0 %v906
    %1078 = vmatpush.bf16.msra.mxu0 %v904
    %1079 = vmatpush.bf16.msra.mxu0 %v902
    %1080 = vmatpush.bf16.msra.mxu0 %v900
    %1081 = vmatpush.bf16.msra.mxu0 %v898
    %1082 = vmatpush.bf16.msra.mxu0 %v896
    %1083 = vmatmul.bf16.gmra.mxu0 %v629
    %v1084 = vpop.f32.mrf.mxu0
    %v1085 = vadd.f32 %v700, %v1084
    %v1086 = vpop.f32.mrf.mxu0
    %1087 = vdwg.mxu0
    %1088 = vmatpush.bf16.msra.mxu0 %v926
    %1089 = vmatpush.bf16.msra.mxu0 %v924
    %1090 = vmatpush.bf16.msra.mxu0 %v922
    %1091 = vmatpush.bf16.msra.mxu0 %v920
    %1092 = vmatpush.bf16.msra.mxu0 %v918
    %1093 = vmatpush.bf16.msra.mxu0 %v916
    %1094 = vmatpush.bf16.msra.mxu0 %v914
    %1095 = vmatpush.bf16.msra.mxu0 %v912
    %1096 = vmatmul.bf16.gmra.mxu0 %v630
    %v1097 = vpop.f32.mrf.mxu0
    %v1098 = vadd.f32 %v1085, %v1097
    %v1099 = vpop.f32.mrf.mxu0
    %1100 = vdwg.mxu0
    %1101 = vmatpush.bf16.msra.mxu0 %v942
    %1102 = vmatpush.bf16.msra.mxu0 %v940
    %1103 = vmatpush.bf16.msra.mxu0 %v938
    %1104 = vmatpush.bf16.msra.mxu0 %v936
    %1105 = vmatpush.bf16.msra.mxu0 %v934
    %1106 = vmatpush.bf16.msra.mxu0 %v932
    %1107 = vmatpush.bf16.msra.mxu0 %v930
    %1108 = vmatpush.bf16.msra.mxu0 %v928
    %1109 = vmatmul.bf16.gmra.mxu0 %v631
    %v1110 = vpop.f32.mrf.mxu0
    %v1111 = vadd.f32 %v1098, %v1110
    %v1112 = vpop.f32.mrf.mxu0
    %1113 = vdwg.mxu0
    %1114 = vmatpush.bf16.msra.mxu0 %v958
    %1115 = vmatpush.bf16.msra.mxu0 %v956
    %1116 = vmatpush.bf16.msra.mxu0 %v954
    %1117 = vmatpush.bf16.msra.mxu0 %v952
    %1118 = vmatpush.bf16.msra.mxu0 %v950
    %1119 = vmatpush.bf16.msra.mxu0 %v948
    %1120 = vmatpush.bf16.msra.mxu0 %v946
    %1121 = vmatpush.bf16.msra.mxu0 %v944
    %1122 = vmatmul.bf16.gmra.mxu0 %v632
    %v1123 = vpop.f32.mrf.mxu0
    %v1124 = vadd.f32 %v1111, %v1123
    %v1125 = vpop.f32.mrf.mxu0
    %1126 = vdwg.mxu0
    %vm1127 = vcmp.gt.f32.partialorder %v1072, 0.0
    %vm1128 = vcmp.gt.f32.partialorder %v1124, 0.0
    %v1129 = vmul.f32 %v1072, 0.2
    %v1130 = vmul.f32 %v1124, 0.2
    %v1131 = vsel %vm1127, %v1072, %v1129
    %v1132 = vsel %vm1128, %v1124, %v1130
    %v1133 = vpack.c.bf16 %v1131, %v1131
    %v1134 = vpack.c.bf16 %v1132, %v1132
    %v1135 = vld [vmem:[%s6] sm:$0xf]
    %v1136 = vld [vmem:[%s6 + $0x4] sm:$0xf]
    %v1137 = vld [vmem:[%s6 + $0x8] sm:$0xf]
    %v1138 = vld [vmem:[%s6 + $0xc] sm:$0xf]
    %v1139 = vld [vmem:[%s6 + $0x10] sm:$0xf]
    %v1140 = vld [vmem:[%s6 + $0x14] sm:$0xf]
    %v1141 = vld [vmem:[%s6 + $0x18] sm:$0xf]
    %v1142 = vld [vmem:[%s6 + $0x1c] sm:$0xf]
    %v1143 = vld [vmem:[%s6 + $0x20] sm:$0xf]
    %v1144 = vld [vmem:[%s6 + $0x24] sm:$0xf]
    %v1145 = vld [vmem:[%s6 + $0x28] sm:$0xf]
    %v1146 = vld [vmem:[%s6 + $0x2c] sm:$0xf]
    %v1147 = vld [vmem:[%s6 + $0x30] sm:$0xf]
    %v1148 = vld [vmem:[%s6 + $0x34] sm:$0xf]
    %v1149 = vld [vmem:[%s6 + $0x38] sm:$0xf]
    %v1150 = vld [vmem:[%s6 + $0x3c] sm:$0xf]
    %v1151 = vld [vmem:[%s6 + $0x40] sm:$0xf]
    %v1152 = vld [vmem:[%s6 + $0x44] sm:$0xf]
    %v1153 = vld [vmem:[%s6 + $0x48] sm:$0xf]
    %v1154 = vld [vmem:[%s6 + $0x4c] sm:$0xf]
    %v1155 = vld [vmem:[%s6 + $0x50] sm:$0xf]
    %v1156 = vld [vmem:[%s6 + $0x54] sm:$0xf]
    %v1157 = vld [vmem:[%s6 + $0x58] sm:$0xf]
    %v1158 = vld [vmem:[%s6 + $0x5c] sm:$0xf]
    %v1159 = vld [vmem:[%s6 + $0x60] sm:$0xf]
    %v1160 = vld [vmem:[%s6 + $0x64] sm:$0xf]
    %v1161 = vld [vmem:[%s6 + $0x68] sm:$0xf]
    %v1162 = vld [vmem:[%s6 + $0x6c] sm:$0xf]
    %v1163 = vld [vmem:[%s6 + $0x70] sm:$0xf]
    %v1164 = vld [vmem:[%s6 + $0x74] sm:$0xf]
    %v1165 = vld [vmem:[%s6 + $0x78] sm:$0xf]
    %v1166 = vld [vmem:[%s6 + $0x7c] sm:$0xf]
    %v1167 = vld [vmem:[%s7] sm:$0x1]
    %v1169 = vperm.slane %v1167, 0
    %v1203 = vunpack.c.l.b16 %v1135
    %v1204 = vunpack.c.l.b16 %v1136
    %v1205 = vunpack.c.l.b16 %v1137
    %v1206 = vunpack.c.l.b16 %v1138
    %v1207 = vunpack.c.l.b16 %v1139
    %v1208 = vunpack.c.l.b16 %v1140
    %v1209 = vunpack.c.l.b16 %v1141
    %v1210 = vunpack.c.l.b16 %v1142
    %v1211 = vunpack.c.l.b16 %v1143
    %v1212 = vunpack.c.l.b16 %v1144
    %v1213 = vunpack.c.l.b16 %v1145
    %v1214 = vunpack.c.l.b16 %v1146
    %v1215 = vunpack.c.l.b16 %v1147
    %v1216 = vunpack.c.l.b16 %v1148
    %v1217 = vunpack.c.l.b16 %v1149
    %v1218 = vunpack.c.l.b16 %v1150
    %v1219 = vunpack.c.l.b16 %v1151
    %v1220 = vunpack.c.l.b16 %v1152
    %v1221 = vunpack.c.l.b16 %v1153
    %v1222 = vunpack.c.l.b16 %v1154
    %v1223 = vunpack.c.l.b16 %v1155
    %v1224 = vunpack.c.l.b16 %v1156
    %v1225 = vunpack.c.l.b16 %v1157
    %v1226 = vunpack.c.l.b16 %v1158
    %v1227 = vunpack.c.l.b16 %v1159
    %v1228 = vunpack.c.l.b16 %v1160
    %v1229 = vunpack.c.l.b16 %v1161
    %v1230 = vunpack.c.l.b16 %v1162
    %v1231 = vunpack.c.l.b16 %v1163
    %v1232 = vunpack.c.l.b16 %v1164
    %v1233 = vunpack.c.l.b16 %v1165
    %v1234 = vunpack.c.l.b16 %v1166
    %v1235 = vpack.c.b16 %v1204, %v1203
    %v1236 = vpack.c.b16 %v1206, %v1205
    %v1237 = vpack.c.b16 %v1208, %v1207
    %v1238 = vpack.c.b16 %v1210, %v1209
    %v1239 = vpack.c.b16 %v1212, %v1211
    %v1240 = vpack.c.b16 %v1214, %v1213
    %v1241 = vpack.c.b16 %v1216, %v1215
    %v1242 = vpack.c.b16 %v1218, %v1217
    %v1243 = vpack.c.b16 %v1220, %v1219
    %v1244 = vpack.c.b16 %v1222, %v1221
    %v1245 = vpack.c.b16 %v1224, %v1223
    %v1246 = vpack.c.b16 %v1226, %v1225
    %v1247 = vpack.c.b16 %v1228, %v1227
    %v1248 = vpack.c.b16 %v1230, %v1229
    %v1249 = vpack.c.b16 %v1232, %v1231
    %v1250 = vpack.c.b16 %v1234, %v1233
    %1267 = vmatpush.bf16.msra.mxu0 %v1242
    %1268 = vmatpush.bf16.msra.mxu0 %v1241
    %1269 = vmatpush.bf16.msra.mxu0 %v1240
    %1270 = vmatpush.bf16.msra.mxu0 %v1239
    %1271 = vmatpush.bf16.msra.mxu0 %v1238
    %1272 = vmatpush.bf16.msra.mxu0 %v1237
    %1273 = vmatpush.bf16.msra.mxu0 %v1236
    %1274 = vmatpush.bf16.msra.mxu0 %v1235
    %1275 = vmatmul.bf16.gmra.mxu0 %v1133
    %v1276 = vpop.f32.mrf.mxu0
    %v1277 = vadd.f32 %v1169, %v1276
    %v1278 = vpop.f32.mrf.mxu0
    %1279 = vdwg.mxu0
    %1280 = vmatpush.bf16.msra.mxu0 %v1250
    %1281 = vmatpush.bf16.msra.mxu0 %v1249
    %1282 = vmatpush.bf16.msra.mxu0 %v1248
    %1283 = vmatpush.bf16.msra.mxu0 %v1247
    %1284 = vmatpush.bf16.msra.mxu0 %v1246
    %1285 = vmatpush.bf16.msra.mxu0 %v1245
    %1286 = vmatpush.bf16.msra.mxu0 %v1244
    %1287 = vmatpush.bf16.msra.mxu0 %v1243
    %1288 = vmatmul.bf16.gmra.mxu0 %v1134
    %v1289 = vpop.f32.mrf.mxu0
    %v1290 = vadd.f32 %v1277, %v1289
    %v1291 = vpop.f32.mrf.mxu0
    %1292 = vdwg.mxu0
    %vm1293 = vcmp.gt.f32.partialorder %v1290, 0.0
    %v1294 = vmul.f32 %v1290, 0.2
    %v1295 = vsel %vm1293, %v1290, %v1294
    %v1296 = vld [vmem:[%s8] sm:$0xff]
    %v1297 = vld [vmem:[%s8 + $0x8] sm:$0xff]
    %v1298 = vld [vmem:[%s8 + $0x10] sm:$0xff]
    %v1299 = vld [vmem:[%s8 + $0x18] sm:$0xff]
    %v1300 = vld [vmem:[%s8 + $0x20] sm:$0xff]
    %v1301 = vld [vmem:[%s8 + $0x28] sm:$0xff]
    %v1302 = vld [vmem:[%s8 + $0x30] sm:$0xff]
    %v1303 = vld [vmem:[%s8 + $0x38] sm:$0xff]
    %v1304 = vld [vmem:[%s8 + $0x40] sm:$0xff]
    %v1305 = vld [vmem:[%s8 + $0x48] sm:$0xff]
    %v1306 = vld [vmem:[%s8 + $0x50] sm:$0xff]
    %v1307 = vld [vmem:[%s8 + $0x58] sm:$0xff]
    %v1308 = vld [vmem:[%s8 + $0x60] sm:$0xff]
    %v1309 = vld [vmem:[%s8 + $0x68] sm:$0xff]
    %v1310 = vld [vmem:[%s8 + $0x70] sm:$0xff]
    %v1311 = vld [vmem:[%s8 + $0x78] sm:$0xff]
    %v1312 = vld [vmem:[%s9] sm:$0x1]
    %v1314 = vperm.slane %v1312, 0
    %1316 = vmatpush.msra.mxu0 %v1311
    %1317 = vmatpush.msra.mxu0 %v1310
    %1318 = vmatpush.msra.mxu0 %v1309
    %1319 = vmatpush.msra.mxu0 %v1308
    %1320 = vmatpush.msra.mxu0 %v1307
    %1321 = vmatpush.msra.mxu0 %v1306
    %1322 = vmatpush.msra.mxu0 %v1305
    %1323 = vmatpush.msra.mxu0 %v1304
    %1324 = vmatpush.msra.mxu0 %v1303
    %1325 = vmatpush.msra.mxu0 %v1302
    %1326 = vmatpush.msra.mxu0 %v1301
    %1327 = vmatpush.msra.mxu0 %v1300
    %1328 = vmatpush.msra.mxu0 %v1299
    %1329 = vmatpush.msra.mxu0 %v1298
    %1330 = vmatpush.msra.mxu0 %v1297
    %1331 = vmatpush.msra.mxu0 %v1296
    %1332 = vmatmul.f32.gmra.mxu0 %v1295
    %v1333 = vpop.f32.mrf.mxu0
    %v1334 = vadd.f32 %v1314, %v1333
    %1335 = vdwg.mxu0
    %v1336 = vld [vmem:[%s10] sm:$0xff]
    %v1337 = vld [vmem:[%s10 + $0x8] sm:$0xff]
    %v1338 = vld [vmem:[%s10 + $0x10] sm:$0xff]
    %v1339 = vld [vmem:[%s10 + $0x18] sm:$0xff]
    %v1340 = vld [vmem:[%s11] sm:$0x1]
    %v1342 = vperm.slane %v1340, 0
    %vm1344 = vcmask 261120
    %v1346 = vsel %vm1344, %v1334, 0
    %1348 = vmatpush.msra.mxu0 0.0
    %1349 = vmatpush.msra.mxu0 0.0
    %1350 = vmatpush.msra.mxu0 0.0
    %1351 = vmatpush.msra.mxu0 0.0
    %1352 = vmatpush.msra.mxu0 0.0
    %1353 = vmatpush.msra.mxu0 0.0
    %1354 = vmatpush.msra.mxu0 0.0
    %1355 = vmatpush.msra.mxu0 0.0
    %1356 = vmatpush.msra.mxu0 0.0
    %1357 = vmatpush.msra.mxu0 0.0
    %1358 = vmatpush.msra.mxu0 0.0
    %1359 = vmatpush.msra.mxu0 0.0
    %1360 = vmatpush.msra.mxu0 %v1339
    %1361 = vmatpush.msra.mxu0 %v1338
    %1362 = vmatpush.msra.mxu0 %v1337
    %1363 = vmatpush.msra.mxu0 %v1336
    %1364 = vmatmul.f32.gmra.mxu0 %v1346
    %v1365 = vpop.f32.mrf.mxu0
    %v1366 = vadd.f32 %v1342, %v1365
    %1367 = vdwg.mxu0
    %vm1368 = vcmp.gt.f32.partialorder %v1366, 0.0
    %v1369 = vmul.f32 %v1366, 0.2
    %v1370 = vsel %vm1368, %v1366, %v1369
    %v1371 = vld [vmem:[%s12] sm:$0xff]
    %v1372 = vld [vmem:[%s12 + $0x8] sm:$0xff]
    %v1373 = vld [vmem:[%s12 + $0x10] sm:$0xff]
    %v1374 = vld [vmem:[%s12 + $0x18] sm:$0xff]
    %v1375 = vld [vmem:[%s12 + $0x20] sm:$0xff]
    %v1376 = vld [vmem:[%s12 + $0x28] sm:$0xff]
    %v1377 = vld [vmem:[%s12 + $0x30] sm:$0xff]
    %v1378 = vld [vmem:[%s12 + $0x38] sm:$0xff]
    %v1379 = vld [vmem:[%s13] sm:$0x1]
    %v1381 = vperm.slane %v1379, 0
    %vm1383 = vcmask 523264
    %v1385 = vsel %vm1383, %v1370, 0
    %1387 = vmatpush.msra.mxu0 0.0
    %1388 = vmatpush.msra.mxu0 0.0
    %1389 = vmatpush.msra.mxu0 0.0
    %1390 = vmatpush.msra.mxu0 0.0
    %1391 = vmatpush.msra.mxu0 0.0
    %1392 = vmatpush.msra.mxu0 0.0
    %1393 = vmatpush.msra.mxu0 0.0
    %1394 = vmatpush.msra.mxu0 0.0
    %1395 = vmatpush.msra.mxu0 %v1378
    %1396 = vmatpush.msra.mxu0 %v1377
    %1397 = vmatpush.msra.mxu0 %v1376
    %1398 = vmatpush.msra.mxu0 %v1375
    %1399 = vmatpush.msra.mxu0 %v1374
    %1400 = vmatpush.msra.mxu0 %v1373
    %1401 = vmatpush.msra.mxu0 %v1372
    %1402 = vmatpush.msra.mxu0 %v1371
    %1403 = vmatmul.f32.gmra.mxu0 %v1385
    %v1404 = vpop.f32.mrf.mxu0
    %v1405 = vadd.f32 %v1381, %v1404
    %1406 = vdwg.mxu0
    %v1407 = vtanh.pop %v1405
    %v1408 = vxor.u32 %v1405, 2147483648
    %v1409 = vmul.f32 %v1408, 1.442695
    %v1410 = vpow.pop %v1409
    %v1411 = vadd.f32 %v1410, 1.0
    %v1412 = vrcp.pop %v1411
    %v1413 = vmul.f32 %v1411, %v1412
    %v1414 = vsub.f32 1.0, %v1413
    %v1415 = vmul.f32 %v1412, %v1414
    %v1416 = vadd.f32 %v1412, %v1415
    %vm1417 = vweird.f32 %v1411
    %vm1418 = vweird.f32 %v1412
    %vm1419 = vmor %vm1417, %vm1418
    %v1420 = vsel %vm1419, %v1412, %v1416
    %v1421 = vand.u32 2147483647, %v1411
    %vm1422 = vcmp.eq.f32.partialorder %v1421, 8.507059e+37
    %v1423 = vand.u32 %v1411, 2147483648
    %v1424 = vor.u32 1.1754944e-38, %v1423
    %v1425 = vsel %vm1422, %v1424, %v1420
    %v1426 = vmul.f32 1.0, %v1425
    %v1427 = vmul.f32 %v1426, 0.5
    %v1428 = vadd.f32 %v1427, 0.01
    %vm1429 = vcmask 130048
    %v1430 = vsel %vm1429, %v1407, %v1428
    %s1431 = sld [smem:[#allocation2]]
    %v1432 = vld [vmem:[%s1] sm:$0xff]
    %v1433 = vld [vmem:[%s1 + $0x8] sm:$0xff]
    %v1434 = vld [vmem:[%s1 + $0x10] sm:$0xff]
    %v1435 = vld [vmem:[%s1 + $0x18] sm:$0xff]
    %v1436 = vld [vmem:[%s1 + $0x20] sm:$0xff]
    %v1437 = vld [vmem:[%s1 + $0x28] sm:$0xff]
    %v1438 = vld [vmem:[%s1 + $0x30] sm:$0xff]
    %v1439 = vld [vmem:[%s1 + $0x38] sm:$0xff]
    %v1440 = vld [vmem:[%s1 + $0x40] sm:$0xff]
    %v1441 = vld [vmem:[%s1 + $0x48] sm:$0xff]
    %v1442 = vld [vmem:[%s1 + $0x50] sm:$0xff]
    %v1443 = vld [vmem:[%s1 + $0x58] sm:$0xff]
    %v1444 = vld [vmem:[%s1 + $0x60] sm:$0xff]
    %v1445 = vld [vmem:[%s1 + $0x68] sm:$0xff]
    %v1446 = vld [vmem:[%s1 + $0x70] sm:$0xff]
    %v1447 = vld [vmem:[%s1 + $0x78] sm:$0xff]
    %1449 = vset.pattern.permute.xlu0 0
    %1450 = vperm.xlu0 %1449, %v1432
    %v1451 = vpop.permute.xlu0 %1450
    %1454 = vset.pattern.permute.xlu0 0
    %1455 = vperm.xlu0 %1454, %v1433
    %v1456 = vpop.permute.xlu0 %1455
    %1459 = vset.pattern.permute.xlu0 0
    %1460 = vperm.xlu0 %1459, %v1434
    %v1461 = vpop.permute.xlu0 %1460
    %1464 = vset.pattern.permute.xlu0 0
    %1465 = vperm.xlu0 %1464, %v1435
    %v1466 = vpop.permute.xlu0 %1465
    %1469 = vset.pattern.permute.xlu0 0
    %1470 = vperm.xlu0 %1469, %v1436
    %v1471 = vpop.permute.xlu0 %1470
    %1474 = vset.pattern.permute.xlu0 0
    %1475 = vperm.xlu0 %1474, %v1437
    %v1476 = vpop.permute.xlu0 %1475
    %1479 = vset.pattern.permute.xlu0 0
    %1480 = vperm.xlu0 %1479, %v1438
    %v1481 = vpop.permute.xlu0 %1480
    %1484 = vset.pattern.permute.xlu0 0
    %1485 = vperm.xlu0 %1484, %v1439
    %v1486 = vpop.permute.xlu0 %1485
    %v1488 = vperm.slane %v1430, 0
    %v1489 = vsub.f32 %v1451, %v1488
    %v1490 = vsub.f32 %v1456, %v1488
    %v1491 = vsub.f32 %v1461, %v1488
    %v1492 = vsub.f32 %v1466, %v1488
    %v1493 = vsub.f32 %v1471, %v1488
    %v1494 = vsub.f32 %v1476, %v1488
    %v1495 = vsub.f32 %v1481, %v1488
    %v1496 = vsub.f32 %v1486, %v1488
    %1497 = vset.pattern.permute.xlu0 1
    %1498 = vperm.xlu0 %1497, %v1432
    %v1499 = vpop.permute.xlu0 %1498
    %1501 = vset.pattern.permute.xlu0 1
    %1502 = vperm.xlu0 %1501, %v1433
    %v1503 = vpop.permute.xlu0 %1502
    %1505 = vset.pattern.permute.xlu0 1
    %1506 = vperm.xlu0 %1505, %v1434
    %v1507 = vpop.permute.xlu0 %1506
    %1509 = vset.pattern.permute.xlu0 1
    %1510 = vperm.xlu0 %1509, %v1435
    %v1511 = vpop.permute.xlu0 %1510
    %1513 = vset.pattern.permute.xlu0 1
    %1514 = vperm.xlu0 %1513, %v1436
    %v1515 = vpop.permute.xlu0 %1514
    %1517 = vset.pattern.permute.xlu0 1
    %1518 = vperm.xlu0 %1517, %v1437
    %v1519 = vpop.permute.xlu0 %1518
    %1521 = vset.pattern.permute.xlu0 1
    %1522 = vperm.xlu0 %1521, %v1438
    %v1523 = vpop.permute.xlu0 %1522
    %1525 = vset.pattern.permute.xlu0 1
    %1526 = vperm.xlu0 %1525, %v1439
    %v1527 = vpop.permute.xlu0 %1526
    %v1529 = vsub.f32 %v1499, %v1488
    %v1530 = vsub.f32 %v1503, %v1488
    %v1531 = vsub.f32 %v1507, %v1488
    %v1532 = vsub.f32 %v1511, %v1488
    %v1533 = vsub.f32 %v1515, %v1488
    %v1534 = vsub.f32 %v1519, %v1488
    %v1535 = vsub.f32 %v1523, %v1488
    %v1536 = vsub.f32 %v1527, %v1488
    %v1537 = vmul.f32 %v1489, %v1489
    %v1538 = vmul.f32 %v1490, %v1490
    %v1539 = vmul.f32 %v1491, %v1491
    %v1540 = vmul.f32 %v1492, %v1492
    %v1541 = vmul.f32 %v1493, %v1493
    %v1542 = vmul.f32 %v1494, %v1494
    %v1543 = vmul.f32 %v1495, %v1495
    %v1544 = vmul.f32 %v1496, %v1496
    %v1545 = vmul.f32 %v1529, %v1529
    %v1546 = vmul.f32 %v1530, %v1530
    %v1547 = vmul.f32 %v1531, %v1531
    %v1548 = vmul.f32 %v1532, %v1532
    %v1549 = vmul.f32 %v1533, %v1533
    %v1550 = vmul.f32 %v1534, %v1534
    %v1551 = vmul.f32 %v1535, %v1535
    %v1552 = vmul.f32 %v1536, %v1536
    %1561 = vrot.lane.b32.xlu0 %v1545, 124
    %v1562 = vpop.permute.xlu0 %1561
    %1563 = vrot.lane.b32.xlu0 %v1546, 124
    %v1564 = vpop.permute.xlu0 %1563
    %1565 = vrot.lane.b32.xlu0 %v1547, 124
    %v1566 = vpop.permute.xlu0 %1565
    %1567 = vrot.lane.b32.xlu0 %v1548, 124
    %v1568 = vpop.permute.xlu0 %1567
    %1569 = vrot.lane.b32.xlu0 %v1549, 124
    %v1570 = vpop.permute.xlu0 %1569
    %1571 = vrot.lane.b32.xlu0 %v1550, 124
    %v1572 = vpop.permute.xlu0 %1571
    %1573 = vrot.lane.b32.xlu0 %v1551, 124
    %v1574 = vpop.permute.xlu0 %1573
    %1575 = vrot.lane.b32.xlu0 %v1552, 124
    %v1576 = vpop.permute.xlu0 %1575
    %v1585 = vadd.f32 %v1537, %v1562
    %v1586 = vadd.f32 %v1538, %v1564
    %v1587 = vadd.f32 %v1539, %v1566
    %v1588 = vadd.f32 %v1540, %v1568
    %v1589 = vadd.f32 %v1541, %v1570
    %v1590 = vadd.f32 %v1542, %v1572
    %v1591 = vadd.f32 %v1543, %v1574
    %v1592 = vadd.f32 %v1544, %v1576
    %v1593 = vrsqrt.pop %v1585
    %v1594 = vmul.f32 %v1593, %v1585
    %v1595 = vmul.f32 %v1594, %v1593
    %v1596 = vmul.f32 0.5, %v1595
    %v1597 = vsub.f32 1.5, %v1596
    %v1598 = vmul.f32 %v1593, %v1597
    %v1599 = vmul.f32 %v1585, %v1598
    %vm1600 = vcmp.eq.f32.partialorder %v1585, inf
    %v1601 = vsel %vm1600, %v1585, %v1599
    %vm1602 = vcmp.eq.f32.partialorder %v1585, 0.0
    %v1603 = vand.u32 %v1585, 2147483648
    %v1604 = vsel %vm1602, %v1603, %v1601
    %v1605 = vrsqrt.pop %v1586
    %v1606 = vmul.f32 %v1605, %v1586
    %v1607 = vmul.f32 %v1606, %v1605
    %v1608 = vmul.f32 0.5, %v1607
    %v1609 = vsub.f32 1.5, %v1608
    %v1610 = vmul.f32 %v1605, %v1609
    %v1611 = vmul.f32 %v1586, %v1610
    %vm1612 = vcmp.eq.f32.partialorder %v1586, inf
    %v1613 = vsel %vm1612, %v1586, %v1611
    %vm1614 = vcmp.eq.f32.partialorder %v1586, 0.0
    %v1615 = vand.u32 %v1586, 2147483648
    %v1616 = vsel %vm1614, %v1615, %v1613
    %v1617 = vrsqrt.pop %v1587
    %v1618 = vmul.f32 %v1617, %v1587
    %v1619 = vmul.f32 %v1618, %v1617
    %v1620 = vmul.f32 0.5, %v1619
    %v1621 = vsub.f32 1.5, %v1620
    %v1622 = vmul.f32 %v1617, %v1621
    %v1623 = vmul.f32 %v1587, %v1622
    %vm1624 = vcmp.eq.f32.partialorder %v1587, inf
    %v1625 = vsel %vm1624, %v1587, %v1623
    %vm1626 = vcmp.eq.f32.partialorder %v1587, 0.0
    %v1627 = vand.u32 %v1587, 2147483648
    %v1628 = vsel %vm1626, %v1627, %v1625
    %v1629 = vrsqrt.pop %v1588
    %v1630 = vmul.f32 %v1629, %v1588
    %v1631 = vmul.f32 %v1630, %v1629
    %v1632 = vmul.f32 0.5, %v1631
    %v1633 = vsub.f32 1.5, %v1632
    %v1634 = vmul.f32 %v1629, %v1633
    %v1635 = vmul.f32 %v1588, %v1634
    %vm1636 = vcmp.eq.f32.partialorder %v1588, inf
    %v1637 = vsel %vm1636, %v1588, %v1635
    %vm1638 = vcmp.eq.f32.partialorder %v1588, 0.0
    %v1639 = vand.u32 %v1588, 2147483648
    %v1640 = vsel %vm1638, %v1639, %v1637
    %v1641 = vrsqrt.pop %v1589
    %v1642 = vmul.f32 %v1641, %v1589
    %v1643 = vmul.f32 %v1642, %v1641
    %v1644 = vmul.f32 0.5, %v1643
    %v1645 = vsub.f32 1.5, %v1644
    %v1646 = vmul.f32 %v1641, %v1645
    %v1647 = vmul.f32 %v1589, %v1646
    %vm1648 = vcmp.eq.f32.partialorder %v1589, inf
    %v1649 = vsel %vm1648, %v1589, %v1647
    %vm1650 = vcmp.eq.f32.partialorder %v1589, 0.0
    %v1651 = vand.u32 %v1589, 2147483648
    %v1652 = vsel %vm1650, %v1651, %v1649
    %v1653 = vrsqrt.pop %v1590
    %v1654 = vmul.f32 %v1653, %v1590
    %v1655 = vmul.f32 %v1654, %v1653
    %v1656 = vmul.f32 0.5, %v1655
    %v1657 = vsub.f32 1.5, %v1656
    %v1658 = vmul.f32 %v1653, %v1657
    %v1659 = vmul.f32 %v1590, %v1658
    %vm1660 = vcmp.eq.f32.partialorder %v1590, inf
    %v1661 = vsel %vm1660, %v1590, %v1659
    %vm1662 = vcmp.eq.f32.partialorder %v1590, 0.0
    %v1663 = vand.u32 %v1590, 2147483648
    %v1664 = vsel %vm1662, %v1663, %v1661
    %v1665 = vrsqrt.pop %v1591
    %v1666 = vmul.f32 %v1665, %v1591
    %v1667 = vmul.f32 %v1666, %v1665
    %v1668 = vmul.f32 0.5, %v1667
    %v1669 = vsub.f32 1.5, %v1668
    %v1670 = vmul.f32 %v1665, %v1669
    %v1671 = vmul.f32 %v1591, %v1670
    %vm1672 = vcmp.eq.f32.partialorder %v1591, inf
    %v1673 = vsel %vm1672, %v1591, %v1671
    %vm1674 = vcmp.eq.f32.partialorder %v1591, 0.0
    %v1675 = vand.u32 %v1591, 2147483648
    %v1676 = vsel %vm1674, %v1675, %v1673
    %v1677 = vrsqrt.pop %v1592
    %v1678 = vmul.f32 %v1677, %v1592
    %v1679 = vmul.f32 %v1678, %v1677
    %v1680 = vmul.f32 0.5, %v1679
    %v1681 = vsub.f32 1.5, %v1680
    %v1682 = vmul.f32 %v1677, %v1681
    %v1683 = vmul.f32 %v1592, %v1682
    %vm1684 = vcmp.eq.f32.partialorder %v1592, inf
    %v1685 = vsel %vm1684, %v1592, %v1683
    %vm1686 = vcmp.eq.f32.partialorder %v1592, 0.0
    %v1687 = vand.u32 %v1592, 2147483648
    %v1688 = vsel %vm1686, %v1687, %v1685
    %1690 = vrot.lane.b32.xlu0 %v1488, 112
    %v1691 = vpop.permute.xlu0 %1690
    %v1693 = vsub.f32 %v1604, %v1691
    %v1694 = vsub.f32 %v1616, %v1691
    %v1695 = vsub.f32 %v1628, %v1691
    %v1696 = vsub.f32 %v1640, %v1691
    %v1697 = vsub.f32 %v1652, %v1691
    %v1698 = vsub.f32 %v1664, %v1691
    %v1699 = vsub.f32 %v1676, %v1691
    %v1700 = vsub.f32 %v1688, %v1691
    %v1701 = vand.u32 2147483647, %v1489
    %v1702 = vand.u32 2147483647, %v1490
    %v1703 = vand.u32 2147483647, %v1491
    %v1704 = vand.u32 2147483647, %v1492
    %v1705 = vand.u32 2147483647, %v1493
    %v1706 = vand.u32 2147483647, %v1494
    %v1707 = vand.u32 2147483647, %v1495
    %v1708 = vand.u32 2147483647, %v1496
    %v1709 = vsub.f32 %v1701, %v1691
    %v1710 = vsub.f32 %v1702, %v1691
    %v1711 = vsub.f32 %v1703, %v1691
    %v1712 = vsub.f32 %v1704, %v1691
    %v1713 = vsub.f32 %v1705, %v1691
    %v1714 = vsub.f32 %v1706, %v1691
    %v1715 = vsub.f32 %v1707, %v1691
    %v1716 = vsub.f32 %v1708, %v1691
    %v1717 = vand.u32 2147483647, %v1529
    %v1718 = vand.u32 2147483647, %v1530
    %v1719 = vand.u32 2147483647, %v1531
    %v1720 = vand.u32 2147483647, %v1532
    %v1721 = vand.u32 2147483647, %v1533
    %v1722 = vand.u32 2147483647, %v1534
    %v1723 = vand.u32 2147483647, %v1535
    %v1724 = vand.u32 2147483647, %v1536
    %v1725 = vsub.f32 %v1717, %v1691
    %v1726 = vsub.f32 %v1718, %v1691
    %v1727 = vsub.f32 %v1719, %v1691
    %v1728 = vsub.f32 %v1720, %v1691
    %v1729 = vsub.f32 %v1721, %v1691
    %v1730 = vsub.f32 %v1722, %v1691
    %v1731 = vsub.f32 %v1723, %v1691
    %v1732 = vsub.f32 %v1724, %v1691
    %v1733 = vmax.f32 %v1709, 0.0
    %v1734 = vmax.f32 %v1710, 0.0
    %v1735 = vmax.f32 %v1711, 0.0
    %v1736 = vmax.f32 %v1712, 0.0
    %v1737 = vmax.f32 %v1713, 0.0
    %v1738 = vmax.f32 %v1714, 0.0
    %v1739 = vmax.f32 %v1715, 0.0
    %v1740 = vmax.f32 %v1716, 0.0
    %v1741 = vmul.f32 %v1733, %v1733
    %v1742 = vmul.f32 %v1734, %v1734
    %v1743 = vmul.f32 %v1735, %v1735
    %v1744 = vmul.f32 %v1736, %v1736
    %v1745 = vmul.f32 %v1737, %v1737
    %v1746 = vmul.f32 %v1738, %v1738
    %v1747 = vmul.f32 %v1739, %v1739
    %v1748 = vmul.f32 %v1740, %v1740
    %v1749 = vmax.f32 %v1725, 0.0
    %v1750 = vmax.f32 %v1726, 0.0
    %v1751 = vmax.f32 %v1727, 0.0
    %v1752 = vmax.f32 %v1728, 0.0
    %v1753 = vmax.f32 %v1729, 0.0
    %v1754 = vmax.f32 %v1730, 0.0
    %v1755 = vmax.f32 %v1731, 0.0
    %v1756 = vmax.f32 %v1732, 0.0
    %v1757 = vmul.f32 %v1749, %v1749
    %v1758 = vmul.f32 %v1750, %v1750
    %v1759 = vmul.f32 %v1751, %v1751
    %v1760 = vmul.f32 %v1752, %v1752
    %v1761 = vmul.f32 %v1753, %v1753
    %v1762 = vmul.f32 %v1754, %v1754
    %v1763 = vmul.f32 %v1755, %v1755
    %v1764 = vmul.f32 %v1756, %v1756
    %1773 = vrot.lane.b32.xlu0 %v1757, 124
    %v1774 = vpop.permute.xlu0 %1773
    %1775 = vrot.lane.b32.xlu0 %v1758, 124
    %v1776 = vpop.permute.xlu0 %1775
    %1777 = vrot.lane.b32.xlu0 %v1759, 124
    %v1778 = vpop.permute.xlu0 %1777
    %1779 = vrot.lane.b32.xlu0 %v1760, 124
    %v1780 = vpop.permute.xlu0 %1779
    %1781 = vrot.lane.b32.xlu0 %v1761, 124
    %v1782 = vpop.permute.xlu0 %1781
    %1783 = vrot.lane.b32.xlu0 %v1762, 124
    %v1784 = vpop.permute.xlu0 %1783
    %1785 = vrot.lane.b32.xlu0 %v1763, 124
    %v1786 = vpop.permute.xlu0 %1785
    %1787 = vrot.lane.b32.xlu0 %v1764, 124
    %v1788 = vpop.permute.xlu0 %1787
    %v1797 = vadd.f32 %v1741, %v1774
    %v1798 = vadd.f32 %v1742, %v1776
    %v1799 = vadd.f32 %v1743, %v1778
    %v1800 = vadd.f32 %v1744, %v1780
    %v1801 = vadd.f32 %v1745, %v1782
    %v1802 = vadd.f32 %v1746, %v1784
    %v1803 = vadd.f32 %v1747, %v1786
    %v1804 = vadd.f32 %v1748, %v1788
    %v1805 = vrsqrt.pop %v1797
    %v1806 = vmul.f32 %v1805, %v1797
    %v1807 = vmul.f32 %v1806, %v1805
    %v1808 = vmul.f32 0.5, %v1807
    %v1809 = vsub.f32 1.5, %v1808
    %v1810 = vmul.f32 %v1805, %v1809
    %v1811 = vmul.f32 %v1797, %v1810
    %vm1812 = vcmp.eq.f32.partialorder %v1797, inf
    %v1813 = vsel %vm1812, %v1797, %v1811
    %vm1814 = vcmp.eq.f32.partialorder %v1797, 0.0
    %v1815 = vand.u32 %v1797, 2147483648
    %v1816 = vsel %vm1814, %v1815, %v1813
    %v1817 = vrsqrt.pop %v1798
    %v1818 = vmul.f32 %v1817, %v1798
    %v1819 = vmul.f32 %v1818, %v1817
    %v1820 = vmul.f32 0.5, %v1819
    %v1821 = vsub.f32 1.5, %v1820
    %v1822 = vmul.f32 %v1817, %v1821
    %v1823 = vmul.f32 %v1798, %v1822
    %vm1824 = vcmp.eq.f32.partialorder %v1798, inf
    %v1825 = vsel %vm1824, %v1798, %v1823
    %vm1826 = vcmp.eq.f32.partialorder %v1798, 0.0
    %v1827 = vand.u32 %v1798, 2147483648
    %v1828 = vsel %vm1826, %v1827, %v1825
    %v1829 = vrsqrt.pop %v1799
    %v1830 = vmul.f32 %v1829, %v1799
    %v1831 = vmul.f32 %v1830, %v1829
    %v1832 = vmul.f32 0.5, %v1831
    %v1833 = vsub.f32 1.5, %v1832
    %v1834 = vmul.f32 %v1829, %v1833
    %v1835 = vmul.f32 %v1799, %v1834
    %vm1836 = vcmp.eq.f32.partialorder %v1799, inf
    %v1837 = vsel %vm1836, %v1799, %v1835
    %vm1838 = vcmp.eq.f32.partialorder %v1799, 0.0
    %v1839 = vand.u32 %v1799, 2147483648
    %v1840 = vsel %vm1838, %v1839, %v1837
    %v1841 = vrsqrt.pop %v1800
    %v1842 = vmul.f32 %v1841, %v1800
    %v1843 = vmul.f32 %v1842, %v1841
    %v1844 = vmul.f32 0.5, %v1843
    %v1845 = vsub.f32 1.5, %v1844
    %v1846 = vmul.f32 %v1841, %v1845
    %v1847 = vmul.f32 %v1800, %v1846
    %vm1848 = vcmp.eq.f32.partialorder %v1800, inf
    %v1849 = vsel %vm1848, %v1800, %v1847
    %vm1850 = vcmp.eq.f32.partialorder %v1800, 0.0
    %v1851 = vand.u32 %v1800, 2147483648
    %v1852 = vsel %vm1850, %v1851, %v1849
    %v1853 = vrsqrt.pop %v1801
    %v1854 = vmul.f32 %v1853, %v1801
    %v1855 = vmul.f32 %v1854, %v1853
    %v1856 = vmul.f32 0.5, %v1855
    %v1857 = vsub.f32 1.5, %v1856
    %v1858 = vmul.f32 %v1853, %v1857
    %v1859 = vmul.f32 %v1801, %v1858
    %vm1860 = vcmp.eq.f32.partialorder %v1801, inf
    %v1861 = vsel %vm1860, %v1801, %v1859
    %vm1862 = vcmp.eq.f32.partialorder %v1801, 0.0
    %v1863 = vand.u32 %v1801, 2147483648
    %v1864 = vsel %vm1862, %v1863, %v1861
    %v1865 = vrsqrt.pop %v1802
    %v1866 = vmul.f32 %v1865, %v1802
    %v1867 = vmul.f32 %v1866, %v1865
    %v1868 = vmul.f32 0.5, %v1867
    %v1869 = vsub.f32 1.5, %v1868
    %v1870 = vmul.f32 %v1865, %v1869
    %v1871 = vmul.f32 %v1802, %v1870
    %vm1872 = vcmp.eq.f32.partialorder %v1802, inf
    %v1873 = vsel %vm1872, %v1802, %v1871
    %vm1874 = vcmp.eq.f32.partialorder %v1802, 0.0
    %v1875 = vand.u32 %v1802, 2147483648
    %v1876 = vsel %vm1874, %v1875, %v1873
    %v1877 = vrsqrt.pop %v1803
    %v1878 = vmul.f32 %v1877, %v1803
    %v1879 = vmul.f32 %v1878, %v1877
    %v1880 = vmul.f32 0.5, %v1879
    %v1881 = vsub.f32 1.5, %v1880
    %v1882 = vmul.f32 %v1877, %v1881
    %v1883 = vmul.f32 %v1803, %v1882
    %vm1884 = vcmp.eq.f32.partialorder %v1803, inf
    %v1885 = vsel %vm1884, %v1803, %v1883
    %vm1886 = vcmp.eq.f32.partialorder %v1803, 0.0
    %v1887 = vand.u32 %v1803, 2147483648
    %v1888 = vsel %vm1886, %v1887, %v1885
    %v1889 = vrsqrt.pop %v1804
    %v1890 = vmul.f32 %v1889, %v1804
    %v1891 = vmul.f32 %v1890, %v1889
    %v1892 = vmul.f32 0.5, %v1891
    %v1893 = vsub.f32 1.5, %v1892
    %v1894 = vmul.f32 %v1889, %v1893
    %v1895 = vmul.f32 %v1804, %v1894
    %vm1896 = vcmp.eq.f32.partialorder %v1804, inf
    %v1897 = vsel %vm1896, %v1804, %v1895
    %vm1898 = vcmp.eq.f32.partialorder %v1804, 0.0
    %v1899 = vand.u32 %v1804, 2147483648
    %v1900 = vsel %vm1898, %v1899, %v1897
    %1909 = vrot.lane.b32.xlu0 %v1725, 124
    %v1910 = vpop.permute.xlu0 %1909
    %1911 = vrot.lane.b32.xlu0 %v1726, 124
    %v1912 = vpop.permute.xlu0 %1911
    %1913 = vrot.lane.b32.xlu0 %v1727, 124
    %v1914 = vpop.permute.xlu0 %1913
    %1915 = vrot.lane.b32.xlu0 %v1728, 124
    %v1916 = vpop.permute.xlu0 %1915
    %1917 = vrot.lane.b32.xlu0 %v1729, 124
    %v1918 = vpop.permute.xlu0 %1917
    %1919 = vrot.lane.b32.xlu0 %v1730, 124
    %v1920 = vpop.permute.xlu0 %1919
    %1921 = vrot.lane.b32.xlu0 %v1731, 124
    %v1922 = vpop.permute.xlu0 %1921
    %1923 = vrot.lane.b32.xlu0 %v1732, 124
    %v1924 = vpop.permute.xlu0 %1923
    %v1933 = vmax.f32 %v1709, %v1910
    %v1934 = vmax.f32 %v1710, %v1912
    %v1935 = vmax.f32 %v1711, %v1914
    %v1936 = vmax.f32 %v1712, %v1916
    %v1937 = vmax.f32 %v1713, %v1918
    %v1938 = vmax.f32 %v1714, %v1920
    %v1939 = vmax.f32 %v1715, %v1922
    %v1940 = vmax.f32 %v1716, %v1924
    %v1941 = vmin.f32 %v1933, 0.0
    %v1942 = vmin.f32 %v1934, 0.0
    %v1943 = vmin.f32 %v1935, 0.0
    %v1944 = vmin.f32 %v1936, 0.0
    %v1945 = vmin.f32 %v1937, 0.0
    %v1946 = vmin.f32 %v1938, 0.0
    %v1947 = vmin.f32 %v1939, 0.0
    %v1948 = vmin.f32 %v1940, 0.0
    %v1949 = vadd.f32 %v1816, %v1941
    %v1950 = vadd.f32 %v1828, %v1942
    %v1951 = vadd.f32 %v1840, %v1943
    %v1952 = vadd.f32 %v1852, %v1944
    %v1953 = vadd.f32 %v1864, %v1945
    %v1954 = vadd.f32 %v1876, %v1946
    %v1955 = vadd.f32 %v1888, %v1947
    %v1956 = vadd.f32 %v1900, %v1948
    %1965 = vrot.lane.b32.xlu0 %v1949, 124
    %v1966 = vpop.permute.xlu0 %1965
    %1967 = vrot.lane.b32.xlu0 %v1950, 124
    %v1968 = vpop.permute.xlu0 %1967
    %1969 = vrot.lane.b32.xlu0 %v1951, 124
    %v1970 = vpop.permute.xlu0 %1969
    %1971 = vrot.lane.b32.xlu0 %v1952, 124
    %v1972 = vpop.permute.xlu0 %1971
    %1973 = vrot.lane.b32.xlu0 %v1953, 124
    %v1974 = vpop.permute.xlu0 %1973
    %1975 = vrot.lane.b32.xlu0 %v1954, 124
    %v1976 = vpop.permute.xlu0 %1975
    %1977 = vrot.lane.b32.xlu0 %v1955, 124
    %v1978 = vpop.permute.xlu0 %1977
    %1979 = vrot.lane.b32.xlu0 %v1956, 124
    %v1980 = vpop.permute.xlu0 %1979
    %vm1989 = vcmask 31744
    %v1990 = vsel %vm1989, %v1693, %v1966
    %v1991 = vsel %vm1989, %v1694, %v1968
    %v1992 = vsel %vm1989, %v1695, %v1970
    %v1993 = vsel %vm1989, %v1696, %v1972
    %v1994 = vsel %vm1989, %v1697, %v1974
    %v1995 = vsel %vm1989, %v1698, %v1976
    %v1996 = vsel %vm1989, %v1699, %v1978
    %v1997 = vsel %vm1989, %v1700, %v1980
    %v1998 = vstv %s1431
    %v1999 = vmul.f32 %v1990, %v1998
    %v2000 = vmul.f32 %v1991, %v1998
    %v2001 = vmul.f32 %v1992, %v1998
    %v2002 = vmul.f32 %v1993, %v1998
    %v2003 = vmul.f32 %v1994, %v1998
    %v2004 = vmul.f32 %v1995, %v1998
    %v2005 = vmul.f32 %v1996, %v1998
    %v2006 = vmul.f32 %v1997, %v1998
    %v2007 = vmax.f32 %v1999, 0.0
    %v2008 = vmax.f32 %v2000, 0.0
    %v2009 = vmax.f32 %v2001, 0.0
    %v2010 = vmax.f32 %v2002, 0.0
    %v2011 = vmax.f32 %v2003, 0.0
    %v2012 = vmax.f32 %v2004, 0.0
    %v2013 = vmax.f32 %v2005, 0.0
    %v2014 = vmax.f32 %v2006, 0.0
    %v2015 = vmin.f32 %v2007, 1.0
    %v2016 = vmin.f32 %v2008, 1.0
    %v2017 = vmin.f32 %v2009, 1.0
    %v2018 = vmin.f32 %v2010, 1.0
    %v2019 = vmin.f32 %v2011, 1.0
    %v2020 = vmin.f32 %v2012, 1.0
    %v2021 = vmin.f32 %v2013, 1.0
    %v2022 = vmin.f32 %v2014, 1.0
    %v2023 = vsub.f32 1.0, %v2015
    %v2024 = vsub.f32 1.0, %v2016
    %v2025 = vsub.f32 1.0, %v2017
    %v2026 = vsub.f32 1.0, %v2018
    %v2027 = vsub.f32 1.0, %v2019
    %v2028 = vsub.f32 1.0, %v2020
    %v2029 = vsub.f32 1.0, %v2021
    %v2030 = vsub.f32 1.0, %v2022
    %2032 = vset.pattern.permute.xlu0 0
    %2033 = vperm.xlu0 %2032, %v1440
    %v2034 = vpop.permute.xlu0 %2033
    %2037 = vset.pattern.permute.xlu0 0
    %2038 = vperm.xlu0 %2037, %v1441
    %v2039 = vpop.permute.xlu0 %2038
    %2042 = vset.pattern.permute.xlu0 0
    %2043 = vperm.xlu0 %2042, %v1442
    %v2044 = vpop.permute.xlu0 %2043
    %2047 = vset.pattern.permute.xlu0 0
    %2048 = vperm.xlu0 %2047, %v1443
    %v2049 = vpop.permute.xlu0 %2048
    %2052 = vset.pattern.permute.xlu0 0
    %2053 = vperm.xlu0 %2052, %v1444
    %v2054 = vpop.permute.xlu0 %2053
    %2057 = vset.pattern.permute.xlu0 0
    %2058 = vperm.xlu0 %2057, %v1445
    %v2059 = vpop.permute.xlu0 %2058
    %2062 = vset.pattern.permute.xlu0 0
    %2063 = vperm.xlu0 %2062, %v1446
    %v2064 = vpop.permute.xlu0 %2063
    %2067 = vset.pattern.permute.xlu0 0
    %2068 = vperm.xlu0 %2067, %v1447
    %v2069 = vpop.permute.xlu0 %2068
    %v2071 = vperm.slane %v1430, 1
    %v2072 = vsub.f32 %v2034, %v2071
    %v2073 = vsub.f32 %v2039, %v2071
    %v2074 = vsub.f32 %v2044, %v2071
    %v2075 = vsub.f32 %v2049, %v2071
    %v2076 = vsub.f32 %v2054, %v2071
    %v2077 = vsub.f32 %v2059, %v2071
    %v2078 = vsub.f32 %v2064, %v2071
    %v2079 = vsub.f32 %v2069, %v2071
    %2080 = vset.pattern.permute.xlu0 1
    %2081 = vperm.xlu0 %2080, %v1440
    %v2082 = vpop.permute.xlu0 %2081
    %2084 = vset.pattern.permute.xlu0 1
    %2085 = vperm.xlu0 %2084, %v1441
    %v2086 = vpop.permute.xlu0 %2085
    %2088 = vset.pattern.permute.xlu0 1
    %2089 = vperm.xlu0 %2088, %v1442
    %v2090 = vpop.permute.xlu0 %2089
    %2092 = vset.pattern.permute.xlu0 1
    %2093 = vperm.xlu0 %2092, %v1443
    %v2094 = vpop.permute.xlu0 %2093
    %2096 = vset.pattern.permute.xlu0 1
    %2097 = vperm.xlu0 %2096, %v1444
    %v2098 = vpop.permute.xlu0 %2097
    %2100 = vset.pattern.permute.xlu0 1
    %2101 = vperm.xlu0 %2100, %v1445
    %v2102 = vpop.permute.xlu0 %2101
    %2104 = vset.pattern.permute.xlu0 1
    %2105 = vperm.xlu0 %2104, %v1446
    %v2106 = vpop.permute.xlu0 %2105
    %2108 = vset.pattern.permute.xlu0 1
    %2109 = vperm.xlu0 %2108, %v1447
    %v2110 = vpop.permute.xlu0 %2109
    %v2112 = vsub.f32 %v2082, %v2071
    %v2113 = vsub.f32 %v2086, %v2071
    %v2114 = vsub.f32 %v2090, %v2071
    %v2115 = vsub.f32 %v2094, %v2071
    %v2116 = vsub.f32 %v2098, %v2071
    %v2117 = vsub.f32 %v2102, %v2071
    %v2118 = vsub.f32 %v2106, %v2071
    %v2119 = vsub.f32 %v2110, %v2071
    %v2120 = vmul.f32 %v2072, %v2072
    %v2121 = vmul.f32 %v2073, %v2073
    %v2122 = vmul.f32 %v2074, %v2074
    %v2123 = vmul.f32 %v2075, %v2075
    %v2124 = vmul.f32 %v2076, %v2076
    %v2125 = vmul.f32 %v2077, %v2077
    %v2126 = vmul.f32 %v2078, %v2078
    %v2127 = vmul.f32 %v2079, %v2079
    %v2128 = vmul.f32 %v2112, %v2112
    %v2129 = vmul.f32 %v2113, %v2113
    %v2130 = vmul.f32 %v2114, %v2114
    %v2131 = vmul.f32 %v2115, %v2115
    %v2132 = vmul.f32 %v2116, %v2116
    %v2133 = vmul.f32 %v2117, %v2117
    %v2134 = vmul.f32 %v2118, %v2118
    %v2135 = vmul.f32 %v2119, %v2119
    %2144 = vrot.lane.b32.xlu0 %v2128, 124
    %v2145 = vpop.permute.xlu0 %2144
    %2146 = vrot.lane.b32.xlu0 %v2129, 124
    %v2147 = vpop.permute.xlu0 %2146
    %2148 = vrot.lane.b32.xlu0 %v2130, 124
    %v2149 = vpop.permute.xlu0 %2148
    %2150 = vrot.lane.b32.xlu0 %v2131, 124
    %v2151 = vpop.permute.xlu0 %2150
    %2152 = vrot.lane.b32.xlu0 %v2132, 124
    %v2153 = vpop.permute.xlu0 %2152
    %2154 = vrot.lane.b32.xlu0 %v2133, 124
    %v2155 = vpop.permute.xlu0 %2154
    %2156 = vrot.lane.b32.xlu0 %v2134, 124
    %v2157 = vpop.permute.xlu0 %2156
    %2158 = vrot.lane.b32.xlu0 %v2135, 124
    %v2159 = vpop.permute.xlu0 %2158
    %v2168 = vadd.f32 %v2120, %v2145
    %v2169 = vadd.f32 %v2121, %v2147
    %v2170 = vadd.f32 %v2122, %v2149
    %v2171 = vadd.f32 %v2123, %v2151
    %v2172 = vadd.f32 %v2124, %v2153
    %v2173 = vadd.f32 %v2125, %v2155
    %v2174 = vadd.f32 %v2126, %v2157
    %v2175 = vadd.f32 %v2127, %v2159
    %v2176 = vrsqrt.pop %v2168
    %v2177 = vmul.f32 %v2176, %v2168
    %v2178 = vmul.f32 %v2177, %v2176
    %v2179 = vmul.f32 0.5, %v2178
    %v2180 = vsub.f32 1.5, %v2179
    %v2181 = vmul.f32 %v2176, %v2180
    %v2182 = vmul.f32 %v2168, %v2181
    %vm2183 = vcmp.eq.f32.partialorder %v2168, inf
    %v2184 = vsel %vm2183, %v2168, %v2182
    %vm2185 = vcmp.eq.f32.partialorder %v2168, 0.0
    %v2186 = vand.u32 %v2168, 2147483648
    %v2187 = vsel %vm2185, %v2186, %v2184
    %v2188 = vrsqrt.pop %v2169
    %v2189 = vmul.f32 %v2188, %v2169
    %v2190 = vmul.f32 %v2189, %v2188
    %v2191 = vmul.f32 0.5, %v2190
    %v2192 = vsub.f32 1.5, %v2191
    %v2193 = vmul.f32 %v2188, %v2192
    %v2194 = vmul.f32 %v2169, %v2193
    %vm2195 = vcmp.eq.f32.partialorder %v2169, inf
    %v2196 = vsel %vm2195, %v2169, %v2194
    %vm2197 = vcmp.eq.f32.partialorder %v2169, 0.0
    %v2198 = vand.u32 %v2169, 2147483648
    %v2199 = vsel %vm2197, %v2198, %v2196
    %v2200 = vrsqrt.pop %v2170
    %v2201 = vmul.f32 %v2200, %v2170
    %v2202 = vmul.f32 %v2201, %v2200
    %v2203 = vmul.f32 0.5, %v2202
    %v2204 = vsub.f32 1.5, %v2203
    %v2205 = vmul.f32 %v2200, %v2204
    %v2206 = vmul.f32 %v2170, %v2205
    %vm2207 = vcmp.eq.f32.partialorder %v2170, inf
    %v2208 = vsel %vm2207, %v2170, %v2206
    %vm2209 = vcmp.eq.f32.partialorder %v2170, 0.0
    %v2210 = vand.u32 %v2170, 2147483648
    %v2211 = vsel %vm2209, %v2210, %v2208
    %v2212 = vrsqrt.pop %v2171
    %v2213 = vmul.f32 %v2212, %v2171
    %v2214 = vmul.f32 %v2213, %v2212
    %v2215 = vmul.f32 0.5, %v2214
    %v2216 = vsub.f32 1.5, %v2215
    %v2217 = vmul.f32 %v2212, %v2216
    %v2218 = vmul.f32 %v2171, %v2217
    %vm2219 = vcmp.eq.f32.partialorder %v2171, inf
    %v2220 = vsel %vm2219, %v2171, %v2218
    %vm2221 = vcmp.eq.f32.partialorder %v2171, 0.0
    %v2222 = vand.u32 %v2171, 2147483648
    %v2223 = vsel %vm2221, %v2222, %v2220
    %v2224 = vrsqrt.pop %v2172
    %v2225 = vmul.f32 %v2224, %v2172
    %v2226 = vmul.f32 %v2225, %v2224
    %v2227 = vmul.f32 0.5, %v2226
    %v2228 = vsub.f32 1.5, %v2227
    %v2229 = vmul.f32 %v2224, %v2228
    %v2230 = vmul.f32 %v2172, %v2229
    %vm2231 = vcmp.eq.f32.partialorder %v2172, inf
    %v2232 = vsel %vm2231, %v2172, %v2230
    %vm2233 = vcmp.eq.f32.partialorder %v2172, 0.0
    %v2234 = vand.u32 %v2172, 2147483648
    %v2235 = vsel %vm2233, %v2234, %v2232
    %v2236 = vrsqrt.pop %v2173
    %v2237 = vmul.f32 %v2236, %v2173
    %v2238 = vmul.f32 %v2237, %v2236
    %v2239 = vmul.f32 0.5, %v2238
    %v2240 = vsub.f32 1.5, %v2239
    %v2241 = vmul.f32 %v2236, %v2240
    %v2242 = vmul.f32 %v2173, %v2241
    %vm2243 = vcmp.eq.f32.partialorder %v2173, inf
    %v2244 = vsel %vm2243, %v2173, %v2242
    %vm2245 = vcmp.eq.f32.partialorder %v2173, 0.0
    %v2246 = vand.u32 %v2173, 2147483648
    %v2247 = vsel %vm2245, %v2246, %v2244
    %v2248 = vrsqrt.pop %v2174
    %v2249 = vmul.f32 %v2248, %v2174
    %v2250 = vmul.f32 %v2249, %v2248
    %v2251 = vmul.f32 0.5, %v2250
    %v2252 = vsub.f32 1.5, %v2251
    %v2253 = vmul.f32 %v2248, %v2252
    %v2254 = vmul.f32 %v2174, %v2253
    %vm2255 = vcmp.eq.f32.partialorder %v2174, inf
    %v2256 = vsel %vm2255, %v2174, %v2254
    %vm2257 = vcmp.eq.f32.partialorder %v2174, 0.0
    %v2258 = vand.u32 %v2174, 2147483648
    %v2259 = vsel %vm2257, %v2258, %v2256
    %v2260 = vrsqrt.pop %v2175
    %v2261 = vmul.f32 %v2260, %v2175
    %v2262 = vmul.f32 %v2261, %v2260
    %v2263 = vmul.f32 0.5, %v2262
    %v2264 = vsub.f32 1.5, %v2263
    %v2265 = vmul.f32 %v2260, %v2264
    %v2266 = vmul.f32 %v2175, %v2265
    %vm2267 = vcmp.eq.f32.partialorder %v2175, inf
    %v2268 = vsel %vm2267, %v2175, %v2266
    %vm2269 = vcmp.eq.f32.partialorder %v2175, 0.0
    %v2270 = vand.u32 %v2175, 2147483648
    %v2271 = vsel %vm2269, %v2270, %v2268
    %2273 = vrot.lane.b32.xlu0 %v2071, 112
    %v2274 = vpop.permute.xlu0 %2273
    %v2276 = vsub.f32 %v2187, %v2274
    %v2277 = vsub.f32 %v2199, %v2274
    %v2278 = vsub.f32 %v2211, %v2274
    %v2279 = vsub.f32 %v2223, %v2274
    %v2280 = vsub.f32 %v2235, %v2274
    %v2281 = vsub.f32 %v2247, %v2274
    %v2282 = vsub.f32 %v2259, %v2274
    %v2283 = vsub.f32 %v2271, %v2274
    %v2284 = vand.u32 2147483647, %v2072
    %v2285 = vand.u32 2147483647, %v2073
    %v2286 = vand.u32 2147483647, %v2074
    %v2287 = vand.u32 2147483647, %v2075
    %v2288 = vand.u32 2147483647, %v2076
    %v2289 = vand.u32 2147483647, %v2077
    %v2290 = vand.u32 2147483647, %v2078
    %v2291 = vand.u32 2147483647, %v2079
    %v2292 = vsub.f32 %v2284, %v2274
    %v2293 = vsub.f32 %v2285, %v2274
    %v2294 = vsub.f32 %v2286, %v2274
    %v2295 = vsub.f32 %v2287, %v2274
    %v2296 = vsub.f32 %v2288, %v2274
    %v2297 = vsub.f32 %v2289, %v2274
    %v2298 = vsub.f32 %v2290, %v2274
    %v2299 = vsub.f32 %v2291, %v2274
    %v2300 = vand.u32 2147483647, %v2112
    %v2301 = vand.u32 2147483647, %v2113
    %v2302 = vand.u32 2147483647, %v2114
    %v2303 = vand.u32 2147483647, %v2115
    %v2304 = vand.u32 2147483647, %v2116
    %v2305 = vand.u32 2147483647, %v2117
    %v2306 = vand.u32 2147483647, %v2118
    %v2307 = vand.u32 2147483647, %v2119
    %v2308 = vsub.f32 %v2300, %v2274
    %v2309 = vsub.f32 %v2301, %v2274
    %v2310 = vsub.f32 %v2302, %v2274
    %v2311 = vsub.f32 %v2303, %v2274
    %v2312 = vsub.f32 %v2304, %v2274
    %v2313 = vsub.f32 %v2305, %v2274
    %v2314 = vsub.f32 %v2306, %v2274
    %v2315 = vsub.f32 %v2307, %v2274
    %v2316 = vmax.f32 %v2292, 0.0
    %v2317 = vmax.f32 %v2293, 0.0
    %v2318 = vmax.f32 %v2294, 0.0
    %v2319 = vmax.f32 %v2295, 0.0
    %v2320 = vmax.f32 %v2296, 0.0
    %v2321 = vmax.f32 %v2297, 0.0
    %v2322 = vmax.f32 %v2298, 0.0
    %v2323 = vmax.f32 %v2299, 0.0
    %v2324 = vmul.f32 %v2316, %v2316
    %v2325 = vmul.f32 %v2317, %v2317
    %v2326 = vmul.f32 %v2318, %v2318
    %v2327 = vmul.f32 %v2319, %v2319
    %v2328 = vmul.f32 %v2320, %v2320
    %v2329 = vmul.f32 %v2321, %v2321
    %v2330 = vmul.f32 %v2322, %v2322
    %v2331 = vmul.f32 %v2323, %v2323
    %v2332 = vmax.f32 %v2308, 0.0
    %v2333 = vmax.f32 %v2309, 0.0
    %v2334 = vmax.f32 %v2310, 0.0
    %v2335 = vmax.f32 %v2311, 0.0
    %v2336 = vmax.f32 %v2312, 0.0
    %v2337 = vmax.f32 %v2313, 0.0
    %v2338 = vmax.f32 %v2314, 0.0
    %v2339 = vmax.f32 %v2315, 0.0
    %v2340 = vmul.f32 %v2332, %v2332
    %v2341 = vmul.f32 %v2333, %v2333
    %v2342 = vmul.f32 %v2334, %v2334
    %v2343 = vmul.f32 %v2335, %v2335
    %v2344 = vmul.f32 %v2336, %v2336
    %v2345 = vmul.f32 %v2337, %v2337
    %v2346 = vmul.f32 %v2338, %v2338
    %v2347 = vmul.f32 %v2339, %v2339
    %2356 = vrot.lane.b32.xlu0 %v2340, 124
    %v2357 = vpop.permute.xlu0 %2356
    %2358 = vrot.lane.b32.xlu0 %v2341, 124
    %v2359 = vpop.permute.xlu0 %2358
    %2360 = vrot.lane.b32.xlu0 %v2342, 124
    %v2361 = vpop.permute.xlu0 %2360
    %2362 = vrot.lane.b32.xlu0 %v2343, 124
    %v2363 = vpop.permute.xlu0 %2362
    %2364 = vrot.lane.b32.xlu0 %v2344, 124
    %v2365 = vpop.permute.xlu0 %2364
    %2366 = vrot.lane.b32.xlu0 %v2345, 124
    %v2367 = vpop.permute.xlu0 %2366
    %2368 = vrot.lane.b32.xlu0 %v2346, 124
    %v2369 = vpop.permute.xlu0 %2368
    %2370 = vrot.lane.b32.xlu0 %v2347, 124
    %v2371 = vpop.permute.xlu0 %2370
    %v2380 = vadd.f32 %v2324, %v2357
    %v2381 = vadd.f32 %v2325, %v2359
    %v2382 = vadd.f32 %v2326, %v2361
    %v2383 = vadd.f32 %v2327, %v2363
    %v2384 = vadd.f32 %v2328, %v2365
    %v2385 = vadd.f32 %v2329, %v2367
    %v2386 = vadd.f32 %v2330, %v2369
    %v2387 = vadd.f32 %v2331, %v2371
    %v2388 = vrsqrt.pop %v2380
    %v2389 = vmul.f32 %v2388, %v2380
    %v2390 = vmul.f32 %v2389, %v2388
    %v2391 = vmul.f32 0.5, %v2390
    %v2392 = vsub.f32 1.5, %v2391
    %v2393 = vmul.f32 %v2388, %v2392
    %v2394 = vmul.f32 %v2380, %v2393
    %vm2395 = vcmp.eq.f32.partialorder %v2380, inf
    %v2396 = vsel %vm2395, %v2380, %v2394
    %vm2397 = vcmp.eq.f32.partialorder %v2380, 0.0
    %v2398 = vand.u32 %v2380, 2147483648
    %v2399 = vsel %vm2397, %v2398, %v2396
    %v2400 = vrsqrt.pop %v2381
    %v2401 = vmul.f32 %v2400, %v2381
    %v2402 = vmul.f32 %v2401, %v2400
    %v2403 = vmul.f32 0.5, %v2402
    %v2404 = vsub.f32 1.5, %v2403
    %v2405 = vmul.f32 %v2400, %v2404
    %v2406 = vmul.f32 %v2381, %v2405
    %vm2407 = vcmp.eq.f32.partialorder %v2381, inf
    %v2408 = vsel %vm2407, %v2381, %v2406
    %vm2409 = vcmp.eq.f32.partialorder %v2381, 0.0
    %v2410 = vand.u32 %v2381, 2147483648
    %v2411 = vsel %vm2409, %v2410, %v2408
    %v2412 = vrsqrt.pop %v2382
    %v2413 = vmul.f32 %v2412, %v2382
    %v2414 = vmul.f32 %v2413, %v2412
    %v2415 = vmul.f32 0.5, %v2414
    %v2416 = vsub.f32 1.5, %v2415
    %v2417 = vmul.f32 %v2412, %v2416
    %v2418 = vmul.f32 %v2382, %v2417
    %vm2419 = vcmp.eq.f32.partialorder %v2382, inf
    %v2420 = vsel %vm2419, %v2382, %v2418
    %vm2421 = vcmp.eq.f32.partialorder %v2382, 0.0
    %v2422 = vand.u32 %v2382, 2147483648
    %v2423 = vsel %vm2421, %v2422, %v2420
    %v2424 = vrsqrt.pop %v2383
    %v2425 = vmul.f32 %v2424, %v2383
    %v2426 = vmul.f32 %v2425, %v2424
    %v2427 = vmul.f32 0.5, %v2426
    %v2428 = vsub.f32 1.5, %v2427
    %v2429 = vmul.f32 %v2424, %v2428
    %v2430 = vmul.f32 %v2383, %v2429
    %vm2431 = vcmp.eq.f32.partialorder %v2383, inf
    %v2432 = vsel %vm2431, %v2383, %v2430
    %vm2433 = vcmp.eq.f32.partialorder %v2383, 0.0
    %v2434 = vand.u32 %v2383, 2147483648
    %v2435 = vsel %vm2433, %v2434, %v2432
    %v2436 = vrsqrt.pop %v2384
    %v2437 = vmul.f32 %v2436, %v2384
    %v2438 = vmul.f32 %v2437, %v2436
    %v2439 = vmul.f32 0.5, %v2438
    %v2440 = vsub.f32 1.5, %v2439
    %v2441 = vmul.f32 %v2436, %v2440
    %v2442 = vmul.f32 %v2384, %v2441
    %vm2443 = vcmp.eq.f32.partialorder %v2384, inf
    %v2444 = vsel %vm2443, %v2384, %v2442
    %vm2445 = vcmp.eq.f32.partialorder %v2384, 0.0
    %v2446 = vand.u32 %v2384, 2147483648
    %v2447 = vsel %vm2445, %v2446, %v2444
    %v2448 = vrsqrt.pop %v2385
    %v2449 = vmul.f32 %v2448, %v2385
    %v2450 = vmul.f32 %v2449, %v2448
    %v2451 = vmul.f32 0.5, %v2450
    %v2452 = vsub.f32 1.5, %v2451
    %v2453 = vmul.f32 %v2448, %v2452
    %v2454 = vmul.f32 %v2385, %v2453
    %vm2455 = vcmp.eq.f32.partialorder %v2385, inf
    %v2456 = vsel %vm2455, %v2385, %v2454
    %vm2457 = vcmp.eq.f32.partialorder %v2385, 0.0
    %v2458 = vand.u32 %v2385, 2147483648
    %v2459 = vsel %vm2457, %v2458, %v2456
    %v2460 = vrsqrt.pop %v2386
    %v2461 = vmul.f32 %v2460, %v2386
    %v2462 = vmul.f32 %v2461, %v2460
    %v2463 = vmul.f32 0.5, %v2462
    %v2464 = vsub.f32 1.5, %v2463
    %v2465 = vmul.f32 %v2460, %v2464
    %v2466 = vmul.f32 %v2386, %v2465
    %vm2467 = vcmp.eq.f32.partialorder %v2386, inf
    %v2468 = vsel %vm2467, %v2386, %v2466
    %vm2469 = vcmp.eq.f32.partialorder %v2386, 0.0
    %v2470 = vand.u32 %v2386, 2147483648
    %v2471 = vsel %vm2469, %v2470, %v2468
    %v2472 = vrsqrt.pop %v2387
    %v2473 = vmul.f32 %v2472, %v2387
    %v2474 = vmul.f32 %v2473, %v2472
    %v2475 = vmul.f32 0.5, %v2474
    %v2476 = vsub.f32 1.5, %v2475
    %v2477 = vmul.f32 %v2472, %v2476
    %v2478 = vmul.f32 %v2387, %v2477
    %vm2479 = vcmp.eq.f32.partialorder %v2387, inf
    %v2480 = vsel %vm2479, %v2387, %v2478
    %vm2481 = vcmp.eq.f32.partialorder %v2387, 0.0
    %v2482 = vand.u32 %v2387, 2147483648
    %v2483 = vsel %vm2481, %v2482, %v2480
    %2492 = vrot.lane.b32.xlu0 %v2308, 124
    %v2493 = vpop.permute.xlu0 %2492
    %2494 = vrot.lane.b32.xlu0 %v2309, 124
    %v2495 = vpop.permute.xlu0 %2494
    %2496 = vrot.lane.b32.xlu0 %v2310, 124
    %v2497 = vpop.permute.xlu0 %2496
    %2498 = vrot.lane.b32.xlu0 %v2311, 124
    %v2499 = vpop.permute.xlu0 %2498
    %2500 = vrot.lane.b32.xlu0 %v2312, 124
    %v2501 = vpop.permute.xlu0 %2500
    %2502 = vrot.lane.b32.xlu0 %v2313, 124
    %v2503 = vpop.permute.xlu0 %2502
    %2504 = vrot.lane.b32.xlu0 %v2314, 124
    %v2505 = vpop.permute.xlu0 %2504
    %2506 = vrot.lane.b32.xlu0 %v2315, 124
    %v2507 = vpop.permute.xlu0 %2506
    %v2516 = vmax.f32 %v2292, %v2493
    %v2517 = vmax.f32 %v2293, %v2495
    %v2518 = vmax.f32 %v2294, %v2497
    %v2519 = vmax.f32 %v2295, %v2499
    %v2520 = vmax.f32 %v2296, %v2501
    %v2521 = vmax.f32 %v2297, %v2503
    %v2522 = vmax.f32 %v2298, %v2505
    %v2523 = vmax.f32 %v2299, %v2507
    %v2524 = vmin.f32 %v2516, 0.0
    %v2525 = vmin.f32 %v2517, 0.0
    %v2526 = vmin.f32 %v2518, 0.0
    %v2527 = vmin.f32 %v2519, 0.0
    %v2528 = vmin.f32 %v2520, 0.0
    %v2529 = vmin.f32 %v2521, 0.0
    %v2530 = vmin.f32 %v2522, 0.0
    %v2531 = vmin.f32 %v2523, 0.0
    %v2532 = vadd.f32 %v2399, %v2524
    %v2533 = vadd.f32 %v2411, %v2525
    %v2534 = vadd.f32 %v2423, %v2526
    %v2535 = vadd.f32 %v2435, %v2527
    %v2536 = vadd.f32 %v2447, %v2528
    %v2537 = vadd.f32 %v2459, %v2529
    %v2538 = vadd.f32 %v2471, %v2530
    %v2539 = vadd.f32 %v2483, %v2531
    %2548 = vrot.lane.b32.xlu0 %v2532, 124
    %v2549 = vpop.permute.xlu0 %2548
    %2550 = vrot.lane.b32.xlu0 %v2533, 124
    %v2551 = vpop.permute.xlu0 %2550
    %2552 = vrot.lane.b32.xlu0 %v2534, 124
    %v2553 = vpop.permute.xlu0 %2552
    %2554 = vrot.lane.b32.xlu0 %v2535, 124
    %v2555 = vpop.permute.xlu0 %2554
    %2556 = vrot.lane.b32.xlu0 %v2536, 124
    %v2557 = vpop.permute.xlu0 %2556
    %2558 = vrot.lane.b32.xlu0 %v2537, 124
    %v2559 = vpop.permute.xlu0 %2558
    %2560 = vrot.lane.b32.xlu0 %v2538, 124
    %v2561 = vpop.permute.xlu0 %2560
    %2562 = vrot.lane.b32.xlu0 %v2539, 124
    %v2563 = vpop.permute.xlu0 %2562
    %v2572 = vsel %vm1989, %v2276, %v2549
    %v2573 = vsel %vm1989, %v2277, %v2551
    %v2574 = vsel %vm1989, %v2278, %v2553
    %v2575 = vsel %vm1989, %v2279, %v2555
    %v2576 = vsel %vm1989, %v2280, %v2557
    %v2577 = vsel %vm1989, %v2281, %v2559
    %v2578 = vsel %vm1989, %v2282, %v2561
    %v2579 = vsel %vm1989, %v2283, %v2563
    %v2580 = vmul.f32 %v2572, %v1998
    %v2581 = vmul.f32 %v2573, %v1998
    %v2582 = vmul.f32 %v2574, %v1998
    %v2583 = vmul.f32 %v2575, %v1998
    %v2584 = vmul.f32 %v2576, %v1998
    %v2585 = vmul.f32 %v2577, %v1998
    %v2586 = vmul.f32 %v2578, %v1998
    %v2587 = vmul.f32 %v2579, %v1998
    %v2588 = vmax.f32 %v2580, 0.0
    %v2589 = vmax.f32 %v2581, 0.0
    %v2590 = vmax.f32 %v2582, 0.0
    %v2591 = vmax.f32 %v2583, 0.0
    %v2592 = vmax.f32 %v2584, 0.0
    %v2593 = vmax.f32 %v2585, 0.0
    %v2594 = vmax.f32 %v2586, 0.0
    %v2595 = vmax.f32 %v2587, 0.0
    %v2596 = vmin.f32 %v2588, 1.0
    %v2597 = vmin.f32 %v2589, 1.0
    %v2598 = vmin.f32 %v2590, 1.0
    %v2599 = vmin.f32 %v2591, 1.0
    %v2600 = vmin.f32 %v2592, 1.0
    %v2601 = vmin.f32 %v2593, 1.0
    %v2602 = vmin.f32 %v2594, 1.0
    %v2603 = vmin.f32 %v2595, 1.0
    %v2604 = vsub.f32 1.0, %v2596
    %v2605 = vsub.f32 1.0, %v2597
    %v2606 = vsub.f32 1.0, %v2598
    %v2607 = vsub.f32 1.0, %v2599
    %v2608 = vsub.f32 1.0, %v2600
    %v2609 = vsub.f32 1.0, %v2601
    %v2610 = vsub.f32 1.0, %v2602
    %v2611 = vsub.f32 1.0, %v2603
    %v2612 = vld [vmem:[%s18] sm:$0x1]
    %v2614 = vperm.slane %v2612, 0
    %2615 = vrot.lane.b32.xlu0 %v2614, 32
    %v2616 = vpop.permute.xlu0 %2615
    %v2618 = vsel %vm1344, %v1334, %v2616
    %v2619 = vld [vmem:[%s14] sm:$0xff]
    %v2620 = vld [vmem:[%s14 + $0x8] sm:$0xff]
    %v2621 = vld [vmem:[%s14 + $0x10] sm:$0xff]
    %v2622 = vld [vmem:[%s14 + $0x18] sm:$0xff]
    %v2623 = vld [vmem:[%s14 + $0x20] sm:$0xff]
    %v2624 = vld [vmem:[%s14 + $0x28] sm:$0xff]
    %v2625 = vld [vmem:[%s14 + $0x30] sm:$0xff]
    %v2626 = vld [vmem:[%s14 + $0x38] sm:$0xff]
    %v2627 = vld [vmem:[%s15] sm:$0x1]
    %v2629 = vperm.slane %v2627, 0
    %v2632 = vsel %vm1383, %v2618, 0
    %2634 = vmatpush.msra.mxu0 0.0
    %2635 = vmatpush.msra.mxu0 0.0
    %2636 = vmatpush.msra.mxu0 0.0
    %2637 = vmatpush.msra.mxu0 0.0
    %2638 = vmatpush.msra.mxu0 0.0
    %2639 = vmatpush.msra.mxu0 0.0
    %2640 = vmatpush.msra.mxu0 0.0
    %2641 = vmatpush.msra.mxu0 0.0
    %2642 = vmatpush.msra.mxu0 %v2626
    %2643 = vmatpush.msra.mxu0 %v2625
    %2644 = vmatpush.msra.mxu0 %v2624
    %2645 = vmatpush.msra.mxu0 %v2623
    %2646 = vmatpush.msra.mxu0 %v2622
    %2647 = vmatpush.msra.mxu0 %v2621
    %2648 = vmatpush.msra.mxu0 %v2620
    %2649 = vmatpush.msra.mxu0 %v2619
    %2650 = vmatmul.f32.gmra.mxu0 %v2632
    %v2651 = vpop.f32.mrf.mxu0
    %v2652 = vadd.f32 %v2629, %v2651
    %2653 = vdwg.mxu0
    %v2654 = vxor.u32 %v2652, 2147483648
    %v2655 = vmul.f32 %v2654, 1.442695
    %v2656 = vpow.pop %v2655
    %v2657 = vadd.f32 %v2656, 1.0
    %v2658 = vrcp.pop %v2657
    %v2659 = vmul.f32 %v2657, %v2658
    %v2660 = vsub.f32 1.0, %v2659
    %v2661 = vmul.f32 %v2658, %v2660
    %v2662 = vadd.f32 %v2658, %v2661
    %vm2663 = vweird.f32 %v2657
    %vm2664 = vweird.f32 %v2658
    %vm2665 = vmor %vm2663, %vm2664
    %v2666 = vsel %vm2665, %v2658, %v2662
    %v2667 = vand.u32 2147483647, %v2657
    %vm2668 = vcmp.eq.f32.partialorder %v2667, 8.507059e+37
    %v2669 = vand.u32 %v2657, 2147483648
    %v2670 = vor.u32 1.1754944e-38, %v2669
    %v2671 = vsel %vm2668, %v2670, %v2666
    %v2672 = vmul.f32 1.0, %v2671
    %v2673 = vld [vmem:[%s16] sm:$0xff]
    %v2674 = vld [vmem:[%s16 + $0x8] sm:$0xff]
    %v2675 = vld [vmem:[%s16 + $0x10] sm:$0xff]
    %v2676 = vld [vmem:[%s16 + $0x18] sm:$0xff]
    %v2677 = vld [vmem:[%s17] sm:$0x1]
    %v2679 = vperm.slane %v2677, 0
    %v2681 = vsel %vm1344, %v2614, 0
    %2683 = vmatpush.msra.mxu0 0.0
    %2684 = vmatpush.msra.mxu0 0.0
    %2685 = vmatpush.msra.mxu0 0.0
    %2686 = vmatpush.msra.mxu0 0.0
    %2687 = vmatpush.msra.mxu0 0.0
    %2688 = vmatpush.msra.mxu0 0.0
    %2689 = vmatpush.msra.mxu0 0.0
    %2690 = vmatpush.msra.mxu0 0.0
    %2691 = vmatpush.msra.mxu0 0.0
    %2692 = vmatpush.msra.mxu0 0.0
    %2693 = vmatpush.msra.mxu0 0.0
    %2694 = vmatpush.msra.mxu0 0.0
    %2695 = vmatpush.msra.mxu0 %v2676
    %2696 = vmatpush.msra.mxu0 %v2675
    %2697 = vmatpush.msra.mxu0 %v2674
    %2698 = vmatpush.msra.mxu0 %v2673
    %2699 = vmatmul.f32.gmra.mxu0 %v2681
    %v2700 = vpop.f32.mrf.mxu0
    %v2701 = vadd.f32 %v2679, %v2700
    %2702 = vdwg.mxu0
    %2704 = vrot.lane.b32.xlu0 %v2701, 64
    %v2705 = vpop.permute.xlu0 %2704
    %v2707 = vsub.f32 %v2652, %v2705
    %v2708 = vmul.f32 %v2672, %v2701
    %2710 = vrot.lane.b32.xlu0 %v2708, 64
    %v2711 = vpop.permute.xlu0 %2710
    %v2713 = vadd.f32 %v2707, %v2711
    %v2714 = vtanh.pop %v2713
    %v2715 = vsub.f32 1.0, %v2672
    %2717 = vrot.lane.b32.xlu0 %v2714, 96
    %v2718 = vpop.permute.xlu0 %2717
    %v2720 = vmul.f32 %v2715, %v2718
    %v2721 = vmul.f32 %v2672, %v2616
    %v2722 = vadd.f32 %v2720, %v2721
    %v2723 = vld [vmem:[%s19] sm:$0xff]
    %v2724 = vld [vmem:[%s19 + $0x8] sm:$0xff]
    %v2725 = vld [vmem:[%s19 + $0x10] sm:$0xff]
    %v2726 = vld [vmem:[%s19 + $0x18] sm:$0xff]
    %v2727 = vld [vmem:[%s20] sm:$0x1]
    %v2729 = vperm.slane %v2727, 0
    %2732 = vrot.lane.b32.xlu0 %v2722, 96
    %v2733 = vpop.permute.xlu0 %2732
    %v2734 = vsel %vm1344, %v2733, 0
    %2736 = vmatpush.msra.mxu0 0.0
    %2737 = vmatpush.msra.mxu0 0.0
    %2738 = vmatpush.msra.mxu0 0.0
    %2739 = vmatpush.msra.mxu0 0.0
    %2740 = vmatpush.msra.mxu0 0.0
    %2741 = vmatpush.msra.mxu0 0.0
    %2742 = vmatpush.msra.mxu0 0.0
    %2743 = vmatpush.msra.mxu0 0.0
    %2744 = vmatpush.msra.mxu0 0.0
    %2745 = vmatpush.msra.mxu0 0.0
    %2746 = vmatpush.msra.mxu0 0.0
    %2747 = vmatpush.msra.mxu0 0.0
    %2748 = vmatpush.msra.mxu0 %v2726
    %2749 = vmatpush.msra.mxu0 %v2725
    %2750 = vmatpush.msra.mxu0 %v2724
    %2751 = vmatpush.msra.mxu0 %v2723
    %2752 = vmatmul.f32.gmra.mxu0 %v2734
    %v2753 = vpop.f32.mrf.mxu0
    %v2754 = vadd.f32 %v2729, %v2753
    %2755 = vdwg.mxu0
    %v2756 = vtanh.pop %v2754
    %v2758 = vrot.slane %v2754, 7
    %2759 = vrot.lane.b32.xlu0 %v2758, 120
    %v2760 = vpop.permute.xlu0 %2759
    %v2762 = vrot.slane %v2754, 6
    %2763 = vrot.lane.b32.xlu0 %v2762, 112
    %v2764 = vpop.permute.xlu0 %2763
    %v2766 = vrot.slane %v2754, 5
    %2767 = vrot.lane.b32.xlu0 %v2766, 104
    %v2768 = vpop.permute.xlu0 %2767
    %vm2770 = vcmask 1040384
    %v2771 = vsel %vm2770, %v2754, %v2760
    %vm2772 = vcmask 1041408
    %v2773 = vsel %vm2772, %v2771, %v2764
    %vm2774 = vcmask 1042432
    %v2775 = vsel %vm2774, %v2773, %v2768
    %vm2776 = vcmask 60416
    %v2777 = vsel %vm2776, %v2775, -inf
    %2778 = vmax.xlane.f32.xlu0 %v2777
    %v2779 = vpop.xlane.xlu0 %2778
    %v2780 = vsub.f32 %v2775, %v2779
    %v2781 = vmul.f32 %v2780, 1.442695
    %v2782 = vpow.pop %v2781
    %v2783 = vsel %vm2776, %v2782, 0.0
    %2784 = vadd.xlane.f32.xlu0 %v2783
    %v2785 = vpop.xlane.xlu0 %2784
    %v2786 = vrcp.pop %v2785
    %v2787 = vmul.f32 %v2782, %v2786
    %vm2788 = vcmask 64512
    %v2790 = vsel %vm2788, %v2023, 0
    %v2793 = vsel %vm2788, %v2024, 0
    %v2796 = vsel %vm2788, %v2025, 0
    %v2799 = vsel %vm2788, %v2026, 0
    %v2802 = vsel %vm2788, %v2027, 0
    %v2805 = vsel %vm2788, %v2028, 0
    %v2808 = vsel %vm2788, %v2029, 0
    %v2811 = vsel %vm2788, %v2030, 0
    %v2814 = vsel %vm2788, %v2787, 0
    %2816 = vmatpush.xpose.msra.mxu0 0.0
    %2817 = vmatpush.xpose.msra.mxu0 0.0
    %2818 = vmatpush.xpose.msra.mxu0 0.0
    %2819 = vmatpush.xpose.msra.mxu0 0.0
    %2820 = vmatpush.xpose.msra.mxu0 0.0
    %2821 = vmatpush.xpose.msra.mxu0 0.0
    %2822 = vmatpush.xpose.msra.mxu0 0.0
    %2823 = vmatpush.xpose.msra.mxu0 0.0
    %2824 = vmatpush.xpose.msra.mxu0 0.0
    %2825 = vmatpush.xpose.msra.mxu0 0.0
    %2826 = vmatpush.xpose.msra.mxu0 0.0
    %2827 = vmatpush.xpose.msra.mxu0 0.0
    %2828 = vmatpush.xpose.msra.mxu0 0.0
    %2829 = vmatpush.xpose.msra.mxu0 0.0
    %2830 = vmatpush.xpose.msra.mxu0 0.0
    %2831 = vmatpush.xpose.msra.mxu0 %v2814
    %2832 = vmatmul.f32.gmra.mxu0 %v2790
    %v2833 = vpop.f32.mrf.mxu0
    %v2834 = vadd.f32 0.0, %v2833
    %2835 = vmatmul.f32.gmra.mxu0 %v2793
    %v2836 = vpop.f32.mrf.mxu0
    %v2837 = vadd.f32 0.0, %v2836
    %2838 = vmatmul.f32.gmra.mxu0 %v2796
    %v2839 = vpop.f32.mrf.mxu0
    %v2840 = vadd.f32 0.0, %v2839
    %2841 = vmatmul.f32.gmra.mxu0 %v2799
    %v2842 = vpop.f32.mrf.mxu0
    %v2843 = vadd.f32 0.0, %v2842
    %2844 = vmatmul.f32.gmra.mxu0 %v2802
    %v2845 = vpop.f32.mrf.mxu0
    %v2846 = vadd.f32 0.0, %v2845
    %2847 = vmatmul.f32.gmra.mxu0 %v2805
    %v2848 = vpop.f32.mrf.mxu0
    %v2849 = vadd.f32 0.0, %v2848
    %2850 = vmatmul.f32.gmra.mxu0 %v2808
    %v2851 = vpop.f32.mrf.mxu0
    %v2852 = vadd.f32 0.0, %v2851
    %2853 = vmatmul.f32.gmra.mxu0 %v2811
    %v2854 = vpop.f32.mrf.mxu0
    %v2855 = vadd.f32 0.0, %v2854
    %2856 = vdwg.mxu0
    %vm2857 = vcmask 322816
    %v2858 = vsel %vm2857, %v2775, -inf
    %2859 = vmax.xlane.f32.xlu0 %v2858
    %v2860 = vpop.xlane.xlu0 %2859
    %v2861 = vsub.f32 %v2775, %v2860
    %v2862 = vmul.f32 %v2861, 1.442695
    %v2863 = vpow.pop %v2862
    %2865 = vrot.lane.b32.xlu0 %v2863, 96
    %v2866 = vpop.permute.xlu0 %2865
    %v2868 = vsel %vm2776, %v2866, 0.0
    %2869 = vadd.xlane.f32.xlu0 %v2868
    %v2870 = vpop.xlane.xlu0 %2869
    %v2871 = vrcp.pop %v2870
    %v2872 = vmul.f32 %v2863, %v2871
    %2874 = vrot.lane.b32.xlu0 %v2872, 96
    %v2875 = vpop.permute.xlu0 %2874
    %v2876 = vsel %vm2788, %v2875, 0
    %2878 = vmatpush.xpose.msra.mxu0 0.0
    %2879 = vmatpush.xpose.msra.mxu0 0.0
    %2880 = vmatpush.xpose.msra.mxu0 0.0
    %2881 = vmatpush.xpose.msra.mxu0 0.0
    %2882 = vmatpush.xpose.msra.mxu0 0.0
    %2883 = vmatpush.xpose.msra.mxu0 0.0
    %2884 = vmatpush.xpose.msra.mxu0 0.0
    %2885 = vmatpush.xpose.msra.mxu0 0.0
    %2886 = vmatpush.xpose.msra.mxu0 0.0
    %2887 = vmatpush.xpose.msra.mxu0 0.0
    %2888 = vmatpush.xpose.msra.mxu0 0.0
    %2889 = vmatpush.xpose.msra.mxu0 0.0
    %2890 = vmatpush.xpose.msra.mxu0 0.0
    %2891 = vmatpush.xpose.msra.mxu0 0.0
    %2892 = vmatpush.xpose.msra.mxu0 0.0
    %2893 = vmatpush.xpose.msra.mxu0 %v2876
    %2894 = vmatmul.f32.gmra.mxu0 %v2790
    %v2895 = vpop.f32.mrf.mxu0
    %v2896 = vadd.f32 0.0, %v2895
    %2897 = vmatmul.f32.gmra.mxu0 %v2793
    %v2898 = vpop.f32.mrf.mxu0
    %v2899 = vadd.f32 0.0, %v2898
    %2900 = vmatmul.f32.gmra.mxu0 %v2796
    %v2901 = vpop.f32.mrf.mxu0
    %v2902 = vadd.f32 0.0, %v2901
    %2903 = vmatmul.f32.gmra.mxu0 %v2799
    %v2904 = vpop.f32.mrf.mxu0
    %v2905 = vadd.f32 0.0, %v2904
    %2906 = vmatmul.f32.gmra.mxu0 %v2802
    %v2907 = vpop.f32.mrf.mxu0
    %v2908 = vadd.f32 0.0, %v2907
    %2909 = vmatmul.f32.gmra.mxu0 %v2805
    %v2910 = vpop.f32.mrf.mxu0
    %v2911 = vadd.f32 0.0, %v2910
    %2912 = vmatmul.f32.gmra.mxu0 %v2808
    %v2913 = vpop.f32.mrf.mxu0
    %v2914 = vadd.f32 0.0, %v2913
    %2915 = vmatmul.f32.gmra.mxu0 %v2811
    %v2916 = vpop.f32.mrf.mxu0
    %v2917 = vadd.f32 0.0, %v2916
    %2918 = vdwg.mxu0
    %v2919 = vadd.f32 %v2834, %v2896
    %v2920 = vadd.f32 %v2837, %v2899
    %v2921 = vadd.f32 %v2840, %v2902
    %v2922 = vadd.f32 %v2843, %v2905
    %v2923 = vadd.f32 %v2846, %v2908
    %v2924 = vadd.f32 %v2849, %v2911
    %v2925 = vadd.f32 %v2852, %v2914
    %v2926 = vadd.f32 %v2855, %v2917
    %v2927 = vmax.f32 %v2919, 0.0
    %v2928 = vmax.f32 %v2920, 0.0
    %v2929 = vmax.f32 %v2921, 0.0
    %v2930 = vmax.f32 %v2922, 0.0
    %v2931 = vmax.f32 %v2923, 0.0
    %v2932 = vmax.f32 %v2924, 0.0
    %v2933 = vmax.f32 %v2925, 0.0
    %v2934 = vmax.f32 %v2926, 0.0
    %v2935 = vmin.f32 %v2927, 1.0
    %v2936 = vmin.f32 %v2928, 1.0
    %v2937 = vmin.f32 %v2929, 1.0
    %v2938 = vmin.f32 %v2930, 1.0
    %v2939 = vmin.f32 %v2931, 1.0
    %v2940 = vmin.f32 %v2932, 1.0
    %v2941 = vmin.f32 %v2933, 1.0
    %v2942 = vmin.f32 %v2934, 1.0
    %v2943 = vsub.f32 %v2919, 1.0
    %v2944 = vsub.f32 %v2920, 1.0
    %v2945 = vsub.f32 %v2921, 1.0
    %v2946 = vsub.f32 %v2922, 1.0
    %v2947 = vsub.f32 %v2923, 1.0
    %v2948 = vsub.f32 %v2924, 1.0
    %v2949 = vsub.f32 %v2925, 1.0
    %v2950 = vsub.f32 %v2926, 1.0
    %v2951 = vmax.f32 %v2943, 0.0
    %v2952 = vmax.f32 %v2944, 0.0
    %v2953 = vmax.f32 %v2945, 0.0
    %v2954 = vmax.f32 %v2946, 0.0
    %v2955 = vmax.f32 %v2947, 0.0
    %v2956 = vmax.f32 %v2948, 0.0
    %v2957 = vmax.f32 %v2949, 0.0
    %v2958 = vmax.f32 %v2950, 0.0
    %v2959 = vmin.f32 %v2951, 1.0
    %v2960 = vmin.f32 %v2952, 1.0
    %v2961 = vmin.f32 %v2953, 1.0
    %v2962 = vmin.f32 %v2954, 1.0
    %v2963 = vmin.f32 %v2955, 1.0
    %v2964 = vmin.f32 %v2956, 1.0
    %v2965 = vmin.f32 %v2957, 1.0
    %v2966 = vmin.f32 %v2958, 1.0
    %v2967 = vsub.f32 %v2834, %v2896
    %v2968 = vsub.f32 %v2837, %v2899
    %v2969 = vsub.f32 %v2840, %v2902
    %v2970 = vsub.f32 %v2843, %v2905
    %v2971 = vsub.f32 %v2846, %v2908
    %v2972 = vsub.f32 %v2849, %v2911
    %v2973 = vsub.f32 %v2852, %v2914
    %v2974 = vsub.f32 %v2855, %v2917
    %v2975 = vmax.f32 %v2967, 0.0
    %v2976 = vmax.f32 %v2968, 0.0
    %v2977 = vmax.f32 %v2969, 0.0
    %v2978 = vmax.f32 %v2970, 0.0
    %v2979 = vmax.f32 %v2971, 0.0
    %v2980 = vmax.f32 %v2972, 0.0
    %v2981 = vmax.f32 %v2973, 0.0
    %v2982 = vmax.f32 %v2974, 0.0
    %v2983 = vmin.f32 %v2975, 1.0
    %v2984 = vmin.f32 %v2976, 1.0
    %v2985 = vmin.f32 %v2977, 1.0
    %v2986 = vmin.f32 %v2978, 1.0
    %v2987 = vmin.f32 %v2979, 1.0
    %v2988 = vmin.f32 %v2980, 1.0
    %v2989 = vmin.f32 %v2981, 1.0
    %v2990 = vmin.f32 %v2982, 1.0
    %v2991 = vsub.f32 %v2896, %v2834
    %v2992 = vsub.f32 %v2899, %v2837
    %v2993 = vsub.f32 %v2902, %v2840
    %v2994 = vsub.f32 %v2905, %v2843
    %v2995 = vsub.f32 %v2908, %v2846
    %v2996 = vsub.f32 %v2911, %v2849
    %v2997 = vsub.f32 %v2914, %v2852
    %v2998 = vsub.f32 %v2917, %v2855
    %v2999 = vmax.f32 %v2991, 0.0
    %v3000 = vmax.f32 %v2992, 0.0
    %v3001 = vmax.f32 %v2993, 0.0
    %v3002 = vmax.f32 %v2994, 0.0
    %v3003 = vmax.f32 %v2995, 0.0
    %v3004 = vmax.f32 %v2996, 0.0
    %v3005 = vmax.f32 %v2997, 0.0
    %v3006 = vmax.f32 %v2998, 0.0
    %v3007 = vmin.f32 %v2999, 1.0
    %v3008 = vmin.f32 %v3000, 1.0
    %v3009 = vmin.f32 %v3001, 1.0
    %v3010 = vmin.f32 %v3002, 1.0
    %v3011 = vmin.f32 %v3003, 1.0
    %v3012 = vmin.f32 %v3004, 1.0
    %v3013 = vmin.f32 %v3005, 1.0
    %v3014 = vmin.f32 %v3006, 1.0
    %3023 = vrot.lane.b32.xlu0 %v2959, 4
    %v3024 = vpop.permute.xlu0 %3023
    %3025 = vrot.lane.b32.xlu0 %v2960, 4
    %v3026 = vpop.permute.xlu0 %3025
    %3027 = vrot.lane.b32.xlu0 %v2961, 4
    %v3028 = vpop.permute.xlu0 %3027
    %3029 = vrot.lane.b32.xlu0 %v2962, 4
    %v3030 = vpop.permute.xlu0 %3029
    %3031 = vrot.lane.b32.xlu0 %v2963, 4
    %v3032 = vpop.permute.xlu0 %3031
    %3033 = vrot.lane.b32.xlu0 %v2964, 4
    %v3034 = vpop.permute.xlu0 %3033
    %3035 = vrot.lane.b32.xlu0 %v2965, 4
    %v3036 = vpop.permute.xlu0 %3035
    %3037 = vrot.lane.b32.xlu0 %v2966, 4
    %v3038 = vpop.permute.xlu0 %3037
    %3055 = vrot.lane.b32.xlu0 %v2983, 8
    %v3056 = vpop.permute.xlu0 %3055
    %3057 = vrot.lane.b32.xlu0 %v2984, 8
    %v3058 = vpop.permute.xlu0 %3057
    %3059 = vrot.lane.b32.xlu0 %v2985, 8
    %v3060 = vpop.permute.xlu0 %3059
    %3061 = vrot.lane.b32.xlu0 %v2986, 8
    %v3062 = vpop.permute.xlu0 %3061
    %3063 = vrot.lane.b32.xlu0 %v2987, 8
    %v3064 = vpop.permute.xlu0 %3063
    %3065 = vrot.lane.b32.xlu0 %v2988, 8
    %v3066 = vpop.permute.xlu0 %3065
    %3067 = vrot.lane.b32.xlu0 %v2989, 8
    %v3068 = vpop.permute.xlu0 %3067
    %3069 = vrot.lane.b32.xlu0 %v2990, 8
    %v3070 = vpop.permute.xlu0 %3069
    %3087 = vrot.lane.b32.xlu0 %v3007, 12
    %v3088 = vpop.permute.xlu0 %3087
    %3089 = vrot.lane.b32.xlu0 %v3008, 12
    %v3090 = vpop.permute.xlu0 %3089
    %3091 = vrot.lane.b32.xlu0 %v3009, 12
    %v3092 = vpop.permute.xlu0 %3091
    %3093 = vrot.lane.b32.xlu0 %v3010, 12
    %v3094 = vpop.permute.xlu0 %3093
    %3095 = vrot.lane.b32.xlu0 %v3011, 12
    %v3096 = vpop.permute.xlu0 %3095
    %3097 = vrot.lane.b32.xlu0 %v3012, 12
    %v3098 = vpop.permute.xlu0 %3097
    %3099 = vrot.lane.b32.xlu0 %v3013, 12
    %v3100 = vpop.permute.xlu0 %3099
    %3101 = vrot.lane.b32.xlu0 %v3014, 12
    %v3102 = vpop.permute.xlu0 %3101
    %v3111 = vsel %vm1989, %v2935, %v3024
    %v3112 = vsel %vm1989, %v2936, %v3026
    %v3113 = vsel %vm1989, %v2937, %v3028
    %v3114 = vsel %vm1989, %v2938, %v3030
    %v3115 = vsel %vm1989, %v2939, %v3032
    %v3116 = vsel %vm1989, %v2940, %v3034
    %v3117 = vsel %vm1989, %v2941, %v3036
    %v3118 = vsel %vm1989, %v2942, %v3038
    %v3119 = vsel %vm2788, %v3111, %v3056
    %v3120 = vsel %vm2788, %v3112, %v3058
    %v3121 = vsel %vm2788, %v3113, %v3060
    %v3122 = vsel %vm2788, %v3114, %v3062
    %v3123 = vsel %vm2788, %v3115, %v3064
    %v3124 = vsel %vm2788, %v3116, %v3066
    %v3125 = vsel %vm2788, %v3117, %v3068
    %v3126 = vsel %vm2788, %v3118, %v3070
    %vm3127 = vcmask 97280
    %v3128 = vsel %vm3127, %v3119, %v3088
    %v3129 = vsel %vm3127, %v3120, %v3090
    %v3130 = vsel %vm3127, %v3121, %v3092
    %v3131 = vsel %vm3127, %v3122, %v3094
    %v3132 = vsel %vm3127, %v3123, %v3096
    %v3133 = vsel %vm3127, %v3124, %v3098
    %v3134 = vsel %vm3127, %v3125, %v3100
    %v3135 = vsel %vm3127, %v3126, %v3102
    %v3136 = vrot.slane %v2754, 1
    %3138 = vrot.lane.b32.xlu0 %v2754, 120
    %v3139 = vpop.permute.xlu0 %3138
    %3141 = vrot.lane.b32.xlu0 %v2758, 112
    %v3142 = vpop.permute.xlu0 %3141
    %3144 = vrot.lane.b32.xlu0 %v2762, 104
    %v3145 = vpop.permute.xlu0 %3144
    %v3147 = vsel %vm2770, %v3136, %v3139
    %v3148 = vsel %vm2772, %v3147, %v3142
    %v3149 = vsel %vm2774, %v3148, %v3145
    %v3150 = vsel %vm2776, %v3149, -inf
    %3151 = vmax.xlane.f32.xlu0 %v3150
    %v3152 = vpop.xlane.xlu0 %3151
    %v3153 = vsub.f32 %v3149, %v3152
    %v3154 = vmul.f32 %v3153, 1.442695
    %v3155 = vpow.pop %v3154
    %v3156 = vsel %vm2776, %v3155, 0.0
    %3157 = vadd.xlane.f32.xlu0 %v3156
    %v3158 = vpop.xlane.xlu0 %3157
    %v3159 = vrcp.pop %v3158
    %v3160 = vmul.f32 %v3155, %v3159
    %v3162 = vsel %vm2788, %v2604, 0
    %v3165 = vsel %vm2788, %v2605, 0
    %v3168 = vsel %vm2788, %v2606, 0
    %v3171 = vsel %vm2788, %v2607, 0
    %v3174 = vsel %vm2788, %v2608, 0
    %v3177 = vsel %vm2788, %v2609, 0
    %v3180 = vsel %vm2788, %v2610, 0
    %v3183 = vsel %vm2788, %v2611, 0
    %v3186 = vsel %vm2788, %v3160, 0
    %3188 = vmatpush.xpose.msra.mxu0 0.0
    %3189 = vmatpush.xpose.msra.mxu0 0.0
    %3190 = vmatpush.xpose.msra.mxu0 0.0
    %3191 = vmatpush.xpose.msra.mxu0 0.0
    %3192 = vmatpush.xpose.msra.mxu0 0.0
    %3193 = vmatpush.xpose.msra.mxu0 0.0
    %3194 = vmatpush.xpose.msra.mxu0 0.0
    %3195 = vmatpush.xpose.msra.mxu0 0.0
    %3196 = vmatpush.xpose.msra.mxu0 0.0
    %3197 = vmatpush.xpose.msra.mxu0 0.0
    %3198 = vmatpush.xpose.msra.mxu0 0.0
    %3199 = vmatpush.xpose.msra.mxu0 0.0
    %3200 = vmatpush.xpose.msra.mxu0 0.0
    %3201 = vmatpush.xpose.msra.mxu0 0.0
    %3202 = vmatpush.xpose.msra.mxu0 0.0
    %3203 = vmatpush.xpose.msra.mxu0 %v3186
    %3204 = vmatmul.f32.gmra.mxu0 %v3162
    %v3205 = vpop.f32.mrf.mxu0
    %v3206 = vadd.f32 0.0, %v3205
    %3207 = vmatmul.f32.gmra.mxu0 %v3165
    %v3208 = vpop.f32.mrf.mxu0
    %v3209 = vadd.f32 0.0, %v3208
    %3210 = vmatmul.f32.gmra.mxu0 %v3168
    %v3211 = vpop.f32.mrf.mxu0
    %v3212 = vadd.f32 0.0, %v3211
    %3213 = vmatmul.f32.gmra.mxu0 %v3171
    %v3214 = vpop.f32.mrf.mxu0
    %v3215 = vadd.f32 0.0, %v3214
    %3216 = vmatmul.f32.gmra.mxu0 %v3174
    %v3217 = vpop.f32.mrf.mxu0
    %v3218 = vadd.f32 0.0, %v3217
    %3219 = vmatmul.f32.gmra.mxu0 %v3177
    %v3220 = vpop.f32.mrf.mxu0
    %v3221 = vadd.f32 0.0, %v3220
    %3222 = vmatmul.f32.gmra.mxu0 %v3180
    %v3223 = vpop.f32.mrf.mxu0
    %v3224 = vadd.f32 0.0, %v3223
    %3225 = vmatmul.f32.gmra.mxu0 %v3183
    %v3226 = vpop.f32.mrf.mxu0
    %v3227 = vadd.f32 0.0, %v3226
    %3228 = vdwg.mxu0
    %v3229 = vsel %vm2857, %v3149, -inf
    %3230 = vmax.xlane.f32.xlu0 %v3229
    %v3231 = vpop.xlane.xlu0 %3230
    %v3232 = vsub.f32 %v3149, %v3231
    %v3233 = vmul.f32 %v3232, 1.442695
    %v3234 = vpow.pop %v3233
    %3236 = vrot.lane.b32.xlu0 %v3234, 96
    %v3237 = vpop.permute.xlu0 %3236
    %v3239 = vsel %vm2776, %v3237, 0.0
    %3240 = vadd.xlane.f32.xlu0 %v3239
    %v3241 = vpop.xlane.xlu0 %3240
    %v3242 = vrcp.pop %v3241
    %v3243 = vmul.f32 %v3234, %v3242
    %3245 = vrot.lane.b32.xlu0 %v3243, 96
    %v3246 = vpop.permute.xlu0 %3245
    %v3247 = vsel %vm2788, %v3246, 0
    %3249 = vmatpush.xpose.msra.mxu0 0.0
    %3250 = vmatpush.xpose.msra.mxu0 0.0
    %3251 = vmatpush.xpose.msra.mxu0 0.0
    %3252 = vmatpush.xpose.msra.mxu0 0.0
    %3253 = vmatpush.xpose.msra.mxu0 0.0
    %3254 = vmatpush.xpose.msra.mxu0 0.0
    %3255 = vmatpush.xpose.msra.mxu0 0.0
    %3256 = vmatpush.xpose.msra.mxu0 0.0
    %3257 = vmatpush.xpose.msra.mxu0 0.0
    %3258 = vmatpush.xpose.msra.mxu0 0.0
    %3259 = vmatpush.xpose.msra.mxu0 0.0
    %3260 = vmatpush.xpose.msra.mxu0 0.0
    %3261 = vmatpush.xpose.msra.mxu0 0.0
    %3262 = vmatpush.xpose.msra.mxu0 0.0
    %3263 = vmatpush.xpose.msra.mxu0 0.0
    %3264 = vmatpush.xpose.msra.mxu0 %v3247
    %3265 = vmatmul.f32.gmra.mxu0 %v3162
    %v3266 = vpop.f32.mrf.mxu0
    %v3267 = vadd.f32 0.0, %v3266
    %3268 = vmatmul.f32.gmra.mxu0 %v3165
    %v3269 = vpop.f32.mrf.mxu0
    %v3270 = vadd.f32 0.0, %v3269
    %3271 = vmatmul.f32.gmra.mxu0 %v3168
    %v3272 = vpop.f32.mrf.mxu0
    %v3273 = vadd.f32 0.0, %v3272
    %3274 = vmatmul.f32.gmra.mxu0 %v3171
    %v3275 = vpop.f32.mrf.mxu0
    %v3276 = vadd.f32 0.0, %v3275
    %3277 = vmatmul.f32.gmra.mxu0 %v3174
    %v3278 = vpop.f32.mrf.mxu0
    %v3279 = vadd.f32 0.0, %v3278
    %3280 = vmatmul.f32.gmra.mxu0 %v3177
    %v3281 = vpop.f32.mrf.mxu0
    %v3282 = vadd.f32 0.0, %v3281
    %3283 = vmatmul.f32.gmra.mxu0 %v3180
    %v3284 = vpop.f32.mrf.mxu0
    %v3285 = vadd.f32 0.0, %v3284
    %3286 = vmatmul.f32.gmra.mxu0 %v3183
    %v3287 = vpop.f32.mrf.mxu0
    %v3288 = vadd.f32 0.0, %v3287
    %3289 = vdwg.mxu0
    %v3290 = vadd.f32 %v3206, %v3267
    %v3291 = vadd.f32 %v3209, %v3270
    %v3292 = vadd.f32 %v3212, %v3273
    %v3293 = vadd.f32 %v3215, %v3276
    %v3294 = vadd.f32 %v3218, %v3279
    %v3295 = vadd.f32 %v3221, %v3282
    %v3296 = vadd.f32 %v3224, %v3285
    %v3297 = vadd.f32 %v3227, %v3288
    %v3298 = vmax.f32 %v3290, 0.0
    %v3299 = vmax.f32 %v3291, 0.0
    %v3300 = vmax.f32 %v3292, 0.0
    %v3301 = vmax.f32 %v3293, 0.0
    %v3302 = vmax.f32 %v3294, 0.0
    %v3303 = vmax.f32 %v3295, 0.0
    %v3304 = vmax.f32 %v3296, 0.0
    %v3305 = vmax.f32 %v3297, 0.0
    %v3306 = vmin.f32 %v3298, 1.0
    %v3307 = vmin.f32 %v3299, 1.0
    %v3308 = vmin.f32 %v3300, 1.0
    %v3309 = vmin.f32 %v3301, 1.0
    %v3310 = vmin.f32 %v3302, 1.0
    %v3311 = vmin.f32 %v3303, 1.0
    %v3312 = vmin.f32 %v3304, 1.0
    %v3313 = vmin.f32 %v3305, 1.0
    %v3314 = vsub.f32 %v3290, 1.0
    %v3315 = vsub.f32 %v3291, 1.0
    %v3316 = vsub.f32 %v3292, 1.0
    %v3317 = vsub.f32 %v3293, 1.0
    %v3318 = vsub.f32 %v3294, 1.0
    %v3319 = vsub.f32 %v3295, 1.0
    %v3320 = vsub.f32 %v3296, 1.0
    %v3321 = vsub.f32 %v3297, 1.0
    %v3322 = vmax.f32 %v3314, 0.0
    %v3323 = vmax.f32 %v3315, 0.0
    %v3324 = vmax.f32 %v3316, 0.0
    %v3325 = vmax.f32 %v3317, 0.0
    %v3326 = vmax.f32 %v3318, 0.0
    %v3327 = vmax.f32 %v3319, 0.0
    %v3328 = vmax.f32 %v3320, 0.0
    %v3329 = vmax.f32 %v3321, 0.0
    %v3330 = vmin.f32 %v3322, 1.0
    %v3331 = vmin.f32 %v3323, 1.0
    %v3332 = vmin.f32 %v3324, 1.0
    %v3333 = vmin.f32 %v3325, 1.0
    %v3334 = vmin.f32 %v3326, 1.0
    %v3335 = vmin.f32 %v3327, 1.0
    %v3336 = vmin.f32 %v3328, 1.0
    %v3337 = vmin.f32 %v3329, 1.0
    %v3338 = vsub.f32 %v3206, %v3267
    %v3339 = vsub.f32 %v3209, %v3270
    %v3340 = vsub.f32 %v3212, %v3273
    %v3341 = vsub.f32 %v3215, %v3276
    %v3342 = vsub.f32 %v3218, %v3279
    %v3343 = vsub.f32 %v3221, %v3282
    %v3344 = vsub.f32 %v3224, %v3285
    %v3345 = vsub.f32 %v3227, %v3288
    %v3346 = vmax.f32 %v3338, 0.0
    %v3347 = vmax.f32 %v3339, 0.0
    %v3348 = vmax.f32 %v3340, 0.0
    %v3349 = vmax.f32 %v3341, 0.0
    %v3350 = vmax.f32 %v3342, 0.0
    %v3351 = vmax.f32 %v3343, 0.0
    %v3352 = vmax.f32 %v3344, 0.0
    %v3353 = vmax.f32 %v3345, 0.0
    %v3354 = vmin.f32 %v3346, 1.0
    %v3355 = vmin.f32 %v3347, 1.0
    %v3356 = vmin.f32 %v3348, 1.0
    %v3357 = vmin.f32 %v3349, 1.0
    %v3358 = vmin.f32 %v3350, 1.0
    %v3359 = vmin.f32 %v3351, 1.0
    %v3360 = vmin.f32 %v3352, 1.0
    %v3361 = vmin.f32 %v3353, 1.0
    %v3362 = vsub.f32 %v3267, %v3206
    %v3363 = vsub.f32 %v3270, %v3209
    %v3364 = vsub.f32 %v3273, %v3212
    %v3365 = vsub.f32 %v3276, %v3215
    %v3366 = vsub.f32 %v3279, %v3218
    %v3367 = vsub.f32 %v3282, %v3221
    %v3368 = vsub.f32 %v3285, %v3224
    %v3369 = vsub.f32 %v3288, %v3227
    %v3370 = vmax.f32 %v3362, 0.0
    %v3371 = vmax.f32 %v3363, 0.0
    %v3372 = vmax.f32 %v3364, 0.0
    %v3373 = vmax.f32 %v3365, 0.0
    %v3374 = vmax.f32 %v3366, 0.0
    %v3375 = vmax.f32 %v3367, 0.0
    %v3376 = vmax.f32 %v3368, 0.0
    %v3377 = vmax.f32 %v3369, 0.0
    %v3378 = vmin.f32 %v3370, 1.0
    %v3379 = vmin.f32 %v3371, 1.0
    %v3380 = vmin.f32 %v3372, 1.0
    %v3381 = vmin.f32 %v3373, 1.0
    %v3382 = vmin.f32 %v3374, 1.0
    %v3383 = vmin.f32 %v3375, 1.0
    %v3384 = vmin.f32 %v3376, 1.0
    %v3385 = vmin.f32 %v3377, 1.0
    %3394 = vrot.lane.b32.xlu0 %v3330, 4
    %v3395 = vpop.permute.xlu0 %3394
    %3396 = vrot.lane.b32.xlu0 %v3331, 4
    %v3397 = vpop.permute.xlu0 %3396
    %3398 = vrot.lane.b32.xlu0 %v3332, 4
    %v3399 = vpop.permute.xlu0 %3398
    %3400 = vrot.lane.b32.xlu0 %v3333, 4
    %v3401 = vpop.permute.xlu0 %3400
    %3402 = vrot.lane.b32.xlu0 %v3334, 4
    %v3403 = vpop.permute.xlu0 %3402
    %3404 = vrot.lane.b32.xlu0 %v3335, 4
    %v3405 = vpop.permute.xlu0 %3404
    %3406 = vrot.lane.b32.xlu0 %v3336, 4
    %v3407 = vpop.permute.xlu0 %3406
    %3408 = vrot.lane.b32.xlu0 %v3337, 4
    %v3409 = vpop.permute.xlu0 %3408
    %3426 = vrot.lane.b32.xlu0 %v3354, 8
    %v3427 = vpop.permute.xlu0 %3426
    %3428 = vrot.lane.b32.xlu0 %v3355, 8
    %v3429 = vpop.permute.xlu0 %3428
    %3430 = vrot.lane.b32.xlu0 %v3356, 8
    %v3431 = vpop.permute.xlu0 %3430
    %3432 = vrot.lane.b32.xlu0 %v3357, 8
    %v3433 = vpop.permute.xlu0 %3432
    %3434 = vrot.lane.b32.xlu0 %v3358, 8
    %v3435 = vpop.permute.xlu0 %3434
    %3436 = vrot.lane.b32.xlu0 %v3359, 8
    %v3437 = vpop.permute.xlu0 %3436
    %3438 = vrot.lane.b32.xlu0 %v3360, 8
    %v3439 = vpop.permute.xlu0 %3438
    %3440 = vrot.lane.b32.xlu0 %v3361, 8
    %v3441 = vpop.permute.xlu0 %3440
    %3458 = vrot.lane.b32.xlu0 %v3378, 12
    %v3459 = vpop.permute.xlu0 %3458
    %3460 = vrot.lane.b32.xlu0 %v3379, 12
    %v3461 = vpop.permute.xlu0 %3460
    %3462 = vrot.lane.b32.xlu0 %v3380, 12
    %v3463 = vpop.permute.xlu0 %3462
    %3464 = vrot.lane.b32.xlu0 %v3381, 12
    %v3465 = vpop.permute.xlu0 %3464
    %3466 = vrot.lane.b32.xlu0 %v3382, 12
    %v3467 = vpop.permute.xlu0 %3466
    %3468 = vrot.lane.b32.xlu0 %v3383, 12
    %v3469 = vpop.permute.xlu0 %3468
    %3470 = vrot.lane.b32.xlu0 %v3384, 12
    %v3471 = vpop.permute.xlu0 %3470
    %3472 = vrot.lane.b32.xlu0 %v3385, 12
    %v3473 = vpop.permute.xlu0 %3472
    %v3482 = vsel %vm1989, %v3306, %v3395
    %v3483 = vsel %vm1989, %v3307, %v3397
    %v3484 = vsel %vm1989, %v3308, %v3399
    %v3485 = vsel %vm1989, %v3309, %v3401
    %v3486 = vsel %vm1989, %v3310, %v3403
    %v3487 = vsel %vm1989, %v3311, %v3405
    %v3488 = vsel %vm1989, %v3312, %v3407
    %v3489 = vsel %vm1989, %v3313, %v3409
    %v3490 = vsel %vm2788, %v3482, %v3427
    %v3491 = vsel %vm2788, %v3483, %v3429
    %v3492 = vsel %vm2788, %v3484, %v3431
    %v3493 = vsel %vm2788, %v3485, %v3433
    %v3494 = vsel %vm2788, %v3486, %v3435
    %v3495 = vsel %vm2788, %v3487, %v3437
    %v3496 = vsel %vm2788, %v3488, %v3439
    %v3497 = vsel %vm2788, %v3489, %v3441
    %v3498 = vsel %vm3127, %v3490, %v3459
    %v3499 = vsel %vm3127, %v3491, %v3461
    %v3500 = vsel %vm3127, %v3492, %v3463
    %v3501 = vsel %vm3127, %v3493, %v3465
    %v3502 = vsel %vm3127, %v3494, %v3467
    %v3503 = vsel %vm3127, %v3495, %v3469
    %v3504 = vsel %vm3127, %v3496, %v3471
    %v3505 = vsel %vm3127, %v3497, %v3473
    %3507 = vrot.lane.b32.xlu0 %v2756, 64
    %v3508 = vpop.permute.xlu0 %3507
    %v3510 = vsel %vm1344, %v3508, %v2722
    %v3512 = vsel %vm1383, %v3510, 0
    %3514 = vmatpush.msra.mxu0 0.0
    %3515 = vmatpush.msra.mxu0 0.0
    %3516 = vmatpush.msra.mxu0 0.0
    %3517 = vmatpush.msra.mxu0 0.0
    %3518 = vmatpush.msra.mxu0 0.0
    %3519 = vmatpush.msra.mxu0 0.0
    %3520 = vmatpush.msra.mxu0 0.0
    %3521 = vmatpush.msra.mxu0 0.0
    %3522 = vmatpush.msra.mxu0 %v2626
    %3523 = vmatpush.msra.mxu0 %v2625
    %3524 = vmatpush.msra.mxu0 %v2624
    %3525 = vmatpush.msra.mxu0 %v2623
    %3526 = vmatpush.msra.mxu0 %v2622
    %3527 = vmatpush.msra.mxu0 %v2621
    %3528 = vmatpush.msra.mxu0 %v2620
    %3529 = vmatpush.msra.mxu0 %v2619
    %3530 = vmatmul.f32.gmra.mxu0 %v3512
    %v3531 = vpop.f32.mrf.mxu0
    %v3532 = vadd.f32 %v2629, %v3531
    %3533 = vdwg.mxu0
    %v3534 = vxor.u32 %v3532, 2147483648
    %v3535 = vmul.f32 %v3534, 1.442695
    %v3536 = vpow.pop %v3535
    %v3537 = vadd.f32 %v3536, 1.0
    %v3538 = vrcp.pop %v3537
    %v3539 = vmul.f32 %v3537, %v3538
    %v3540 = vsub.f32 1.0, %v3539
    %v3541 = vmul.f32 %v3538, %v3540
    %v3542 = vadd.f32 %v3538, %v3541
    %vm3543 = vweird.f32 %v3537
    %vm3544 = vweird.f32 %v3538
    %vm3545 = vmor %vm3543, %vm3544
    %v3546 = vsel %vm3545, %v3538, %v3542
    %v3547 = vand.u32 2147483647, %v3537
    %vm3548 = vcmp.eq.f32.partialorder %v3547, 8.507059e+37
    %v3549 = vand.u32 %v3537, 2147483648
    %v3550 = vor.u32 1.1754944e-38, %v3549
    %v3551 = vsel %vm3548, %v3550, %v3546
    %v3552 = vmul.f32 1.0, %v3551
    %3553 = vmatpush.msra.mxu0 0.0
    %3554 = vmatpush.msra.mxu0 0.0
    %3555 = vmatpush.msra.mxu0 0.0
    %3556 = vmatpush.msra.mxu0 0.0
    %3557 = vmatpush.msra.mxu0 0.0
    %3558 = vmatpush.msra.mxu0 0.0
    %3559 = vmatpush.msra.mxu0 0.0
    %3560 = vmatpush.msra.mxu0 0.0
    %3561 = vmatpush.msra.mxu0 0.0
    %3562 = vmatpush.msra.mxu0 0.0
    %3563 = vmatpush.msra.mxu0 0.0
    %3564 = vmatpush.msra.mxu0 0.0
    %3565 = vmatpush.msra.mxu0 %v2676
    %3566 = vmatpush.msra.mxu0 %v2675
    %3567 = vmatpush.msra.mxu0 %v2674
    %3568 = vmatpush.msra.mxu0 %v2673
    %3569 = vmatmul.f32.gmra.mxu0 %v2734
    %v3570 = vpop.f32.mrf.mxu0
    %v3571 = vadd.f32 %v2679, %v3570
    %3572 = vdwg.mxu0
    %3574 = vrot.lane.b32.xlu0 %v3571, 64
    %v3575 = vpop.permute.xlu0 %3574
    %v3577 = vsub.f32 %v3532, %v3575
    %v3578 = vmul.f32 %v3552, %v3571
    %3580 = vrot.lane.b32.xlu0 %v3578, 64
    %v3581 = vpop.permute.xlu0 %3580
    %v3583 = vadd.f32 %v3577, %v3581
    %v3584 = vtanh.pop %v3583
    %v3585 = vsub.f32 1.0, %v3552
    %3587 = vrot.lane.b32.xlu0 %v3584, 96
    %v3588 = vpop.permute.xlu0 %3587
    %v3590 = vmul.f32 %v3585, %v3588
    %v3591 = vmul.f32 %v3552, %v2722
    %v3592 = vadd.f32 %v3590, %v3591
    %3593 = vrot.lane.b32.xlu0 %v2023, 16
    %v3594 = vpop.permute.xlu0 %3593
    %3595 = vrot.lane.b32.xlu0 %v2024, 16
    %v3596 = vpop.permute.xlu0 %3595
    %3597 = vrot.lane.b32.xlu0 %v2025, 16
    %v3598 = vpop.permute.xlu0 %3597
    %3599 = vrot.lane.b32.xlu0 %v2026, 16
    %v3600 = vpop.permute.xlu0 %3599
    %3601 = vrot.lane.b32.xlu0 %v2027, 16
    %v3602 = vpop.permute.xlu0 %3601
    %3603 = vrot.lane.b32.xlu0 %v2028, 16
    %v3604 = vpop.permute.xlu0 %3603
    %3605 = vrot.lane.b32.xlu0 %v2029, 16
    %v3606 = vpop.permute.xlu0 %3605
    %3607 = vrot.lane.b32.xlu0 %v2030, 16
    %v3608 = vpop.permute.xlu0 %3607
    %v3617 = vsel %vm1429, %v3128, %v3594
    %v3618 = vsel %vm1429, %v3129, %v3596
    %v3619 = vsel %vm1429, %v3130, %v3598
    %v3620 = vsel %vm1429, %v3131, %v3600
    %v3621 = vsel %vm1429, %v3132, %v3602
    %v3622 = vsel %vm1429, %v3133, %v3604
    %v3623 = vsel %vm1429, %v3134, %v3606
    %v3624 = vsel %vm1429, %v3135, %v3608
    %3625 = vrot.lane.b32.xlu0 %v2604, 16
    %v3626 = vpop.permute.xlu0 %3625
    %3627 = vrot.lane.b32.xlu0 %v2605, 16
    %v3628 = vpop.permute.xlu0 %3627
    %3629 = vrot.lane.b32.xlu0 %v2606, 16
    %v3630 = vpop.permute.xlu0 %3629
    %3631 = vrot.lane.b32.xlu0 %v2607, 16
    %v3632 = vpop.permute.xlu0 %3631
    %3633 = vrot.lane.b32.xlu0 %v2608, 16
    %v3634 = vpop.permute.xlu0 %3633
    %3635 = vrot.lane.b32.xlu0 %v2609, 16
    %v3636 = vpop.permute.xlu0 %3635
    %3637 = vrot.lane.b32.xlu0 %v2610, 16
    %v3638 = vpop.permute.xlu0 %3637
    %3639 = vrot.lane.b32.xlu0 %v2611, 16
    %v3640 = vpop.permute.xlu0 %3639
    %v3649 = vsel %vm1429, %v3498, %v3626
    %v3650 = vsel %vm1429, %v3499, %v3628
    %v3651 = vsel %vm1429, %v3500, %v3630
    %v3652 = vsel %vm1429, %v3501, %v3632
    %v3653 = vsel %vm1429, %v3502, %v3634
    %v3654 = vsel %vm1429, %v3503, %v3636
    %v3655 = vsel %vm1429, %v3504, %v3638
    %v3656 = vsel %vm1429, %v3505, %v3640
    %v3657 = vld [vmem:[%s21] sm:$0xff]
    %v3658 = vld [vmem:[%s21 + $0x8] sm:$0xff]
    %v3659 = vld [vmem:[%s21 + $0x10] sm:$0xff]
    %v3660 = vld [vmem:[%s21 + $0x18] sm:$0xff]
    %v3661 = vld [vmem:[%s22] sm:$0x1]
    %v3663 = vperm.slane %v3661, 0
    %3666 = vrot.lane.b32.xlu0 %v3592, 96
    %v3667 = vpop.permute.xlu0 %3666
    %v3668 = vsel %vm1344, %v3667, 0
    %3670 = vmatpush.msra.mxu0 0.0
    %3671 = vmatpush.msra.mxu0 0.0
    %3672 = vmatpush.msra.mxu0 0.0
    %3673 = vmatpush.msra.mxu0 0.0
    %3674 = vmatpush.msra.mxu0 0.0
    %3675 = vmatpush.msra.mxu0 0.0
    %3676 = vmatpush.msra.mxu0 0.0
    %3677 = vmatpush.msra.mxu0 0.0
    %3678 = vmatpush.msra.mxu0 0.0
    %3679 = vmatpush.msra.mxu0 0.0
    %3680 = vmatpush.msra.mxu0 0.0
    %3681 = vmatpush.msra.mxu0 0.0
    %3682 = vmatpush.msra.mxu0 %v3660
    %3683 = vmatpush.msra.mxu0 %v3659
    %3684 = vmatpush.msra.mxu0 %v3658
    %3685 = vmatpush.msra.mxu0 %v3657
    %3686 = vmatmul.f32.gmra.mxu0 %v3668
    %v3687 = vpop.f32.mrf.mxu0
    %v3688 = vadd.f32 %v3663, %v3687
    %3689 = vdwg.mxu0
    %vm3690 = vcmask 188416
    %v3691 = vsel %vm3690, %v3688, -inf
    %3692 = vmax.xlane.f32.xlu0 %v3691
    %v3693 = vpop.xlane.xlu0 %3692
    %v3694 = vsub.f32 %v3688, %v3693
    %v3695 = vmul.f32 %v3694, 1.442695
    %v3696 = vpow.pop %v3695
    %v3697 = vsel %vm3690, %v3696, 0.0
    %3698 = vadd.xlane.f32.xlu0 %v3697
    %v3699 = vpop.xlane.xlu0 %3698
    %v3700 = vrcp.pop %v3699
    %v3701 = vmul.f32 %v3696, %v3700
    %v3702 = vperm.slane %v3701, 0
    %v3703 = vmul.f32 %v3617, %v3702
    %v3704 = vmul.f32 %v3618, %v3702
    %v3705 = vmul.f32 %v3619, %v3702
    %v3706 = vmul.f32 %v3620, %v3702
    %v3707 = vmul.f32 %v3621, %v3702
    %v3708 = vmul.f32 %v3622, %v3702
    %v3709 = vmul.f32 %v3623, %v3702
    %v3710 = vmul.f32 %v3624, %v3702
    %vm3711 = vcmask 195584
    %v3712 = vsel %vm3711, %v3703, 0.0
    %3713 = vadd.xlane.f32.xlu0 %v3712
    %v3714 = vpop.xlane.xlu0 %3713
    %v3715 = vsel %vm3711, %v3704, 0.0
    %3716 = vadd.xlane.f32.xlu0 %v3715
    %v3717 = vpop.xlane.xlu0 %3716
    %v3718 = vsel %vm3711, %v3705, 0.0
    %3719 = vadd.xlane.f32.xlu0 %v3718
    %v3720 = vpop.xlane.xlu0 %3719
    %v3721 = vsel %vm3711, %v3706, 0.0
    %3722 = vadd.xlane.f32.xlu0 %v3721
    %v3723 = vpop.xlane.xlu0 %3722
    %v3724 = vsel %vm3711, %v3707, 0.0
    %3725 = vadd.xlane.f32.xlu0 %v3724
    %v3726 = vpop.xlane.xlu0 %3725
    %v3727 = vsel %vm3711, %v3708, 0.0
    %3728 = vadd.xlane.f32.xlu0 %v3727
    %v3729 = vpop.xlane.xlu0 %3728
    %v3730 = vsel %vm3711, %v3709, 0.0
    %3731 = vadd.xlane.f32.xlu0 %v3730
    %v3732 = vpop.xlane.xlu0 %3731
    %v3733 = vsel %vm3711, %v3710, 0.0
    %3734 = vadd.xlane.f32.xlu0 %v3733
    %v3735 = vpop.xlane.xlu0 %3734
    %vm3736 = vcmask 385216
    %v3737 = vsel %vm3736, %v3688, -inf
    %3738 = vmax.xlane.f32.xlu0 %v3737
    %v3739 = vpop.xlane.xlu0 %3738
    %v3740 = vsub.f32 %v3688, %v3739
    %v3741 = vmul.f32 %v3740, 1.442695
    %v3742 = vpow.pop %v3741
    %3744 = vrot.lane.b32.xlu0 %v3742, 104
    %v3745 = vpop.permute.xlu0 %3744
    %v3747 = vsel %vm3690, %v3745, 0.0
    %3748 = vadd.xlane.f32.xlu0 %v3747
    %v3749 = vpop.xlane.xlu0 %3748
    %v3750 = vrcp.pop %v3749
    %v3751 = vmul.f32 %v3742, %v3750
    %v3752 = vperm.slane %v3751, 0
    %3754 = vrot.lane.b32.xlu0 %v3752, 104
    %v3755 = vpop.permute.xlu0 %3754
    %v3757 = vmul.f32 %v3617, %v3755
    %v3758 = vmul.f32 %v3618, %v3755
    %v3759 = vmul.f32 %v3619, %v3755
    %v3760 = vmul.f32 %v3620, %v3755
    %v3761 = vmul.f32 %v3621, %v3755
    %v3762 = vmul.f32 %v3622, %v3755
    %v3763 = vmul.f32 %v3623, %v3755
    %v3764 = vmul.f32 %v3624, %v3755
    %v3765 = vsel %vm3711, %v3757, 0.0
    %3766 = vadd.xlane.f32.xlu0 %v3765
    %v3767 = vpop.xlane.xlu0 %3766
    %v3768 = vsel %vm3711, %v3758, 0.0
    %3769 = vadd.xlane.f32.xlu0 %v3768
    %v3770 = vpop.xlane.xlu0 %3769
    %v3771 = vsel %vm3711, %v3759, 0.0
    %3772 = vadd.xlane.f32.xlu0 %v3771
    %v3773 = vpop.xlane.xlu0 %3772
    %v3774 = vsel %vm3711, %v3760, 0.0
    %3775 = vadd.xlane.f32.xlu0 %v3774
    %v3776 = vpop.xlane.xlu0 %3775
    %v3777 = vsel %vm3711, %v3761, 0.0
    %3778 = vadd.xlane.f32.xlu0 %v3777
    %v3779 = vpop.xlane.xlu0 %3778
    %v3780 = vsel %vm3711, %v3762, 0.0
    %3781 = vadd.xlane.f32.xlu0 %v3780
    %v3782 = vpop.xlane.xlu0 %3781
    %v3783 = vsel %vm3711, %v3763, 0.0
    %3784 = vadd.xlane.f32.xlu0 %v3783
    %v3785 = vpop.xlane.xlu0 %3784
    %v3786 = vsel %vm3711, %v3764, 0.0
    %3787 = vadd.xlane.f32.xlu0 %v3786
    %v3788 = vpop.xlane.xlu0 %3787
    %v3789 = vadd.f32 %v3714, %v3767
    %v3790 = vadd.f32 %v3717, %v3770
    %v3791 = vadd.f32 %v3720, %v3773
    %v3792 = vadd.f32 %v3723, %v3776
    %v3793 = vadd.f32 %v3726, %v3779
    %v3794 = vadd.f32 %v3729, %v3782
    %v3795 = vadd.f32 %v3732, %v3785
    %v3796 = vadd.f32 %v3735, %v3788
    %v3797 = vmax.f32 %v3789, 0.0
    %v3798 = vmax.f32 %v3790, 0.0
    %v3799 = vmax.f32 %v3791, 0.0
    %v3800 = vmax.f32 %v3792, 0.0
    %v3801 = vmax.f32 %v3793, 0.0
    %v3802 = vmax.f32 %v3794, 0.0
    %v3803 = vmax.f32 %v3795, 0.0
    %v3804 = vmax.f32 %v3796, 0.0
    %v3805 = vmin.f32 %v3797, 1.0
    %v3806 = vmin.f32 %v3798, 1.0
    %v3807 = vmin.f32 %v3799, 1.0
    %v3808 = vmin.f32 %v3800, 1.0
    %v3809 = vmin.f32 %v3801, 1.0
    %v3810 = vmin.f32 %v3802, 1.0
    %v3811 = vmin.f32 %v3803, 1.0
    %v3812 = vmin.f32 %v3804, 1.0
    %v3813 = vsub.f32 %v3789, 1.0
    %v3814 = vsub.f32 %v3790, 1.0
    %v3815 = vsub.f32 %v3791, 1.0
    %v3816 = vsub.f32 %v3792, 1.0
    %v3817 = vsub.f32 %v3793, 1.0
    %v3818 = vsub.f32 %v3794, 1.0
    %v3819 = vsub.f32 %v3795, 1.0
    %v3820 = vsub.f32 %v3796, 1.0
    %v3821 = vmax.f32 %v3813, 0.0
    %v3822 = vmax.f32 %v3814, 0.0
    %v3823 = vmax.f32 %v3815, 0.0
    %v3824 = vmax.f32 %v3816, 0.0
    %v3825 = vmax.f32 %v3817, 0.0
    %v3826 = vmax.f32 %v3818, 0.0
    %v3827 = vmax.f32 %v3819, 0.0
    %v3828 = vmax.f32 %v3820, 0.0
    %v3829 = vmin.f32 %v3821, 1.0
    %v3830 = vmin.f32 %v3822, 1.0
    %v3831 = vmin.f32 %v3823, 1.0
    %v3832 = vmin.f32 %v3824, 1.0
    %v3833 = vmin.f32 %v3825, 1.0
    %v3834 = vmin.f32 %v3826, 1.0
    %v3835 = vmin.f32 %v3827, 1.0
    %v3836 = vmin.f32 %v3828, 1.0
    %v3837 = vsub.f32 %v3714, %v3767
    %v3838 = vsub.f32 %v3717, %v3770
    %v3839 = vsub.f32 %v3720, %v3773
    %v3840 = vsub.f32 %v3723, %v3776
    %v3841 = vsub.f32 %v3726, %v3779
    %v3842 = vsub.f32 %v3729, %v3782
    %v3843 = vsub.f32 %v3732, %v3785
    %v3844 = vsub.f32 %v3735, %v3788
    %v3845 = vmax.f32 %v3837, 0.0
    %v3846 = vmax.f32 %v3838, 0.0
    %v3847 = vmax.f32 %v3839, 0.0
    %v3848 = vmax.f32 %v3840, 0.0
    %v3849 = vmax.f32 %v3841, 0.0
    %v3850 = vmax.f32 %v3842, 0.0
    %v3851 = vmax.f32 %v3843, 0.0
    %v3852 = vmax.f32 %v3844, 0.0
    %v3853 = vmin.f32 %v3845, 1.0
    %v3854 = vmin.f32 %v3846, 1.0
    %v3855 = vmin.f32 %v3847, 1.0
    %v3856 = vmin.f32 %v3848, 1.0
    %v3857 = vmin.f32 %v3849, 1.0
    %v3858 = vmin.f32 %v3850, 1.0
    %v3859 = vmin.f32 %v3851, 1.0
    %v3860 = vmin.f32 %v3852, 1.0
    %v3861 = vsub.f32 %v3767, %v3714
    %v3862 = vsub.f32 %v3770, %v3717
    %v3863 = vsub.f32 %v3773, %v3720
    %v3864 = vsub.f32 %v3776, %v3723
    %v3865 = vsub.f32 %v3779, %v3726
    %v3866 = vsub.f32 %v3782, %v3729
    %v3867 = vsub.f32 %v3785, %v3732
    %v3868 = vsub.f32 %v3788, %v3735
    %v3869 = vmax.f32 %v3861, 0.0
    %v3870 = vmax.f32 %v3862, 0.0
    %v3871 = vmax.f32 %v3863, 0.0
    %v3872 = vmax.f32 %v3864, 0.0
    %v3873 = vmax.f32 %v3865, 0.0
    %v3874 = vmax.f32 %v3866, 0.0
    %v3875 = vmax.f32 %v3867, 0.0
    %v3876 = vmax.f32 %v3868, 0.0
    %v3877 = vmin.f32 %v3869, 1.0
    %v3878 = vmin.f32 %v3870, 1.0
    %v3879 = vmin.f32 %v3871, 1.0
    %v3880 = vmin.f32 %v3872, 1.0
    %v3881 = vmin.f32 %v3873, 1.0
    %v3882 = vmin.f32 %v3874, 1.0
    %v3883 = vmin.f32 %v3875, 1.0
    %v3884 = vmin.f32 %v3876, 1.0
    %vm3885 = vcmask 7168
    %v3886 = vsel %vm3885, %v3805, %v3829
    %v3887 = vsel %vm3885, %v3806, %v3830
    %v3888 = vsel %vm3885, %v3807, %v3831
    %v3889 = vsel %vm3885, %v3808, %v3832
    %v3890 = vsel %vm3885, %v3809, %v3833
    %v3891 = vsel %vm3885, %v3810, %v3834
    %v3892 = vsel %vm3885, %v3811, %v3835
    %v3893 = vsel %vm3885, %v3812, %v3836
    %vm3894 = vcmask 15360
    %v3895 = vsel %vm3894, %v3886, %v3853
    %v3896 = vsel %vm3894, %v3887, %v3854
    %v3897 = vsel %vm3894, %v3888, %v3855
    %v3898 = vsel %vm3894, %v3889, %v3856
    %v3899 = vsel %vm3894, %v3890, %v3857
    %v3900 = vsel %vm3894, %v3891, %v3858
    %v3901 = vsel %vm3894, %v3892, %v3859
    %v3902 = vsel %vm3894, %v3893, %v3860
    %vm3903 = vcmask 23552
    %v3904 = vsel %vm3903, %v3895, %v3877
    %v3905 = vsel %vm3903, %v3896, %v3878
    %v3906 = vsel %vm3903, %v3897, %v3879
    %v3907 = vsel %vm3903, %v3898, %v3880
    %v3908 = vsel %vm3903, %v3899, %v3881
    %v3909 = vsel %vm3903, %v3900, %v3882
    %v3910 = vsel %vm3903, %v3901, %v3883
    %v3911 = vsel %vm3903, %v3902, %v3884
    %vm3912 = vcmask 189441
    %v3913 = vsel %vm3912, %v3688, -inf
    %3914 = vmax.xlane.f32.xlu0 %v3913
    %v3915 = vpop.xlane.xlu0 %3914
    %v3916 = vsub.f32 %v3688, %v3915
    %v3917 = vmul.f32 %v3916, 1.442695
    %v3918 = vpow.pop %v3917
    %v3919 = vsel %vm3912, %v3918, 0.0
    %3920 = vadd.xlane.f32.xlu0 %v3919
    %v3921 = vpop.xlane.xlu0 %3920
    %v3922 = vrcp.pop %v3921
    %v3923 = vmul.f32 %v3918, %v3922
    %v3924 = vperm.slane %v3923, 1
    %v3925 = vmul.f32 %v3649, %v3924
    %v3926 = vmul.f32 %v3650, %v3924
    %v3927 = vmul.f32 %v3651, %v3924
    %v3928 = vmul.f32 %v3652, %v3924
    %v3929 = vmul.f32 %v3653, %v3924
    %v3930 = vmul.f32 %v3654, %v3924
    %v3931 = vmul.f32 %v3655, %v3924
    %v3932 = vmul.f32 %v3656, %v3924
    %v3933 = vsel %vm3711, %v3925, 0.0
    %3934 = vadd.xlane.f32.xlu0 %v3933
    %v3935 = vpop.xlane.xlu0 %3934
    %v3936 = vsel %vm3711, %v3926, 0.0
    %3937 = vadd.xlane.f32.xlu0 %v3936
    %v3938 = vpop.xlane.xlu0 %3937
    %v3939 = vsel %vm3711, %v3927, 0.0
    %3940 = vadd.xlane.f32.xlu0 %v3939
    %v3941 = vpop.xlane.xlu0 %3940
    %v3942 = vsel %vm3711, %v3928, 0.0
    %3943 = vadd.xlane.f32.xlu0 %v3942
    %v3944 = vpop.xlane.xlu0 %3943
    %v3945 = vsel %vm3711, %v3929, 0.0
    %3946 = vadd.xlane.f32.xlu0 %v3945
    %v3947 = vpop.xlane.xlu0 %3946
    %v3948 = vsel %vm3711, %v3930, 0.0
    %3949 = vadd.xlane.f32.xlu0 %v3948
    %v3950 = vpop.xlane.xlu0 %3949
    %v3951 = vsel %vm3711, %v3931, 0.0
    %3952 = vadd.xlane.f32.xlu0 %v3951
    %v3953 = vpop.xlane.xlu0 %3952
    %v3954 = vsel %vm3711, %v3932, 0.0
    %3955 = vadd.xlane.f32.xlu0 %v3954
    %v3956 = vpop.xlane.xlu0 %3955
    %vm3957 = vcmask 386241
    %v3958 = vsel %vm3957, %v3688, -inf
    %3959 = vmax.xlane.f32.xlu0 %v3958
    %v3960 = vpop.xlane.xlu0 %3959
    %v3961 = vsub.f32 %v3688, %v3960
    %v3962 = vmul.f32 %v3961, 1.442695
    %v3963 = vpow.pop %v3962
    %3965 = vrot.lane.b32.xlu0 %v3963, 104
    %v3966 = vpop.permute.xlu0 %3965
    %v3968 = vsel %vm3912, %v3966, 0.0
    %3969 = vadd.xlane.f32.xlu0 %v3968
    %v3970 = vpop.xlane.xlu0 %3969
    %v3971 = vrcp.pop %v3970
    %v3972 = vmul.f32 %v3963, %v3971
    %v3973 = vperm.slane %v3972, 1
    %3975 = vrot.lane.b32.xlu0 %v3973, 104
    %v3976 = vpop.permute.xlu0 %3975
    %v3978 = vmul.f32 %v3649, %v3976
    %v3979 = vmul.f32 %v3650, %v3976
    %v3980 = vmul.f32 %v3651, %v3976
    %v3981 = vmul.f32 %v3652, %v3976
    %v3982 = vmul.f32 %v3653, %v3976
    %v3983 = vmul.f32 %v3654, %v3976
    %v3984 = vmul.f32 %v3655, %v3976
    %v3985 = vmul.f32 %v3656, %v3976
    %v3986 = vsel %vm3711, %v3978, 0.0
    %3987 = vadd.xlane.f32.xlu0 %v3986
    %v3988 = vpop.xlane.xlu0 %3987
    %v3989 = vsel %vm3711, %v3979, 0.0
    %3990 = vadd.xlane.f32.xlu0 %v3989
    %v3991 = vpop.xlane.xlu0 %3990
    %v3992 = vsel %vm3711, %v3980, 0.0
    %3993 = vadd.xlane.f32.xlu0 %v3992
    %v3994 = vpop.xlane.xlu0 %3993
    %v3995 = vsel %vm3711, %v3981, 0.0
    %3996 = vadd.xlane.f32.xlu0 %v3995
    %v3997 = vpop.xlane.xlu0 %3996
    %v3998 = vsel %vm3711, %v3982, 0.0
    %3999 = vadd.xlane.f32.xlu0 %v3998
    %v4000 = vpop.xlane.xlu0 %3999
    %v4001 = vsel %vm3711, %v3983, 0.0
    %4002 = vadd.xlane.f32.xlu0 %v4001
    %v4003 = vpop.xlane.xlu0 %4002
    %v4004 = vsel %vm3711, %v3984, 0.0
    %4005 = vadd.xlane.f32.xlu0 %v4004
    %v4006 = vpop.xlane.xlu0 %4005
    %v4007 = vsel %vm3711, %v3985, 0.0
    %4008 = vadd.xlane.f32.xlu0 %v4007
    %v4009 = vpop.xlane.xlu0 %4008
    %v4010 = vadd.f32 %v3935, %v3988
    %v4011 = vadd.f32 %v3938, %v3991
    %v4012 = vadd.f32 %v3941, %v3994
    %v4013 = vadd.f32 %v3944, %v3997
    %v4014 = vadd.f32 %v3947, %v4000
    %v4015 = vadd.f32 %v3950, %v4003
    %v4016 = vadd.f32 %v3953, %v4006
    %v4017 = vadd.f32 %v3956, %v4009
    %v4018 = vmax.f32 %v4010, 0.0
    %v4019 = vmax.f32 %v4011, 0.0
    %v4020 = vmax.f32 %v4012, 0.0
    %v4021 = vmax.f32 %v4013, 0.0
    %v4022 = vmax.f32 %v4014, 0.0
    %v4023 = vmax.f32 %v4015, 0.0
    %v4024 = vmax.f32 %v4016, 0.0
    %v4025 = vmax.f32 %v4017, 0.0
    %v4026 = vmin.f32 %v4018, 1.0
    %v4027 = vmin.f32 %v4019, 1.0
    %v4028 = vmin.f32 %v4020, 1.0
    %v4029 = vmin.f32 %v4021, 1.0
    %v4030 = vmin.f32 %v4022, 1.0
    %v4031 = vmin.f32 %v4023, 1.0
    %v4032 = vmin.f32 %v4024, 1.0
    %v4033 = vmin.f32 %v4025, 1.0
    %v4034 = vsub.f32 %v4010, 1.0
    %v4035 = vsub.f32 %v4011, 1.0
    %v4036 = vsub.f32 %v4012, 1.0
    %v4037 = vsub.f32 %v4013, 1.0
    %v4038 = vsub.f32 %v4014, 1.0
    %v4039 = vsub.f32 %v4015, 1.0
    %v4040 = vsub.f32 %v4016, 1.0
    %v4041 = vsub.f32 %v4017, 1.0
    %v4042 = vmax.f32 %v4034, 0.0
    %v4043 = vmax.f32 %v4035, 0.0
    %v4044 = vmax.f32 %v4036, 0.0
    %v4045 = vmax.f32 %v4037, 0.0
    %v4046 = vmax.f32 %v4038, 0.0
    %v4047 = vmax.f32 %v4039, 0.0
    %v4048 = vmax.f32 %v4040, 0.0
    %v4049 = vmax.f32 %v4041, 0.0
    %v4050 = vmin.f32 %v4042, 1.0
    %v4051 = vmin.f32 %v4043, 1.0
    %v4052 = vmin.f32 %v4044, 1.0
    %v4053 = vmin.f32 %v4045, 1.0
    %v4054 = vmin.f32 %v4046, 1.0
    %v4055 = vmin.f32 %v4047, 1.0
    %v4056 = vmin.f32 %v4048, 1.0
    %v4057 = vmin.f32 %v4049, 1.0
    %v4058 = vsub.f32 %v3935, %v3988
    %v4059 = vsub.f32 %v3938, %v3991
    %v4060 = vsub.f32 %v3941, %v3994
    %v4061 = vsub.f32 %v3944, %v3997
    %v4062 = vsub.f32 %v3947, %v4000
    %v4063 = vsub.f32 %v3950, %v4003
    %v4064 = vsub.f32 %v3953, %v4006
    %v4065 = vsub.f32 %v3956, %v4009
    %v4066 = vmax.f32 %v4058, 0.0
    %v4067 = vmax.f32 %v4059, 0.0
    %v4068 = vmax.f32 %v4060, 0.0
    %v4069 = vmax.f32 %v4061, 0.0
    %v4070 = vmax.f32 %v4062, 0.0
    %v4071 = vmax.f32 %v4063, 0.0
    %v4072 = vmax.f32 %v4064, 0.0
    %v4073 = vmax.f32 %v4065, 0.0
    %v4074 = vmin.f32 %v4066, 1.0
    %v4075 = vmin.f32 %v4067, 1.0
    %v4076 = vmin.f32 %v4068, 1.0
    %v4077 = vmin.f32 %v4069, 1.0
    %v4078 = vmin.f32 %v4070, 1.0
    %v4079 = vmin.f32 %v4071, 1.0
    %v4080 = vmin.f32 %v4072, 1.0
    %v4081 = vmin.f32 %v4073, 1.0
    %v4082 = vsub.f32 %v3988, %v3935
    %v4083 = vsub.f32 %v3991, %v3938
    %v4084 = vsub.f32 %v3994, %v3941
    %v4085 = vsub.f32 %v3997, %v3944
    %v4086 = vsub.f32 %v4000, %v3947
    %v4087 = vsub.f32 %v4003, %v3950
    %v4088 = vsub.f32 %v4006, %v3953
    %v4089 = vsub.f32 %v4009, %v3956
    %v4090 = vmax.f32 %v4082, 0.0
    %v4091 = vmax.f32 %v4083, 0.0
    %v4092 = vmax.f32 %v4084, 0.0
    %v4093 = vmax.f32 %v4085, 0.0
    %v4094 = vmax.f32 %v4086, 0.0
    %v4095 = vmax.f32 %v4087, 0.0
    %v4096 = vmax.f32 %v4088, 0.0
    %v4097 = vmax.f32 %v4089, 0.0
    %v4098 = vmin.f32 %v4090, 1.0
    %v4099 = vmin.f32 %v4091, 1.0
    %v4100 = vmin.f32 %v4092, 1.0
    %v4101 = vmin.f32 %v4093, 1.0
    %v4102 = vmin.f32 %v4094, 1.0
    %v4103 = vmin.f32 %v4095, 1.0
    %v4104 = vmin.f32 %v4096, 1.0
    %v4105 = vmin.f32 %v4097, 1.0
    %v4106 = vsel %vm3885, %v4026, %v4050
    %v4107 = vsel %vm3885, %v4027, %v4051
    %v4108 = vsel %vm3885, %v4028, %v4052
    %v4109 = vsel %vm3885, %v4029, %v4053
    %v4110 = vsel %vm3885, %v4030, %v4054
    %v4111 = vsel %vm3885, %v4031, %v4055
    %v4112 = vsel %vm3885, %v4032, %v4056
    %v4113 = vsel %vm3885, %v4033, %v4057
    %v4114 = vsel %vm3894, %v4106, %v4074
    %v4115 = vsel %vm3894, %v4107, %v4075
    %v4116 = vsel %vm3894, %v4108, %v4076
    %v4117 = vsel %vm3894, %v4109, %v4077
    %v4118 = vsel %vm3894, %v4110, %v4078
    %v4119 = vsel %vm3894, %v4111, %v4079
    %v4120 = vsel %vm3894, %v4112, %v4080
    %v4121 = vsel %vm3894, %v4113, %v4081
    %v4122 = vsel %vm3903, %v4114, %v4098
    %v4123 = vsel %vm3903, %v4115, %v4099
    %v4124 = vsel %vm3903, %v4116, %v4100
    %v4125 = vsel %vm3903, %v4117, %v4101
    %v4126 = vsel %vm3903, %v4118, %v4102
    %v4127 = vsel %vm3903, %v4119, %v4103
    %v4128 = vsel %vm3903, %v4120, %v4104
    %v4129 = vsel %vm3903, %v4121, %v4105
    %v4130 = vmax.f32 %v3904, 0.0
    %v4131 = vmax.f32 %v3905, 0.0
    %v4132 = vmax.f32 %v3906, 0.0
    %v4133 = vmax.f32 %v3907, 0.0
    %v4134 = vmax.f32 %v3908, 0.0
    %v4135 = vmax.f32 %v3909, 0.0
    %v4136 = vmax.f32 %v3910, 0.0
    %v4137 = vmax.f32 %v3911, 0.0
    %v4138 = vmin.f32 %v4130, 1.0
    %v4139 = vmin.f32 %v4131, 1.0
    %v4140 = vmin.f32 %v4132, 1.0
    %v4141 = vmin.f32 %v4133, 1.0
    %v4142 = vmin.f32 %v4134, 1.0
    %v4143 = vmin.f32 %v4135, 1.0
    %v4144 = vmin.f32 %v4136, 1.0
    %v4145 = vmin.f32 %v4137, 1.0
    %v4146 = vmax.f32 %v4122, 0.0
    %v4147 = vmax.f32 %v4123, 0.0
    %v4148 = vmax.f32 %v4124, 0.0
    %v4149 = vmax.f32 %v4125, 0.0
    %v4150 = vmax.f32 %v4126, 0.0
    %v4151 = vmax.f32 %v4127, 0.0
    %v4152 = vmax.f32 %v4128, 0.0
    %v4153 = vmax.f32 %v4129, 0.0
    %v4154 = vmin.f32 %v4146, 1.0
    %v4155 = vmin.f32 %v4147, 1.0
    %v4156 = vmin.f32 %v4148, 1.0
    %v4157 = vmin.f32 %v4149, 1.0
    %v4158 = vmin.f32 %v4150, 1.0
    %v4159 = vmin.f32 %v4151, 1.0
    %v4160 = vmin.f32 %v4152, 1.0
    %v4161 = vmin.f32 %v4153, 1.0
    %4162 = vst.msk [vmem:[%s24] sm:$0xff] %vm3885, %v4138
    %4163 = vst.msk [vmem:[%s24 + $0x8] sm:$0xff] %vm3885, %v4139
    %4164 = vst.msk [vmem:[%s24 + $0x10] sm:$0xff] %vm3885, %v4140
    %4165 = vst.msk [vmem:[%s24 + $0x18] sm:$0xff] %vm3885, %v4141
    %4166 = vst.msk [vmem:[%s24 + $0x20] sm:$0xff] %vm3885, %v4142
    %4167 = vst.msk [vmem:[%s24 + $0x28] sm:$0xff] %vm3885, %v4143
    %4168 = vst.msk [vmem:[%s24 + $0x30] sm:$0xff] %vm3885, %v4144
    %4169 = vst.msk [vmem:[%s24 + $0x38] sm:$0xff] %vm3885, %v4145
    %4170 = vst.msk [vmem:[%s24 + $0x40] sm:$0xff] %vm3885, %v4154
    %4171 = vst.msk [vmem:[%s24 + $0x48] sm:$0xff] %vm3885, %v4155
    %4172 = vst.msk [vmem:[%s24 + $0x50] sm:$0xff] %vm3885, %v4156
    %4173 = vst.msk [vmem:[%s24 + $0x58] sm:$0xff] %vm3885, %v4157
    %4174 = vst.msk [vmem:[%s24 + $0x60] sm:$0xff] %vm3885, %v4158
    %4175 = vst.msk [vmem:[%s24 + $0x68] sm:$0xff] %vm3885, %v4159
    %4176 = vst.msk [vmem:[%s24 + $0x70] sm:$0xff] %vm3885, %v4160
    %4177 = vst.msk [vmem:[%s24 + $0x78] sm:$0xff] %vm3885, %v4161
    // Predicated region
    $region106: #{ucsgnet_forward.1} parent=1 // pred_check
      _
    $region107: #{ucsgnet_forward.1} parent=1 // pred_check_branch
      %4179 = sbr.rel (0) target = $region109
    $region108: #{ucsgnet_forward.1} parent=1 // pred_region
      _
    $region109: #{ucsgnet_forward.1} parent=1 // pred_fallthru
      _
    // Predicated region
    $region110: #{ucsgnet_forward.1} parent=1 // pred_check
      _
    $region111: #{ucsgnet_forward.1} parent=1 // pred_check_branch
      %4181 = sbr.rel (0) target = $region113
    $region112: #{ucsgnet_forward.1} parent=1 // pred_region
      _
    $region113: #{ucsgnet_forward.1} parent=1 // pred_fallthru
      _
    %4182 = vsyncpa [#allocation4], 1
    %4183 = vsyncpa [#allocation6], 1

</llo_original>
